<compile_context>
chip_gen: v5e
topology: v5e:2x2
jax: 0.10.0
libtpu: 0.0.40
codegen_flags: <defaults>
</compile_context>

<pallas_src>
import functools

import jax
import jax.numpy as jnp
from jax.experimental import pallas as pl
from jax.experimental.pallas import tpu as pltpu

# Model configuration (d_model / nhead / num_layers match the PyTorch defaults).
D_MODEL = 128
NHEAD = 4
NUM_LAYERS = 4
DIM_FF = 256
VOCAB = 50
VOCAB_PAD = 128          # lane-dense logits; padded columns are zero, sliced off
NUM_AUTHORS = 3
MAX_POS = 512
LN_EPS = 1e-5

# Layout of the per-layer constant slab (biases / LayerNorm params); each row
# is 3*D_MODEL lanes wide, padded to 8 rows for the (8, 128) f32 tile:
#   row 0: bqkv[0:3D]
#   row 1: bo[0:D]      | ln1_w[D:2D]          | ln1_b[2D:3D]
#   row 2: b1[0:DIM_FF] | b2[DIM_FF:DIM_FF+D]
#   row 3: ln2_w[0:D]   | ln2_b[D:2D]
CONST_ROWS = 8


def _poet_fused_kernel(x_ref, wqkv_ref, wo_ref, w1_ref, w2_ref, const_ref,
                       fcw_ref, fcb_ref, out_ref, *, nhead, num_layers):
    """One batch-block grid step: all encoder layers + final vocab projection."""
    b_blk, seq, d = x_ref.shape
    m = b_blk * seq
    hd = d // nhead
    scale = jnp.float32(1.0 / (hd ** 0.5))

    def mm(a_bf16, w_bf16):
        # bf16 MXU operands, f32 accumulation.
        return jnp.dot(a_bf16, w_bf16, preferred_element_type=jnp.float32)

    def layer_norm(v, w, b):
        mu = jnp.mean(v, axis=-1, keepdims=True)
        c = v - mu
        var = jnp.mean(c * c, axis=-1, keepdims=True)
        return c * jax.lax.rsqrt(var + LN_EPS) * w + b

    # Causal mask built once, reused by every layer/head.  The diagonal is
    # always kept, so exp(-inf - -inf) NaNs cannot occur.
    row = jax.lax.broadcasted_iota(jnp.int32, (seq, seq), 0)
    col = jax.lax.broadcasted_iota(jnp.int32, (seq, seq), 1)
    causal = (col <= row)[None, :, :]                     # (1, T, T) bool

    # Flattened-row activation stays as a value in vregs across all layers.
    h = x_ref[...].reshape(m, d)                          # (M, D) f32

    # Layer axis: static unrolled loop over the VMEM-resident weight stack.
    for l in range(num_layers):
        c = const_ref[l]                                  # (8, 3D) f32 consts
        bqkv = c[0:1, :]
        bo = c[1:2, 0:d]
        ln1w = c[1:2, d:2 * d]
        ln1b = c[1:2, 2 * d:3 * d]
        b1 = c[2:3, 0:DIM_FF]
        b2 = c[2:3, DIM_FF:DIM_FF + d]
        ln2w = c[3:4, 0:d]
        ln2b = c[3:4, d:2 * d]

        # ---- fused QKV projection: ONE (M, D) @ (D, 3D) MXU matmul ----
        x_bf = h.astype(jnp.bfloat16)
        qkv = mm(x_bf, wqkv_ref[l]) + bqkv                # (M, 3D) f32
        # Single bf16 cast reused for all q/k/v head slices below.
        qkv_bf = qkv.reshape(b_blk, seq, 3 * d).astype(jnp.bfloat16)

        # ---- multi-head causal attention (heads = static lane slices) ----
        heads = []
        for hh in range(nhead):
            lo = hh * hd
            qh = qkv_bf[:, :, lo:lo + hd]
            kh = qkv_bf[:, :, d + lo:d + lo + hd]
            vh = qkv_bf[:, :, 2 * d + lo:2 * d + lo + hd]
            s = jnp.einsum('bqd,bkd->bqk', qh, kh,
                           preferred_element_type=jnp.float32) * scale
            s = jnp.where(causal, s, -jnp.inf)
            mx = jnp.max(s, axis=-1, keepdims=True)
            p = jnp.exp(s - mx)
            p = p * pl.reciprocal(jnp.sum(p, axis=-1, keepdims=True),
                                  approx=True)
            heads.append(jnp.einsum('bqk,bkd->bqd', p.astype(jnp.bfloat16),
                                    vh, preferred_element_type=jnp.float32))

        # Concatenate heads in registers (no VMEM scratch, no masked stores);
        # out-projection is ONE K=D matmul over the flattened rows.
        attn = jnp.concatenate(heads, axis=-1).reshape(m, d)      # (M, D) f32
        attn = mm(attn.astype(jnp.bfloat16), wo_ref[l]) + bo

        # Post-norm ordering (norm_first=False): residual -> LN1 -> FFN -> LN2.
        x1 = layer_norm(h + attn, ln1w, ln1b)
        hidden = jnp.maximum(mm(x1.astype(jnp.bfloat16), w1_ref[l]) + b1, 0.0)
        x2 = layer_norm(x1 + mm(hidden.astype(jnp.bfloat16), w2_ref[l]) + b2,
                        ln2w, ln2b)
        h = x2

    # ---- final vocab projection, fused into the same kernel ----
    logits = mm(h.astype(jnp.bfloat16), fcw_ref[...]) + fcb_ref[...]
    out_ref[...] = logits.reshape(out_ref.shape).astype(out_ref.dtype)


def init_params(key):
    ks = jax.random.split(key, 8)

    def nrm(k, shape, dtype=jnp.float32):
        return (0.02 * jax.random.normal(k, shape, jnp.float32)).astype(dtype)

    L = NUM_LAYERS

    # Per-layer biases / LayerNorm params packed into one resident slab.
    const = jnp.zeros((L, CONST_ROWS, 3 * D_MODEL), jnp.float32)
    const = const.at[:, 1, D_MODEL:2 * D_MODEL].set(1.0)   # ln1 weight = 1
    const = const.at[:, 3, 0:D_MODEL].set(1.0)              # ln2 weight = 1

    stacked = {
        # Per-layer MXU weights stacked on a leading layer axis (bf16).
        'wqkv': nrm(ks[3], (L, D_MODEL, 3 * D_MODEL), jnp.bfloat16),
        'wo':   nrm(ks[4], (L, D_MODEL, D_MODEL), jnp.bfloat16),
        'w1':   nrm(ks[5], (L, D_MODEL, DIM_FF), jnp.bfloat16),
        'w2':   nrm(ks[6], (L, DIM_FF, D_MODEL), jnp.bfloat16),
        'const': const,
    }
    # fc weights padded to a lane-dense 128-wide output; padded cols are zero.
    fc_w = jnp.zeros((D_MODEL, VOCAB_PAD), jnp.float32)
    fc_w = fc_w.at[:, :VOCAB].set(
        0.02 * jax.random.normal(ks[7], (D_MODEL, VOCAB), jnp.float32))
    return {
        'embed': nrm(ks[0], (VOCAB, D_MODEL)),
        'pos_embed': nrm(ks[1], (MAX_POS, D_MODEL)),
        'author_embed': nrm(ks[2], (NUM_AUTHORS, D_MODEL)),
        'fc_w': fc_w.astype(jnp.bfloat16),
        'fc_b': jnp.zeros((1, VOCAB_PAD), jnp.float32),
        'stacked': stacked,
    }


def _pick_batch_block(batch, seq, target_rows=256):
    """Largest divisor of `batch` keeping B_blk*T <= ~target_rows MXU rows."""
    best = 1
    for cand in range(1, batch + 1):
        if batch % cand == 0 and cand * seq <= max(target_rows, seq):
            best = cand
    return best


def poet_transformer_forward(params, tokens, author_ids=None):
    B, T = tokens.shape
    # Glue: embedding gathers + adds (token + positional + author).
    h = params['embed'][tokens] + params['pos_embed'][:T][None, :, :]
    if author_ids is not None:
        h = h + params['author_embed'][author_ids][:, None, :]
    h = h.astype(jnp.float32)

    st = params['stacked']
    L = NUM_LAYERS
    b_blk = _pick_batch_block(B, T)
    n_blocks = B // b_blk

    def resident(*shape):
        # Full-array block with a constant index_map: DMA'd once, then
        # VMEM-resident for the entire grid.
        nd = len(shape)
        return pl.BlockSpec(shape, lambda i, _nd=nd: (0,) * _nd)

    grid_spec = pltpu.PrefetchScalarGridSpec(
        num_scalar_prefetch=0,
        grid=(n_blocks,),
        in_specs=[
            pl.BlockSpec((b_blk, T, D_MODEL), lambda i: (i, 0, 0)),  # x
            resident(L, D_MODEL, 3 * D_MODEL),      # wqkv stack
            resident(L, D_MODEL, D_MODEL),          # wo stack
            resident(L, D_MODEL, DIM_FF),           # w1 stack
            resident(L, DIM_FF, D_MODEL),           # w2 stack
            resident(L, CONST_ROWS, 3 * D_MODEL),   # biases / LN slab
            resident(D_MODEL, VOCAB_PAD),           # fc_w (lane-dense pad)
            resident(1, VOCAB_PAD),                 # fc_b
        ],
        out_specs=pl.BlockSpec((b_blk, T, VOCAB_PAD), lambda i: (i, 0, 0)),
    )

    logits = pl.pallas_call(
        functools.partial(_poet_fused_kernel, nhead=NHEAD, num_layers=L),
        out_shape=jax.ShapeDtypeStruct((B, T, VOCAB_PAD), jnp.float32),
        grid_spec=grid_spec,
        compiler_params=pltpu.CompilerParams(
            # Batch-block axis is data-parallel (shardable across v7x's two
            # TensorCores when n_blocks >= 2); no carried state across it.
            dimension_semantics=("parallel",),
            vmem_limit_bytes=32 * 1024 * 1024),
    )(h, st['wqkv'], st['wo'], st['w1'], st['w2'], st['const'],
      params['fc_w'], params['fc_b'])

    # Drop the lane-padding columns to recover the true vocab size.
    return logits[:, :, :VOCAB]


if __name__ == "__main__":
    key = jax.random.PRNGKey(0)
    pkey, tkey, akey = jax.random.split(key, 3)
    params = init_params(pkey)

    B, T = 2, 8
    tokens = jax.random.randint(tkey, (B, T), 0, VOCAB, dtype=jnp.int32)
    author_ids = jax.random.randint(akey, (B,), 0, NUM_AUTHORS, dtype=jnp.int32)

    out = jax.jit(poet_transformer_forward)(params, tokens, author_ids)
    out = jax.block_until_ready(out)

    assert out.shape == (B, T, VOCAB), out.shape
    assert bool(jnp.all(jnp.isfinite(out)))
    print("KERNEL_OK")
</pallas_src>

<mosaic_0001>
module attributes {stable_mosaic.version = 11 : i64} {
  func.func @_poet_fused_kernel(%arg0: i32, %arg1: memref<2x8x128xf32, #tpu.memory_space<vmem>>, %arg2: memref<4x128x384xbf16, #tpu.memory_space<vmem>>, %arg3: memref<4x128x128xbf16, #tpu.memory_space<vmem>>, %arg4: memref<4x128x256xbf16, #tpu.memory_space<vmem>>, %arg5: memref<4x256x128xbf16, #tpu.memory_space<vmem>>, %arg6: memref<4x8x384xf32, #tpu.memory_space<vmem>>, %arg7: memref<128x128xbf16, #tpu.memory_space<vmem>>, %arg8: memref<1x128xf32, #tpu.memory_space<vmem>>, %arg9: memref<2x8x128xf32, #tpu.memory_space<vmem>>) attributes {dimension_semantics = [#tpu.dimension_semantics<parallel>], iteration_bounds = array<i64: 1>, scalar_prefetch = 0 : i64, scratch_operands = 0 : i64, tpu.core_type = #tpu.core_type<tc>, window_params = [{transform_indices = @transform_0, window_bounds = array<i64: 2, 8, 128>}, {pipeline_mode = #tpu.pipeline_mode<synchronous>, transform_indices = @transform_1, window_bounds = array<i64: 4, 128, 384>}, {pipeline_mode = #tpu.pipeline_mode<synchronous>, transform_indices = @transform_2, window_bounds = array<i64: 4, 128, 128>}, {pipeline_mode = #tpu.pipeline_mode<synchronous>, transform_indices = @transform_3, window_bounds = array<i64: 4, 128, 256>}, {pipeline_mode = #tpu.pipeline_mode<synchronous>, transform_indices = @transform_4, window_bounds = array<i64: 4, 256, 128>}, {pipeline_mode = #tpu.pipeline_mode<synchronous>, transform_indices = @transform_5, window_bounds = array<i64: 4, 8, 384>}, {pipeline_mode = #tpu.pipeline_mode<synchronous>, transform_indices = @transform_6, window_bounds = array<i64: 128, 128>}, {pipeline_mode = #tpu.pipeline_mode<synchronous>, transform_indices = @transform_7, window_bounds = array<i64: 1, 128>}, {transform_indices = @transform_8, window_bounds = array<i64: 2, 8, 128>}]} {
    %0 = tpu.iota {dimensions = array<i32: 0>} : vector<8x8xi32>
    %1 = tpu.iota {dimensions = array<i32: 1>} : vector<8x8xi32>
    %2 = arith.cmpi sle, %1, %0 : vector<8x8xi32>
    %3 = vector.shape_cast %2 : vector<8x8xi1> to vector<1x8x8xi1>
    %c0 = arith.constant 0 : index
    %c0_0 = arith.constant 0 : index
    %c0_1 = arith.constant 0 : index
    %4 = vector.load %arg1[%c0, %c0_0, %c0_1] : memref<2x8x128xf32, #tpu.memory_space<vmem>>, vector<2x8x128xf32>
    %5 = vector.shape_cast %4 : vector<2x8x128xf32> to vector<16x128xf32>
    %c0_2 = arith.constant 0 : index
    %c0_3 = arith.constant 0 : index
    %c0_4 = arith.constant 0 : index
    %6 = vector.load %arg6[%c0_2, %c0_3, %c0_4] : memref<4x8x384xf32, #tpu.memory_space<vmem>>, vector<1x8x384xf32>
    %7 = vector.shape_cast %6 : vector<1x8x384xf32> to vector<8x384xf32>
    %8 = vector.extract_strided_slice %7 {offsets = [0, 0], sizes = [1, 384], strides = [1, 1]} : vector<8x384xf32> to vector<1x384xf32>
    %9 = vector.extract_strided_slice %7 {offsets = [1, 0], sizes = [1, 128], strides = [1, 1]} : vector<8x384xf32> to vector<1x128xf32>
    %10 = vector.extract_strided_slice %7 {offsets = [1, 128], sizes = [1, 128], strides = [1, 1]} : vector<8x384xf32> to vector<1x128xf32>
    %11 = vector.extract_strided_slice %7 {offsets = [1, 256], sizes = [1, 128], strides = [1, 1]} : vector<8x384xf32> to vector<1x128xf32>
    %12 = vector.extract_strided_slice %7 {offsets = [2, 0], sizes = [1, 256], strides = [1, 1]} : vector<8x384xf32> to vector<1x256xf32>
    %13 = vector.extract_strided_slice %7 {offsets = [2, 256], sizes = [1, 128], strides = [1, 1]} : vector<8x384xf32> to vector<1x128xf32>
    %14 = vector.extract_strided_slice %7 {offsets = [3, 0], sizes = [1, 128], strides = [1, 1]} : vector<8x384xf32> to vector<1x128xf32>
    %15 = vector.extract_strided_slice %7 {offsets = [3, 128], sizes = [1, 128], strides = [1, 1]} : vector<8x384xf32> to vector<1x128xf32>
    %16 = arith.truncf %5 : vector<16x128xf32> to vector<16x128xbf16>
    %c0_5 = arith.constant 0 : index
    %c0_6 = arith.constant 0 : index
    %c0_7 = arith.constant 0 : index
    %17 = vector.load %arg2[%c0_5, %c0_6, %c0_7] : memref<4x128x384xbf16, #tpu.memory_space<vmem>>, vector<1x128x384xbf16>
    %18 = vector.shape_cast %17 : vector<1x128x384xbf16> to vector<128x384xbf16>
    %cst = arith.constant dense<0.000000e+00> : vector<16x384xf32>
    %19 = tpu.matmul %16, %18, %cst {dimension_numbers = #tpu.dot_dimension_numbers<[1], [0], [0], [1], [0, 0, 1, 1], [], []>} : vector<16x128xbf16>, vector<128x384xbf16>, vector<16x384xf32> -> vector<16x384xf32>
    %20 = vector.broadcast %8 : vector<1x384xf32> to vector<16x384xf32>
    %21 = arith.addf %19, %20 : vector<16x384xf32>
    %22 = vector.shape_cast %21 : vector<16x384xf32> to vector<2x8x384xf32>
    %23 = arith.truncf %22 : vector<2x8x384xf32> to vector<2x8x384xbf16>
    %24 = vector.extract_strided_slice %23 {offsets = [0, 0, 0], sizes = [2, 8, 32], strides = [1, 1, 1]} : vector<2x8x384xbf16> to vector<2x8x32xbf16>
    %25 = vector.extract_strided_slice %23 {offsets = [0, 0, 128], sizes = [2, 8, 32], strides = [1, 1, 1]} : vector<2x8x384xbf16> to vector<2x8x32xbf16>
    %26 = vector.extract_strided_slice %23 {offsets = [0, 0, 256], sizes = [2, 8, 32], strides = [1, 1, 1]} : vector<2x8x384xbf16> to vector<2x8x32xbf16>
    "tpu.trace_start"() <{level = 10 : i32, message = "bqd,bkd->bqk"}> : () -> ()
    %cst_8 = arith.constant dense<0.000000e+00> : vector<2x8x8xf32>
    %27 = tpu.matmul %24, %25, %cst_8 {dimension_numbers = #tpu.dot_dimension_numbers<[2], [2], [1], [1], [0, 0, 0, 1, 1, 1], [0], [0]>} : vector<2x8x32xbf16>, vector<2x8x32xbf16>, vector<2x8x8xf32> -> vector<2x8x8xf32>
    "tpu.trace_stop"() : () -> ()
    %cst_9 = arith.constant 0.176776692 : f32
    %28 = vector.broadcast %cst_9 : f32 to vector<2x8x8xf32>
    %29 = arith.mulf %27, %28 : vector<2x8x8xf32>
    %cst_10 = arith.constant 0xFF800000 : f32
    %30 = vector.shape_cast %3 : vector<1x8x8xi1> to vector<1x8x8xi1>
    %31 = vector.broadcast %30 : vector<1x8x8xi1> to vector<2x8x8xi1>
    %32 = vector.broadcast %cst_10 : f32 to vector<2x8x8xf32>
    %33 = arith.select %31, %29, %32 : vector<2x8x8xi1>, vector<2x8x8xf32>
    %cst_11 = arith.constant dense<0xFF800000> : vector<2x8xf32>
    %34 = vector.multi_reduction <maximumf>, %33, %cst_11 [2] : vector<2x8x8xf32> to vector<2x8xf32>
    %35 = vector.shape_cast %34 : vector<2x8xf32> to vector<2x8x1xf32>
    %36 = vector.broadcast %35 : vector<2x8x1xf32> to vector<2x8x8xf32>
    %37 = arith.subf %33, %36 : vector<2x8x8xf32>
    %38 = math.exp %37 : vector<2x8x8xf32>
    %cst_12 = arith.constant dense<0.000000e+00> : vector<2x8xf32>
    %39 = vector.multi_reduction <add>, %38, %cst_12 [2] : vector<2x8x8xf32> to vector<2x8xf32>
    %40 = vector.shape_cast %39 : vector<2x8xf32> to vector<2x8x1xf32>
    %41 = tpu.reciprocal %40 {approx = true} : vector<2x8x1xf32> -> vector<2x8x1xf32>
    %42 = vector.broadcast %41 : vector<2x8x1xf32> to vector<2x8x8xf32>
    %43 = arith.mulf %38, %42 : vector<2x8x8xf32>
    %44 = arith.truncf %43 : vector<2x8x8xf32> to vector<2x8x8xbf16>
    "tpu.trace_start"() <{level = 10 : i32, message = "bqk,bkd->bqd"}> : () -> ()
    %cst_13 = arith.constant dense<0.000000e+00> : vector<2x8x32xf32>
    %45 = tpu.matmul %44, %26, %cst_13 {dimension_numbers = #tpu.dot_dimension_numbers<[2], [1], [1], [2], [0, 0, 0, 1, 1, 2], [0], [0]>} : vector<2x8x8xbf16>, vector<2x8x32xbf16>, vector<2x8x32xf32> -> vector<2x8x32xf32>
    "tpu.trace_stop"() : () -> ()
    %46 = vector.extract_strided_slice %23 {offsets = [0, 0, 32], sizes = [2, 8, 32], strides = [1, 1, 1]} : vector<2x8x384xbf16> to vector<2x8x32xbf16>
    %47 = vector.extract_strided_slice %23 {offsets = [0, 0, 160], sizes = [2, 8, 32], strides = [1, 1, 1]} : vector<2x8x384xbf16> to vector<2x8x32xbf16>
    %48 = vector.extract_strided_slice %23 {offsets = [0, 0, 288], sizes = [2, 8, 32], strides = [1, 1, 1]} : vector<2x8x384xbf16> to vector<2x8x32xbf16>
    "tpu.trace_start"() <{level = 10 : i32, message = "bqd,bkd->bqk"}> : () -> ()
    %cst_14 = arith.constant dense<0.000000e+00> : vector<2x8x8xf32>
    %49 = tpu.matmul %46, %47, %cst_14 {dimension_numbers = #tpu.dot_dimension_numbers<[2], [2], [1], [1], [0, 0, 0, 1, 1, 1], [0], [0]>} : vector<2x8x32xbf16>, vector<2x8x32xbf16>, vector<2x8x8xf32> -> vector<2x8x8xf32>
    "tpu.trace_stop"() : () -> ()
    %cst_15 = arith.constant 0.176776692 : f32
    %50 = vector.broadcast %cst_15 : f32 to vector<2x8x8xf32>
    %51 = arith.mulf %49, %50 : vector<2x8x8xf32>
    %cst_16 = arith.constant 0xFF800000 : f32
    %52 = vector.shape_cast %3 : vector<1x8x8xi1> to vector<1x8x8xi1>
    %53 = vector.broadcast %52 : vector<1x8x8xi1> to vector<2x8x8xi1>
    %54 = vector.broadcast %cst_16 : f32 to vector<2x8x8xf32>
    %55 = arith.select %53, %51, %54 : vector<2x8x8xi1>, vector<2x8x8xf32>
    %cst_17 = arith.constant dense<0xFF800000> : vector<2x8xf32>
    %56 = vector.multi_reduction <maximumf>, %55, %cst_17 [2] : vector<2x8x8xf32> to vector<2x8xf32>
    %57 = vector.shape_cast %56 : vector<2x8xf32> to vector<2x8x1xf32>
    %58 = vector.broadcast %57 : vector<2x8x1xf32> to vector<2x8x8xf32>
    %59 = arith.subf %55, %58 : vector<2x8x8xf32>
    %60 = math.exp %59 : vector<2x8x8xf32>
    %cst_18 = arith.constant dense<0.000000e+00> : vector<2x8xf32>
    %61 = vector.multi_reduction <add>, %60, %cst_18 [2] : vector<2x8x8xf32> to vector<2x8xf32>
    %62 = vector.shape_cast %61 : vector<2x8xf32> to vector<2x8x1xf32>
    %63 = tpu.reciprocal %62 {approx = true} : vector<2x8x1xf32> -> vector<2x8x1xf32>
    %64 = vector.broadcast %63 : vector<2x8x1xf32> to vector<2x8x8xf32>
    %65 = arith.mulf %60, %64 : vector<2x8x8xf32>
    %66 = arith.truncf %65 : vector<2x8x8xf32> to vector<2x8x8xbf16>
    "tpu.trace_start"() <{level = 10 : i32, message = "bqk,bkd->bqd"}> : () -> ()
    %cst_19 = arith.constant dense<0.000000e+00> : vector<2x8x32xf32>
    %67 = tpu.matmul %66, %48, %cst_19 {dimension_numbers = #tpu.dot_dimension_numbers<[2], [1], [1], [2], [0, 0, 0, 1, 1, 2], [0], [0]>} : vector<2x8x8xbf16>, vector<2x8x32xbf16>, vector<2x8x32xf32> -> vector<2x8x32xf32>
    "tpu.trace_stop"() : () -> ()
    %68 = vector.extract_strided_slice %23 {offsets = [0, 0, 64], sizes = [2, 8, 32], strides = [1, 1, 1]} : vector<2x8x384xbf16> to vector<2x8x32xbf16>
    %69 = vector.extract_strided_slice %23 {offsets = [0, 0, 192], sizes = [2, 8, 32], strides = [1, 1, 1]} : vector<2x8x384xbf16> to vector<2x8x32xbf16>
    %70 = vector.extract_strided_slice %23 {offsets = [0, 0, 320], sizes = [2, 8, 32], strides = [1, 1, 1]} : vector<2x8x384xbf16> to vector<2x8x32xbf16>
    "tpu.trace_start"() <{level = 10 : i32, message = "bqd,bkd->bqk"}> : () -> ()
    %cst_20 = arith.constant dense<0.000000e+00> : vector<2x8x8xf32>
    %71 = tpu.matmul %68, %69, %cst_20 {dimension_numbers = #tpu.dot_dimension_numbers<[2], [2], [1], [1], [0, 0, 0, 1, 1, 1], [0], [0]>} : vector<2x8x32xbf16>, vector<2x8x32xbf16>, vector<2x8x8xf32> -> vector<2x8x8xf32>
    "tpu.trace_stop"() : () -> ()
    %cst_21 = arith.constant 0.176776692 : f32
    %72 = vector.broadcast %cst_21 : f32 to vector<2x8x8xf32>
    %73 = arith.mulf %71, %72 : vector<2x8x8xf32>
    %cst_22 = arith.constant 0xFF800000 : f32
    %74 = vector.shape_cast %3 : vector<1x8x8xi1> to vector<1x8x8xi1>
    %75 = vector.broadcast %74 : vector<1x8x8xi1> to vector<2x8x8xi1>
    %76 = vector.broadcast %cst_22 : f32 to vector<2x8x8xf32>
    %77 = arith.select %75, %73, %76 : vector<2x8x8xi1>, vector<2x8x8xf32>
    %cst_23 = arith.constant dense<0xFF800000> : vector<2x8xf32>
    %78 = vector.multi_reduction <maximumf>, %77, %cst_23 [2] : vector<2x8x8xf32> to vector<2x8xf32>
    %79 = vector.shape_cast %78 : vector<2x8xf32> to vector<2x8x1xf32>
    %80 = vector.broadcast %79 : vector<2x8x1xf32> to vector<2x8x8xf32>
    %81 = arith.subf %77, %80 : vector<2x8x8xf32>
    %82 = math.exp %81 : vector<2x8x8xf32>
    %cst_24 = arith.constant dense<0.000000e+00> : vector<2x8xf32>
    %83 = vector.multi_reduction <add>, %82, %cst_24 [2] : vector<2x8x8xf32> to vector<2x8xf32>
    %84 = vector.shape_cast %83 : vector<2x8xf32> to vector<2x8x1xf32>
    %85 = tpu.reciprocal %84 {approx = true} : vector<2x8x1xf32> -> vector<2x8x1xf32>
    %86 = vector.broadcast %85 : vector<2x8x1xf32> to vector<2x8x8xf32>
    %87 = arith.mulf %82, %86 : vector<2x8x8xf32>
    %88 = arith.truncf %87 : vector<2x8x8xf32> to vector<2x8x8xbf16>
    "tpu.trace_start"() <{level = 10 : i32, message = "bqk,bkd->bqd"}> : () -> ()
    %cst_25 = arith.constant dense<0.000000e+00> : vector<2x8x32xf32>
    %89 = tpu.matmul %88, %70, %cst_25 {dimension_numbers = #tpu.dot_dimension_numbers<[2], [1], [1], [2], [0, 0, 0, 1, 1, 2], [0], [0]>} : vector<2x8x8xbf16>, vector<2x8x32xbf16>, vector<2x8x32xf32> -> vector<2x8x32xf32>
    "tpu.trace_stop"() : () -> ()
    %90 = vector.extract_strided_slice %23 {offsets = [0, 0, 96], sizes = [2, 8, 32], strides = [1, 1, 1]} : vector<2x8x384xbf16> to vector<2x8x32xbf16>
    %91 = vector.extract_strided_slice %23 {offsets = [0, 0, 224], sizes = [2, 8, 32], strides = [1, 1, 1]} : vector<2x8x384xbf16> to vector<2x8x32xbf16>
    %92 = vector.extract_strided_slice %23 {offsets = [0, 0, 352], sizes = [2, 8, 32], strides = [1, 1, 1]} : vector<2x8x384xbf16> to vector<2x8x32xbf16>
    "tpu.trace_start"() <{level = 10 : i32, message = "bqd,bkd->bqk"}> : () -> ()
    %cst_26 = arith.constant dense<0.000000e+00> : vector<2x8x8xf32>
    %93 = tpu.matmul %90, %91, %cst_26 {dimension_numbers = #tpu.dot_dimension_numbers<[2], [2], [1], [1], [0, 0, 0, 1, 1, 1], [0], [0]>} : vector<2x8x32xbf16>, vector<2x8x32xbf16>, vector<2x8x8xf32> -> vector<2x8x8xf32>
    "tpu.trace_stop"() : () -> ()
    %cst_27 = arith.constant 0.176776692 : f32
    %94 = vector.broadcast %cst_27 : f32 to vector<2x8x8xf32>
    %95 = arith.mulf %93, %94 : vector<2x8x8xf32>
    %cst_28 = arith.constant 0xFF800000 : f32
    %96 = vector.shape_cast %3 : vector<1x8x8xi1> to vector<1x8x8xi1>
    %97 = vector.broadcast %96 : vector<1x8x8xi1> to vector<2x8x8xi1>
    %98 = vector.broadcast %cst_28 : f32 to vector<2x8x8xf32>
    %99 = arith.select %97, %95, %98 : vector<2x8x8xi1>, vector<2x8x8xf32>
    %cst_29 = arith.constant dense<0xFF800000> : vector<2x8xf32>
    %100 = vector.multi_reduction <maximumf>, %99, %cst_29 [2] : vector<2x8x8xf32> to vector<2x8xf32>
    %101 = vector.shape_cast %100 : vector<2x8xf32> to vector<2x8x1xf32>
    %102 = vector.broadcast %101 : vector<2x8x1xf32> to vector<2x8x8xf32>
    %103 = arith.subf %99, %102 : vector<2x8x8xf32>
    %104 = math.exp %103 : vector<2x8x8xf32>
    %cst_30 = arith.constant dense<0.000000e+00> : vector<2x8xf32>
    %105 = vector.multi_reduction <add>, %104, %cst_30 [2] : vector<2x8x8xf32> to vector<2x8xf32>
    %106 = vector.shape_cast %105 : vector<2x8xf32> to vector<2x8x1xf32>
    %107 = tpu.reciprocal %106 {approx = true} : vector<2x8x1xf32> -> vector<2x8x1xf32>
    %108 = vector.broadcast %107 : vector<2x8x1xf32> to vector<2x8x8xf32>
    %109 = arith.mulf %104, %108 : vector<2x8x8xf32>
    %110 = arith.truncf %109 : vector<2x8x8xf32> to vector<2x8x8xbf16>
    "tpu.trace_start"() <{level = 10 : i32, message = "bqk,bkd->bqd"}> : () -> ()
    %cst_31 = arith.constant dense<0.000000e+00> : vector<2x8x32xf32>
    %111 = tpu.matmul %110, %92, %cst_31 {dimension_numbers = #tpu.dot_dimension_numbers<[2], [1], [1], [2], [0, 0, 0, 1, 1, 2], [0], [0]>} : vector<2x8x8xbf16>, vector<2x8x32xbf16>, vector<2x8x32xf32> -> vector<2x8x32xf32>
    "tpu.trace_stop"() : () -> ()
    %112 = tpu.concatenate %45, %67, %89, %111 in 2 : vector<2x8x32xf32>, vector<2x8x32xf32>, vector<2x8x32xf32>, vector<2x8x32xf32> -> vector<2x8x128xf32>
    %113 = vector.shape_cast %112 : vector<2x8x128xf32> to vector<16x128xf32>
    %114 = arith.truncf %113 : vector<16x128xf32> to vector<16x128xbf16>
    %c0_32 = arith.constant 0 : index
    %c0_33 = arith.constant 0 : index
    %c0_34 = arith.constant 0 : index
    %115 = vector.load %arg3[%c0_32, %c0_33, %c0_34] : memref<4x128x128xbf16, #tpu.memory_space<vmem>>, vector<1x128x128xbf16>
    %116 = vector.shape_cast %115 : vector<1x128x128xbf16> to vector<128x128xbf16>
    %cst_35 = arith.constant dense<0.000000e+00> : vector<16x128xf32>
    %117 = tpu.matmul %114, %116, %cst_35 {dimension_numbers = #tpu.dot_dimension_numbers<[1], [0], [0], [1], [0, 0, 1, 1], [], []>} : vector<16x128xbf16>, vector<128x128xbf16>, vector<16x128xf32> -> vector<16x128xf32>
    %118 = vector.broadcast %9 : vector<1x128xf32> to vector<16x128xf32>
    %119 = arith.addf %117, %118 : vector<16x128xf32>
    %120 = arith.addf %5, %119 : vector<16x128xf32>
    %cst_36 = arith.constant dense<0.000000e+00> : vector<16xf32>
    %121 = vector.multi_reduction <add>, %120, %cst_36 [1] : vector<16x128xf32> to vector<16xf32>
    %122 = vector.shape_cast %121 : vector<16xf32> to vector<16x1xf32>
    %cst_37 = arith.constant 1.280000e+02 : f32
    %123 = vector.broadcast %cst_37 : f32 to vector<16x1xf32>
    %124 = arith.divf %122, %123 : vector<16x1xf32>
    %125 = vector.broadcast %124 : vector<16x1xf32> to vector<16x128xf32>
    %126 = arith.subf %120, %125 : vector<16x128xf32>
    %127 = arith.mulf %126, %126 : vector<16x128xf32>
    %cst_38 = arith.constant dense<0.000000e+00> : vector<16xf32>
    %128 = vector.multi_reduction <add>, %127, %cst_38 [1] : vector<16x128xf32> to vector<16xf32>
    %129 = vector.shape_cast %128 : vector<16xf32> to vector<16x1xf32>
    %cst_39 = arith.constant 1.280000e+02 : f32
    %130 = vector.broadcast %cst_39 : f32 to vector<16x1xf32>
    %131 = arith.divf %129, %130 : vector<16x1xf32>
    %cst_40 = arith.constant 9.99999974E-6 : f32
    %132 = vector.broadcast %cst_40 : f32 to vector<16x1xf32>
    %133 = arith.addf %131, %132 : vector<16x1xf32>
    %134 = math.rsqrt %133 : vector<16x1xf32>
    %135 = vector.broadcast %134 : vector<16x1xf32> to vector<16x128xf32>
    %136 = arith.mulf %126, %135 : vector<16x128xf32>
    %137 = vector.broadcast %10 : vector<1x128xf32> to vector<16x128xf32>
    %138 = arith.mulf %136, %137 : vector<16x128xf32>
    %139 = vector.broadcast %11 : vector<1x128xf32> to vector<16x128xf32>
    %140 = arith.addf %138, %139 : vector<16x128xf32>
    %141 = arith.truncf %140 : vector<16x128xf32> to vector<16x128xbf16>
    %c0_41 = arith.constant 0 : index
    %c0_42 = arith.constant 0 : index
    %c0_43 = arith.constant 0 : index
    %142 = vector.load %arg4[%c0_41, %c0_42, %c0_43] : memref<4x128x256xbf16, #tpu.memory_space<vmem>>, vector<1x128x256xbf16>
    %143 = vector.shape_cast %142 : vector<1x128x256xbf16> to vector<128x256xbf16>
    %cst_44 = arith.constant dense<0.000000e+00> : vector<16x256xf32>
    %144 = tpu.matmul %141, %143, %cst_44 {dimension_numbers = #tpu.dot_dimension_numbers<[1], [0], [0], [1], [0, 0, 1, 1], [], []>} : vector<16x128xbf16>, vector<128x256xbf16>, vector<16x256xf32> -> vector<16x256xf32>
    %145 = vector.broadcast %12 : vector<1x256xf32> to vector<16x256xf32>
    %146 = arith.addf %144, %145 : vector<16x256xf32>
    %cst_45 = arith.constant 0.000000e+00 : f32
    %147 = vector.broadcast %cst_45 : f32 to vector<16x256xf32>
    %148 = arith.maximumf %146, %147 : vector<16x256xf32>
    %149 = arith.truncf %148 : vector<16x256xf32> to vector<16x256xbf16>
    %c0_46 = arith.constant 0 : index
    %c0_47 = arith.constant 0 : index
    %c0_48 = arith.constant 0 : index
    %150 = vector.load %arg5[%c0_46, %c0_47, %c0_48] : memref<4x256x128xbf16, #tpu.memory_space<vmem>>, vector<1x256x128xbf16>
    %151 = vector.shape_cast %150 : vector<1x256x128xbf16> to vector<256x128xbf16>
    %cst_49 = arith.constant dense<0.000000e+00> : vector<16x128xf32>
    %152 = tpu.matmul %149, %151, %cst_49 {dimension_numbers = #tpu.dot_dimension_numbers<[1], [0], [0], [1], [0, 0, 1, 1], [], []>} : vector<16x256xbf16>, vector<256x128xbf16>, vector<16x128xf32> -> vector<16x128xf32>
    %153 = arith.addf %140, %152 : vector<16x128xf32>
    %154 = vector.broadcast %13 : vector<1x128xf32> to vector<16x128xf32>
    %155 = arith.addf %153, %154 : vector<16x128xf32>
    %cst_50 = arith.constant dense<0.000000e+00> : vector<16xf32>
    %156 = vector.multi_reduction <add>, %155, %cst_50 [1] : vector<16x128xf32> to vector<16xf32>
    %157 = vector.shape_cast %156 : vector<16xf32> to vector<16x1xf32>
    %cst_51 = arith.constant 1.280000e+02 : f32
    %158 = vector.broadcast %cst_51 : f32 to vector<16x1xf32>
    %159 = arith.divf %157, %158 : vector<16x1xf32>
    %160 = vector.broadcast %159 : vector<16x1xf32> to vector<16x128xf32>
    %161 = arith.subf %155, %160 : vector<16x128xf32>
    %162 = arith.mulf %161, %161 : vector<16x128xf32>
    %cst_52 = arith.constant dense<0.000000e+00> : vector<16xf32>
    %163 = vector.multi_reduction <add>, %162, %cst_52 [1] : vector<16x128xf32> to vector<16xf32>
    %164 = vector.shape_cast %163 : vector<16xf32> to vector<16x1xf32>
    %cst_53 = arith.constant 1.280000e+02 : f32
    %165 = vector.broadcast %cst_53 : f32 to vector<16x1xf32>
    %166 = arith.divf %164, %165 : vector<16x1xf32>
    %cst_54 = arith.constant 9.99999974E-6 : f32
    %167 = vector.broadcast %cst_54 : f32 to vector<16x1xf32>
    %168 = arith.addf %166, %167 : vector<16x1xf32>
    %169 = math.rsqrt %168 : vector<16x1xf32>
    %170 = vector.broadcast %169 : vector<16x1xf32> to vector<16x128xf32>
    %171 = arith.mulf %161, %170 : vector<16x128xf32>
    %172 = vector.broadcast %14 : vector<1x128xf32> to vector<16x128xf32>
    %173 = arith.mulf %171, %172 : vector<16x128xf32>
    %174 = vector.broadcast %15 : vector<1x128xf32> to vector<16x128xf32>
    %175 = arith.addf %173, %174 : vector<16x128xf32>
    %c1 = arith.constant 1 : index
    %c0_55 = arith.constant 0 : index
    %c0_56 = arith.constant 0 : index
    %176 = vector.load %arg6[%c1, %c0_55, %c0_56] : memref<4x8x384xf32, #tpu.memory_space<vmem>>, vector<1x8x384xf32>
    %177 = vector.shape_cast %176 : vector<1x8x384xf32> to vector<8x384xf32>
    %178 = vector.extract_strided_slice %177 {offsets = [0, 0], sizes = [1, 384], strides = [1, 1]} : vector<8x384xf32> to vector<1x384xf32>
    %179 = vector.extract_strided_slice %177 {offsets = [1, 0], sizes = [1, 128], strides = [1, 1]} : vector<8x384xf32> to vector<1x128xf32>
    %180 = vector.extract_strided_slice %177 {offsets = [1, 128], sizes = [1, 128], strides = [1, 1]} : vector<8x384xf32> to vector<1x128xf32>
    %181 = vector.extract_strided_slice %177 {offsets = [1, 256], sizes = [1, 128], strides = [1, 1]} : vector<8x384xf32> to vector<1x128xf32>
    %182 = vector.extract_strided_slice %177 {offsets = [2, 0], sizes = [1, 256], strides = [1, 1]} : vector<8x384xf32> to vector<1x256xf32>
    %183 = vector.extract_strided_slice %177 {offsets = [2, 256], sizes = [1, 128], strides = [1, 1]} : vector<8x384xf32> to vector<1x128xf32>
    %184 = vector.extract_strided_slice %177 {offsets = [3, 0], sizes = [1, 128], strides = [1, 1]} : vector<8x384xf32> to vector<1x128xf32>
    %185 = vector.extract_strided_slice %177 {offsets = [3, 128], sizes = [1, 128], strides = [1, 1]} : vector<8x384xf32> to vector<1x128xf32>
    %186 = arith.truncf %175 : vector<16x128xf32> to vector<16x128xbf16>
    %c1_57 = arith.constant 1 : index
    %c0_58 = arith.constant 0 : index
    %c0_59 = arith.constant 0 : index
    %187 = vector.load %arg2[%c1_57, %c0_58, %c0_59] : memref<4x128x384xbf16, #tpu.memory_space<vmem>>, vector<1x128x384xbf16>
    %188 = vector.shape_cast %187 : vector<1x128x384xbf16> to vector<128x384xbf16>
    %cst_60 = arith.constant dense<0.000000e+00> : vector<16x384xf32>
    %189 = tpu.matmul %186, %188, %cst_60 {dimension_numbers = #tpu.dot_dimension_numbers<[1], [0], [0], [1], [0, 0, 1, 1], [], []>} : vector<16x128xbf16>, vector<128x384xbf16>, vector<16x384xf32> -> vector<16x384xf32>
    %190 = vector.broadcast %178 : vector<1x384xf32> to vector<16x384xf32>
    %191 = arith.addf %189, %190 : vector<16x384xf32>
    %192 = vector.shape_cast %191 : vector<16x384xf32> to vector<2x8x384xf32>
    %193 = arith.truncf %192 : vector<2x8x384xf32> to vector<2x8x384xbf16>
    %194 = vector.extract_strided_slice %193 {offsets = [0, 0, 0], sizes = [2, 8, 32], strides = [1, 1, 1]} : vector<2x8x384xbf16> to vector<2x8x32xbf16>
    %195 = vector.extract_strided_slice %193 {offsets = [0, 0, 128], sizes = [2, 8, 32], strides = [1, 1, 1]} : vector<2x8x384xbf16> to vector<2x8x32xbf16>
    %196 = vector.extract_strided_slice %193 {offsets = [0, 0, 256], sizes = [2, 8, 32], strides = [1, 1, 1]} : vector<2x8x384xbf16> to vector<2x8x32xbf16>
    "tpu.trace_start"() <{level = 10 : i32, message = "bqd,bkd->bqk"}> : () -> ()
    %cst_61 = arith.constant dense<0.000000e+00> : vector<2x8x8xf32>
    %197 = tpu.matmul %194, %195, %cst_61 {dimension_numbers = #tpu.dot_dimension_numbers<[2], [2], [1], [1], [0, 0, 0, 1, 1, 1], [0], [0]>} : vector<2x8x32xbf16>, vector<2x8x32xbf16>, vector<2x8x8xf32> -> vector<2x8x8xf32>
    "tpu.trace_stop"() : () -> ()
    %cst_62 = arith.constant 0.176776692 : f32
    %198 = vector.broadcast %cst_62 : f32 to vector<2x8x8xf32>
    %199 = arith.mulf %197, %198 : vector<2x8x8xf32>
    %cst_63 = arith.constant 0xFF800000 : f32
    %200 = vector.shape_cast %3 : vector<1x8x8xi1> to vector<1x8x8xi1>
    %201 = vector.broadcast %200 : vector<1x8x8xi1> to vector<2x8x8xi1>
    %202 = vector.broadcast %cst_63 : f32 to vector<2x8x8xf32>
    %203 = arith.select %201, %199, %202 : vector<2x8x8xi1>, vector<2x8x8xf32>
    %cst_64 = arith.constant dense<0xFF800000> : vector<2x8xf32>
    %204 = vector.multi_reduction <maximumf>, %203, %cst_64 [2] : vector<2x8x8xf32> to vector<2x8xf32>
    %205 = vector.shape_cast %204 : vector<2x8xf32> to vector<2x8x1xf32>
    %206 = vector.broadcast %205 : vector<2x8x1xf32> to vector<2x8x8xf32>
    %207 = arith.subf %203, %206 : vector<2x8x8xf32>
    %208 = math.exp %207 : vector<2x8x8xf32>
    %cst_65 = arith.constant dense<0.000000e+00> : vector<2x8xf32>
    %209 = vector.multi_reduction <add>, %208, %cst_65 [2] : vector<2x8x8xf32> to vector<2x8xf32>
    %210 = vector.shape_cast %209 : vector<2x8xf32> to vector<2x8x1xf32>
    %211 = tpu.reciprocal %210 {approx = true} : vector<2x8x1xf32> -> vector<2x8x1xf32>
    %212 = vector.broadcast %211 : vector<2x8x1xf32> to vector<2x8x8xf32>
    %213 = arith.mulf %208, %212 : vector<2x8x8xf32>
    %214 = arith.truncf %213 : vector<2x8x8xf32> to vector<2x8x8xbf16>
    "tpu.trace_start"() <{level = 10 : i32, message = "bqk,bkd->bqd"}> : () -> ()
    %cst_66 = arith.constant dense<0.000000e+00> : vector<2x8x32xf32>
    %215 = tpu.matmul %214, %196, %cst_66 {dimension_numbers = #tpu.dot_dimension_numbers<[2], [1], [1], [2], [0, 0, 0, 1, 1, 2], [0], [0]>} : vector<2x8x8xbf16>, vector<2x8x32xbf16>, vector<2x8x32xf32> -> vector<2x8x32xf32>
    "tpu.trace_stop"() : () -> ()
    %216 = vector.extract_strided_slice %193 {offsets = [0, 0, 32], sizes = [2, 8, 32], strides = [1, 1, 1]} : vector<2x8x384xbf16> to vector<2x8x32xbf16>
    %217 = vector.extract_strided_slice %193 {offsets = [0, 0, 160], sizes = [2, 8, 32], strides = [1, 1, 1]} : vector<2x8x384xbf16> to vector<2x8x32xbf16>
    %218 = vector.extract_strided_slice %193 {offsets = [0, 0, 288], sizes = [2, 8, 32], strides = [1, 1, 1]} : vector<2x8x384xbf16> to vector<2x8x32xbf16>
    "tpu.trace_start"() <{level = 10 : i32, message = "bqd,bkd->bqk"}> : () -> ()
    %cst_67 = arith.constant dense<0.000000e+00> : vector<2x8x8xf32>
    %219 = tpu.matmul %216, %217, %cst_67 {dimension_numbers = #tpu.dot_dimension_numbers<[2], [2], [1], [1], [0, 0, 0, 1, 1, 1], [0], [0]>} : vector<2x8x32xbf16>, vector<2x8x32xbf16>, vector<2x8x8xf32> -> vector<2x8x8xf32>
    "tpu.trace_stop"() : () -> ()
    %cst_68 = arith.constant 0.176776692 : f32
    %220 = vector.broadcast %cst_68 : f32 to vector<2x8x8xf32>
    %221 = arith.mulf %219, %220 : vector<2x8x8xf32>
    %cst_69 = arith.constant 0xFF800000 : f32
    %222 = vector.shape_cast %3 : vector<1x8x8xi1> to vector<1x8x8xi1>
    %223 = vector.broadcast %222 : vector<1x8x8xi1> to vector<2x8x8xi1>
    %224 = vector.broadcast %cst_69 : f32 to vector<2x8x8xf32>
    %225 = arith.select %223, %221, %224 : vector<2x8x8xi1>, vector<2x8x8xf32>
    %cst_70 = arith.constant dense<0xFF800000> : vector<2x8xf32>
    %226 = vector.multi_reduction <maximumf>, %225, %cst_70 [2] : vector<2x8x8xf32> to vector<2x8xf32>
    %227 = vector.shape_cast %226 : vector<2x8xf32> to vector<2x8x1xf32>
    %228 = vector.broadcast %227 : vector<2x8x1xf32> to vector<2x8x8xf32>
    %229 = arith.subf %225, %228 : vector<2x8x8xf32>
    %230 = math.exp %229 : vector<2x8x8xf32>
    %cst_71 = arith.constant dense<0.000000e+00> : vector<2x8xf32>
    %231 = vector.multi_reduction <add>, %230, %cst_71 [2] : vector<2x8x8xf32> to vector<2x8xf32>
    %232 = vector.shape_cast %231 : vector<2x8xf32> to vector<2x8x1xf32>
    %233 = tpu.reciprocal %232 {approx = true} : vector<2x8x1xf32> -> vector<2x8x1xf32>
    %234 = vector.broadcast %233 : vector<2x8x1xf32> to vector<2x8x8xf32>
    %235 = arith.mulf %230, %234 : vector<2x8x8xf32>
    %236 = arith.truncf %235 : vector<2x8x8xf32> to vector<2x8x8xbf16>
    "tpu.trace_start"() <{level = 10 : i32, message = "bqk,bkd->bqd"}> : () -> ()
    %cst_72 = arith.constant dense<0.000000e+00> : vector<2x8x32xf32>
    %237 = tpu.matmul %236, %218, %cst_72 {dimension_numbers = #tpu.dot_dimension_numbers<[2], [1], [1], [2], [0, 0, 0, 1, 1, 2], [0], [0]>} : vector<2x8x8xbf16>, vector<2x8x32xbf16>, vector<2x8x32xf32> -> vector<2x8x32xf32>
    "tpu.trace_stop"() : () -> ()
    %238 = vector.extract_strided_slice %193 {offsets = [0, 0, 64], sizes = [2, 8, 32], strides = [1, 1, 1]} : vector<2x8x384xbf16> to vector<2x8x32xbf16>
    %239 = vector.extract_strided_slice %193 {offsets = [0, 0, 192], sizes = [2, 8, 32], strides = [1, 1, 1]} : vector<2x8x384xbf16> to vector<2x8x32xbf16>
    %240 = vector.extract_strided_slice %193 {offsets = [0, 0, 320], sizes = [2, 8, 32], strides = [1, 1, 1]} : vector<2x8x384xbf16> to vector<2x8x32xbf16>
    "tpu.trace_start"() <{level = 10 : i32, message = "bqd,bkd->bqk"}> : () -> ()
    %cst_73 = arith.constant dense<0.000000e+00> : vector<2x8x8xf32>
    %241 = tpu.matmul %238, %239, %cst_73 {dimension_numbers = #tpu.dot_dimension_numbers<[2], [2], [1], [1], [0, 0, 0, 1, 1, 1], [0], [0]>} : vector<2x8x32xbf16>, vector<2x8x32xbf16>, vector<2x8x8xf32> -> vector<2x8x8xf32>
    "tpu.trace_stop"() : () -> ()
    %cst_74 = arith.constant 0.176776692 : f32
    %242 = vector.broadcast %cst_74 : f32 to vector<2x8x8xf32>
    %243 = arith.mulf %241, %242 : vector<2x8x8xf32>
    %cst_75 = arith.constant 0xFF800000 : f32
    %244 = vector.shape_cast %3 : vector<1x8x8xi1> to vector<1x8x8xi1>
    %245 = vector.broadcast %244 : vector<1x8x8xi1> to vector<2x8x8xi1>
    %246 = vector.broadcast %cst_75 : f32 to vector<2x8x8xf32>
    %247 = arith.select %245, %243, %246 : vector<2x8x8xi1>, vector<2x8x8xf32>
    %cst_76 = arith.constant dense<0xFF800000> : vector<2x8xf32>
    %248 = vector.multi_reduction <maximumf>, %247, %cst_76 [2] : vector<2x8x8xf32> to vector<2x8xf32>
    %249 = vector.shape_cast %248 : vector<2x8xf32> to vector<2x8x1xf32>
    %250 = vector.broadcast %249 : vector<2x8x1xf32> to vector<2x8x8xf32>
    %251 = arith.subf %247, %250 : vector<2x8x8xf32>
    %252 = math.exp %251 : vector<2x8x8xf32>
    %cst_77 = arith.constant dense<0.000000e+00> : vector<2x8xf32>
    %253 = vector.multi_reduction <add>, %252, %cst_77 [2] : vector<2x8x8xf32> to vector<2x8xf32>
    %254 = vector.shape_cast %253 : vector<2x8xf32> to vector<2x8x1xf32>
    %255 = tpu.reciprocal %254 {approx = true} : vector<2x8x1xf32> -> vector<2x8x1xf32>
    %256 = vector.broadcast %255 : vector<2x8x1xf32> to vector<2x8x8xf32>
    %257 = arith.mulf %252, %256 : vector<2x8x8xf32>
    %258 = arith.truncf %257 : vector<2x8x8xf32> to vector<2x8x8xbf16>
    "tpu.trace_start"() <{level = 10 : i32, message = "bqk,bkd->bqd"}> : () -> ()
    %cst_78 = arith.constant dense<0.000000e+00> : vector<2x8x32xf32>
    %259 = tpu.matmul %258, %240, %cst_78 {dimension_numbers = #tpu.dot_dimension_numbers<[2], [1], [1], [2], [0, 0, 0, 1, 1, 2], [0], [0]>} : vector<2x8x8xbf16>, vector<2x8x32xbf16>, vector<2x8x32xf32> -> vector<2x8x32xf32>
    "tpu.trace_stop"() : () -> ()
    %260 = vector.extract_strided_slice %193 {offsets = [0, 0, 96], sizes = [2, 8, 32], strides = [1, 1, 1]} : vector<2x8x384xbf16> to vector<2x8x32xbf16>
    %261 = vector.extract_strided_slice %193 {offsets = [0, 0, 224], sizes = [2, 8, 32], strides = [1, 1, 1]} : vector<2x8x384xbf16> to vector<2x8x32xbf16>
    %262 = vector.extract_strided_slice %193 {offsets = [0, 0, 352], sizes = [2, 8, 32], strides = [1, 1, 1]} : vector<2x8x384xbf16> to vector<2x8x32xbf16>
    "tpu.trace_start"() <{level = 10 : i32, message = "bqd,bkd->bqk"}> : () -> ()
    %cst_79 = arith.constant dense<0.000000e+00> : vector<2x8x8xf32>
    %263 = tpu.matmul %260, %261, %cst_79 {dimension_numbers = #tpu.dot_dimension_numbers<[2], [2], [1], [1], [0, 0, 0, 1, 1, 1], [0], [0]>} : vector<2x8x32xbf16>, vector<2x8x32xbf16>, vector<2x8x8xf32> -> vector<2x8x8xf32>
    "tpu.trace_stop"() : () -> ()
    %cst_80 = arith.constant 0.176776692 : f32
    %264 = vector.broadcast %cst_80 : f32 to vector<2x8x8xf32>
    %265 = arith.mulf %263, %264 : vector<2x8x8xf32>
    %cst_81 = arith.constant 0xFF800000 : f32
    %266 = vector.shape_cast %3 : vector<1x8x8xi1> to vector<1x8x8xi1>
    %267 = vector.broadcast %266 : vector<1x8x8xi1> to vector<2x8x8xi1>
    %268 = vector.broadcast %cst_81 : f32 to vector<2x8x8xf32>
    %269 = arith.select %267, %265, %268 : vector<2x8x8xi1>, vector<2x8x8xf32>
    %cst_82 = arith.constant dense<0xFF800000> : vector<2x8xf32>
    %270 = vector.multi_reduction <maximumf>, %269, %cst_82 [2] : vector<2x8x8xf32> to vector<2x8xf32>
    %271 = vector.shape_cast %270 : vector<2x8xf32> to vector<2x8x1xf32>
    %272 = vector.broadcast %271 : vector<2x8x1xf32> to vector<2x8x8xf32>
    %273 = arith.subf %269, %272 : vector<2x8x8xf32>
    %274 = math.exp %273 : vector<2x8x8xf32>
    %cst_83 = arith.constant dense<0.000000e+00> : vector<2x8xf32>
    %275 = vector.multi_reduction <add>, %274, %cst_83 [2] : vector<2x8x8xf32> to vector<2x8xf32>
    %276 = vector.shape_cast %275 : vector<2x8xf32> to vector<2x8x1xf32>
    %277 = tpu.reciprocal %276 {approx = true} : vector<2x8x1xf32> -> vector<2x8x1xf32>
    %278 = vector.broadcast %277 : vector<2x8x1xf32> to vector<2x8x8xf32>
    %279 = arith.mulf %274, %278 : vector<2x8x8xf32>
    %280 = arith.truncf %279 : vector<2x8x8xf32> to vector<2x8x8xbf16>
    "tpu.trace_start"() <{level = 10 : i32, message = "bqk,bkd->bqd"}> : () -> ()
    %cst_84 = arith.constant dense<0.000000e+00> : vector<2x8x32xf32>
    %281 = tpu.matmul %280, %262, %cst_84 {dimension_numbers = #tpu.dot_dimension_numbers<[2], [1], [1], [2], [0, 0, 0, 1, 1, 2], [0], [0]>} : vector<2x8x8xbf16>, vector<2x8x32xbf16>, vector<2x8x32xf32> -> vector<2x8x32xf32>
    "tpu.trace_stop"() : () -> ()
    %282 = tpu.concatenate %215, %237, %259, %281 in 2 : vector<2x8x32xf32>, vector<2x8x32xf32>, vector<2x8x32xf32>, vector<2x8x32xf32> -> vector<2x8x128xf32>
    %283 = vector.shape_cast %282 : vector<2x8x128xf32> to vector<16x128xf32>
    %284 = arith.truncf %283 : vector<16x128xf32> to vector<16x128xbf16>
    %c1_85 = arith.constant 1 : index
    %c0_86 = arith.constant 0 : index
    %c0_87 = arith.constant 0 : index
    %285 = vector.load %arg3[%c1_85, %c0_86, %c0_87] : memref<4x128x128xbf16, #tpu.memory_space<vmem>>, vector<1x128x128xbf16>
    %286 = vector.shape_cast %285 : vector<1x128x128xbf16> to vector<128x128xbf16>
    %cst_88 = arith.constant dense<0.000000e+00> : vector<16x128xf32>
    %287 = tpu.matmul %284, %286, %cst_88 {dimension_numbers = #tpu.dot_dimension_numbers<[1], [0], [0], [1], [0, 0, 1, 1], [], []>} : vector<16x128xbf16>, vector<128x128xbf16>, vector<16x128xf32> -> vector<16x128xf32>
    %288 = vector.broadcast %179 : vector<1x128xf32> to vector<16x128xf32>
    %289 = arith.addf %287, %288 : vector<16x128xf32>
    %290 = arith.addf %175, %289 : vector<16x128xf32>
    %cst_89 = arith.constant dense<0.000000e+00> : vector<16xf32>
    %291 = vector.multi_reduction <add>, %290, %cst_89 [1] : vector<16x128xf32> to vector<16xf32>
    %292 = vector.shape_cast %291 : vector<16xf32> to vector<16x1xf32>
    %cst_90 = arith.constant 1.280000e+02 : f32
    %293 = vector.broadcast %cst_90 : f32 to vector<16x1xf32>
    %294 = arith.divf %292, %293 : vector<16x1xf32>
    %295 = vector.broadcast %294 : vector<16x1xf32> to vector<16x128xf32>
    %296 = arith.subf %290, %295 : vector<16x128xf32>
    %297 = arith.mulf %296, %296 : vector<16x128xf32>
    %cst_91 = arith.constant dense<0.000000e+00> : vector<16xf32>
    %298 = vector.multi_reduction <add>, %297, %cst_91 [1] : vector<16x128xf32> to vector<16xf32>
    %299 = vector.shape_cast %298 : vector<16xf32> to vector<16x1xf32>
    %cst_92 = arith.constant 1.280000e+02 : f32
    %300 = vector.broadcast %cst_92 : f32 to vector<16x1xf32>
    %301 = arith.divf %299, %300 : vector<16x1xf32>
    %cst_93 = arith.constant 9.99999974E-6 : f32
    %302 = vector.broadcast %cst_93 : f32 to vector<16x1xf32>
    %303 = arith.addf %301, %302 : vector<16x1xf32>
    %304 = math.rsqrt %303 : vector<16x1xf32>
    %305 = vector.broadcast %304 : vector<16x1xf32> to vector<16x128xf32>
    %306 = arith.mulf %296, %305 : vector<16x128xf32>
    %307 = vector.broadcast %180 : vector<1x128xf32> to vector<16x128xf32>
    %308 = arith.mulf %306, %307 : vector<16x128xf32>
    %309 = vector.broadcast %181 : vector<1x128xf32> to vector<16x128xf32>
    %310 = arith.addf %308, %309 : vector<16x128xf32>
    %311 = arith.truncf %310 : vector<16x128xf32> to vector<16x128xbf16>
    %c1_94 = arith.constant 1 : index
    %c0_95 = arith.constant 0 : index
    %c0_96 = arith.constant 0 : index
    %312 = vector.load %arg4[%c1_94, %c0_95, %c0_96] : memref<4x128x256xbf16, #tpu.memory_space<vmem>>, vector<1x128x256xbf16>
    %313 = vector.shape_cast %312 : vector<1x128x256xbf16> to vector<128x256xbf16>
    %cst_97 = arith.constant dense<0.000000e+00> : vector<16x256xf32>
    %314 = tpu.matmul %311, %313, %cst_97 {dimension_numbers = #tpu.dot_dimension_numbers<[1], [0], [0], [1], [0, 0, 1, 1], [], []>} : vector<16x128xbf16>, vector<128x256xbf16>, vector<16x256xf32> -> vector<16x256xf32>
    %315 = vector.broadcast %182 : vector<1x256xf32> to vector<16x256xf32>
    %316 = arith.addf %314, %315 : vector<16x256xf32>
    %cst_98 = arith.constant 0.000000e+00 : f32
    %317 = vector.broadcast %cst_98 : f32 to vector<16x256xf32>
    %318 = arith.maximumf %316, %317 : vector<16x256xf32>
    %319 = arith.truncf %318 : vector<16x256xf32> to vector<16x256xbf16>
    %c1_99 = arith.constant 1 : index
    %c0_100 = arith.constant 0 : index
    %c0_101 = arith.constant 0 : index
    %320 = vector.load %arg5[%c1_99, %c0_100, %c0_101] : memref<4x256x128xbf16, #tpu.memory_space<vmem>>, vector<1x256x128xbf16>
    %321 = vector.shape_cast %320 : vector<1x256x128xbf16> to vector<256x128xbf16>
    %cst_102 = arith.constant dense<0.000000e+00> : vector<16x128xf32>
    %322 = tpu.matmul %319, %321, %cst_102 {dimension_numbers = #tpu.dot_dimension_numbers<[1], [0], [0], [1], [0, 0, 1, 1], [], []>} : vector<16x256xbf16>, vector<256x128xbf16>, vector<16x128xf32> -> vector<16x128xf32>
    %323 = arith.addf %310, %322 : vector<16x128xf32>
    %324 = vector.broadcast %183 : vector<1x128xf32> to vector<16x128xf32>
    %325 = arith.addf %323, %324 : vector<16x128xf32>
    %cst_103 = arith.constant dense<0.000000e+00> : vector<16xf32>
    %326 = vector.multi_reduction <add>, %325, %cst_103 [1] : vector<16x128xf32> to vector<16xf32>
    %327 = vector.shape_cast %326 : vector<16xf32> to vector<16x1xf32>
    %cst_104 = arith.constant 1.280000e+02 : f32
    %328 = vector.broadcast %cst_104 : f32 to vector<16x1xf32>
    %329 = arith.divf %327, %328 : vector<16x1xf32>
    %330 = vector.broadcast %329 : vector<16x1xf32> to vector<16x128xf32>
    %331 = arith.subf %325, %330 : vector<16x128xf32>
    %332 = arith.mulf %331, %331 : vector<16x128xf32>
    %cst_105 = arith.constant dense<0.000000e+00> : vector<16xf32>
    %333 = vector.multi_reduction <add>, %332, %cst_105 [1] : vector<16x128xf32> to vector<16xf32>
    %334 = vector.shape_cast %333 : vector<16xf32> to vector<16x1xf32>
    %cst_106 = arith.constant 1.280000e+02 : f32
    %335 = vector.broadcast %cst_106 : f32 to vector<16x1xf32>
    %336 = arith.divf %334, %335 : vector<16x1xf32>
    %cst_107 = arith.constant 9.99999974E-6 : f32
    %337 = vector.broadcast %cst_107 : f32 to vector<16x1xf32>
    %338 = arith.addf %336, %337 : vector<16x1xf32>
    %339 = math.rsqrt %338 : vector<16x1xf32>
    %340 = vector.broadcast %339 : vector<16x1xf32> to vector<16x128xf32>
    %341 = arith.mulf %331, %340 : vector<16x128xf32>
    %342 = vector.broadcast %184 : vector<1x128xf32> to vector<16x128xf32>
    %343 = arith.mulf %341, %342 : vector<16x128xf32>
    %344 = vector.broadcast %185 : vector<1x128xf32> to vector<16x128xf32>
    %345 = arith.addf %343, %344 : vector<16x128xf32>
    %c2 = arith.constant 2 : index
    %c0_108 = arith.constant 0 : index
    %c0_109 = arith.constant 0 : index
    %346 = vector.load %arg6[%c2, %c0_108, %c0_109] : memref<4x8x384xf32, #tpu.memory_space<vmem>>, vector<1x8x384xf32>
    %347 = vector.shape_cast %346 : vector<1x8x384xf32> to vector<8x384xf32>
    %348 = vector.extract_strided_slice %347 {offsets = [0, 0], sizes = [1, 384], strides = [1, 1]} : vector<8x384xf32> to vector<1x384xf32>
    %349 = vector.extract_strided_slice %347 {offsets = [1, 0], sizes = [1, 128], strides = [1, 1]} : vector<8x384xf32> to vector<1x128xf32>
    %350 = vector.extract_strided_slice %347 {offsets = [1, 128], sizes = [1, 128], strides = [1, 1]} : vector<8x384xf32> to vector<1x128xf32>
    %351 = vector.extract_strided_slice %347 {offsets = [1, 256], sizes = [1, 128], strides = [1, 1]} : vector<8x384xf32> to vector<1x128xf32>
    %352 = vector.extract_strided_slice %347 {offsets = [2, 0], sizes = [1, 256], strides = [1, 1]} : vector<8x384xf32> to vector<1x256xf32>
    %353 = vector.extract_strided_slice %347 {offsets = [2, 256], sizes = [1, 128], strides = [1, 1]} : vector<8x384xf32> to vector<1x128xf32>
    %354 = vector.extract_strided_slice %347 {offsets = [3, 0], sizes = [1, 128], strides = [1, 1]} : vector<8x384xf32> to vector<1x128xf32>
    %355 = vector.extract_strided_slice %347 {offsets = [3, 128], sizes = [1, 128], strides = [1, 1]} : vector<8x384xf32> to vector<1x128xf32>
    %356 = arith.truncf %345 : vector<16x128xf32> to vector<16x128xbf16>
    %c2_110 = arith.constant 2 : index
    %c0_111 = arith.constant 0 : index
    %c0_112 = arith.constant 0 : index
    %357 = vector.load %arg2[%c2_110, %c0_111, %c0_112] : memref<4x128x384xbf16, #tpu.memory_space<vmem>>, vector<1x128x384xbf16>
    %358 = vector.shape_cast %357 : vector<1x128x384xbf16> to vector<128x384xbf16>
    %cst_113 = arith.constant dense<0.000000e+00> : vector<16x384xf32>
    %359 = tpu.matmul %356, %358, %cst_113 {dimension_numbers = #tpu.dot_dimension_numbers<[1], [0], [0], [1], [0, 0, 1, 1], [], []>} : vector<16x128xbf16>, vector<128x384xbf16>, vector<16x384xf32> -> vector<16x384xf32>
    %360 = vector.broadcast %348 : vector<1x384xf32> to vector<16x384xf32>
    %361 = arith.addf %359, %360 : vector<16x384xf32>
    %362 = vector.shape_cast %361 : vector<16x384xf32> to vector<2x8x384xf32>
    %363 = arith.truncf %362 : vector<2x8x384xf32> to vector<2x8x384xbf16>
    %364 = vector.extract_strided_slice %363 {offsets = [0, 0, 0], sizes = [2, 8, 32], strides = [1, 1, 1]} : vector<2x8x384xbf16> to vector<2x8x32xbf16>
    %365 = vector.extract_strided_slice %363 {offsets = [0, 0, 128], sizes = [2, 8, 32], strides = [1, 1, 1]} : vector<2x8x384xbf16> to vector<2x8x32xbf16>
    %366 = vector.extract_strided_slice %363 {offsets = [0, 0, 256], sizes = [2, 8, 32], strides = [1, 1, 1]} : vector<2x8x384xbf16> to vector<2x8x32xbf16>
    "tpu.trace_start"() <{level = 10 : i32, message = "bqd,bkd->bqk"}> : () -> ()
    %cst_114 = arith.constant dense<0.000000e+00> : vector<2x8x8xf32>
    %367 = tpu.matmul %364, %365, %cst_114 {dimension_numbers = #tpu.dot_dimension_numbers<[2], [2], [1], [1], [0, 0, 0, 1, 1, 1], [0], [0]>} : vector<2x8x32xbf16>, vector<2x8x32xbf16>, vector<2x8x8xf32> -> vector<2x8x8xf32>
    "tpu.trace_stop"() : () -> ()
    %cst_115 = arith.constant 0.176776692 : f32
    %368 = vector.broadcast %cst_115 : f32 to vector<2x8x8xf32>
    %369 = arith.mulf %367, %368 : vector<2x8x8xf32>
    %cst_116 = arith.constant 0xFF800000 : f32
    %370 = vector.shape_cast %3 : vector<1x8x8xi1> to vector<1x8x8xi1>
    %371 = vector.broadcast %370 : vector<1x8x8xi1> to vector<2x8x8xi1>
    %372 = vector.broadcast %cst_116 : f32 to vector<2x8x8xf32>
    %373 = arith.select %371, %369, %372 : vector<2x8x8xi1>, vector<2x8x8xf32>
    %cst_117 = arith.constant dense<0xFF800000> : vector<2x8xf32>
    %374 = vector.multi_reduction <maximumf>, %373, %cst_117 [2] : vector<2x8x8xf32> to vector<2x8xf32>
    %375 = vector.shape_cast %374 : vector<2x8xf32> to vector<2x8x1xf32>
    %376 = vector.broadcast %375 : vector<2x8x1xf32> to vector<2x8x8xf32>
    %377 = arith.subf %373, %376 : vector<2x8x8xf32>
    %378 = math.exp %377 : vector<2x8x8xf32>
    %cst_118 = arith.constant dense<0.000000e+00> : vector<2x8xf32>
    %379 = vector.multi_reduction <add>, %378, %cst_118 [2] : vector<2x8x8xf32> to vector<2x8xf32>
    %380 = vector.shape_cast %379 : vector<2x8xf32> to vector<2x8x1xf32>
    %381 = tpu.reciprocal %380 {approx = true} : vector<2x8x1xf32> -> vector<2x8x1xf32>
    %382 = vector.broadcast %381 : vector<2x8x1xf32> to vector<2x8x8xf32>
    %383 = arith.mulf %378, %382 : vector<2x8x8xf32>
    %384 = arith.truncf %383 : vector<2x8x8xf32> to vector<2x8x8xbf16>
    "tpu.trace_start"() <{level = 10 : i32, message = "bqk,bkd->bqd"}> : () -> ()
    %cst_119 = arith.constant dense<0.000000e+00> : vector<2x8x32xf32>
    %385 = tpu.matmul %384, %366, %cst_119 {dimension_numbers = #tpu.dot_dimension_numbers<[2], [1], [1], [2], [0, 0, 0, 1, 1, 2], [0], [0]>} : vector<2x8x8xbf16>, vector<2x8x32xbf16>, vector<2x8x32xf32> -> vector<2x8x32xf32>
    "tpu.trace_stop"() : () -> ()
    %386 = vector.extract_strided_slice %363 {offsets = [0, 0, 32], sizes = [2, 8, 32], strides = [1, 1, 1]} : vector<2x8x384xbf16> to vector<2x8x32xbf16>
    %387 = vector.extract_strided_slice %363 {offsets = [0, 0, 160], sizes = [2, 8, 32], strides = [1, 1, 1]} : vector<2x8x384xbf16> to vector<2x8x32xbf16>
    %388 = vector.extract_strided_slice %363 {offsets = [0, 0, 288], sizes = [2, 8, 32], strides = [1, 1, 1]} : vector<2x8x384xbf16> to vector<2x8x32xbf16>
    "tpu.trace_start"() <{level = 10 : i32, message = "bqd,bkd->bqk"}> : () -> ()
    %cst_120 = arith.constant dense<0.000000e+00> : vector<2x8x8xf32>
    %389 = tpu.matmul %386, %387, %cst_120 {dimension_numbers = #tpu.dot_dimension_numbers<[2], [2], [1], [1], [0, 0, 0, 1, 1, 1], [0], [0]>} : vector<2x8x32xbf16>, vector<2x8x32xbf16>, vector<2x8x8xf32> -> vector<2x8x8xf32>
    "tpu.trace_stop"() : () -> ()
    %cst_121 = arith.constant 0.176776692 : f32
    %390 = vector.broadcast %cst_121 : f32 to vector<2x8x8xf32>
    %391 = arith.mulf %389, %390 : vector<2x8x8xf32>
    %cst_122 = arith.constant 0xFF800000 : f32
    %392 = vector.shape_cast %3 : vector<1x8x8xi1> to vector<1x8x8xi1>
    %393 = vector.broadcast %392 : vector<1x8x8xi1> to vector<2x8x8xi1>
    %394 = vector.broadcast %cst_122 : f32 to vector<2x8x8xf32>
    %395 = arith.select %393, %391, %394 : vector<2x8x8xi1>, vector<2x8x8xf32>
    %cst_123 = arith.constant dense<0xFF800000> : vector<2x8xf32>
    %396 = vector.multi_reduction <maximumf>, %395, %cst_123 [2] : vector<2x8x8xf32> to vector<2x8xf32>
    %397 = vector.shape_cast %396 : vector<2x8xf32> to vector<2x8x1xf32>
    %398 = vector.broadcast %397 : vector<2x8x1xf32> to vector<2x8x8xf32>
    %399 = arith.subf %395, %398 : vector<2x8x8xf32>
    %400 = math.exp %399 : vector<2x8x8xf32>
    %cst_124 = arith.constant dense<0.000000e+00> : vector<2x8xf32>
    %401 = vector.multi_reduction <add>, %400, %cst_124 [2] : vector<2x8x8xf32> to vector<2x8xf32>
    %402 = vector.shape_cast %401 : vector<2x8xf32> to vector<2x8x1xf32>
    %403 = tpu.reciprocal %402 {approx = true} : vector<2x8x1xf32> -> vector<2x8x1xf32>
    %404 = vector.broadcast %403 : vector<2x8x1xf32> to vector<2x8x8xf32>
    %405 = arith.mulf %400, %404 : vector<2x8x8xf32>
    %406 = arith.truncf %405 : vector<2x8x8xf32> to vector<2x8x8xbf16>
    "tpu.trace_start"() <{level = 10 : i32, message = "bqk,bkd->bqd"}> : () -> ()
    %cst_125 = arith.constant dense<0.000000e+00> : vector<2x8x32xf32>
    %407 = tpu.matmul %406, %388, %cst_125 {dimension_numbers = #tpu.dot_dimension_numbers<[2], [1], [1], [2], [0, 0, 0, 1, 1, 2], [0], [0]>} : vector<2x8x8xbf16>, vector<2x8x32xbf16>, vector<2x8x32xf32> -> vector<2x8x32xf32>
    "tpu.trace_stop"() : () -> ()
    %408 = vector.extract_strided_slice %363 {offsets = [0, 0, 64], sizes = [2, 8, 32], strides = [1, 1, 1]} : vector<2x8x384xbf16> to vector<2x8x32xbf16>
    %409 = vector.extract_strided_slice %363 {offsets = [0, 0, 192], sizes = [2, 8, 32], strides = [1, 1, 1]} : vector<2x8x384xbf16> to vector<2x8x32xbf16>
    %410 = vector.extract_strided_slice %363 {offsets = [0, 0, 320], sizes = [2, 8, 32], strides = [1, 1, 1]} : vector<2x8x384xbf16> to vector<2x8x32xbf16>
    "tpu.trace_start"() <{level = 10 : i32, message = "bqd,bkd->bqk"}> : () -> ()
    %cst_126 = arith.constant dense<0.000000e+00> : vector<2x8x8xf32>
    %411 = tpu.matmul %408, %409, %cst_126 {dimension_numbers = #tpu.dot_dimension_numbers<[2], [2], [1], [1], [0, 0, 0, 1, 1, 1], [0], [0]>} : vector<2x8x32xbf16>, vector<2x8x32xbf16>, vector<2x8x8xf32> -> vector<2x8x8xf32>
    "tpu.trace_stop"() : () -> ()
    %cst_127 = arith.constant 0.176776692 : f32
    %412 = vector.broadcast %cst_127 : f32 to vector<2x8x8xf32>
    %413 = arith.mulf %411, %412 : vector<2x8x8xf32>
    %cst_128 = arith.constant 0xFF800000 : f32
    %414 = vector.shape_cast %3 : vector<1x8x8xi1> to vector<1x8x8xi1>
    %415 = vector.broadcast %414 : vector<1x8x8xi1> to vector<2x8x8xi1>
    %416 = vector.broadcast %cst_128 : f32 to vector<2x8x8xf32>
    %417 = arith.select %415, %413, %416 : vector<2x8x8xi1>, vector<2x8x8xf32>
    %cst_129 = arith.constant dense<0xFF800000> : vector<2x8xf32>
    %418 = vector.multi_reduction <maximumf>, %417, %cst_129 [2] : vector<2x8x8xf32> to vector<2x8xf32>
    %419 = vector.shape_cast %418 : vector<2x8xf32> to vector<2x8x1xf32>
    %420 = vector.broadcast %419 : vector<2x8x1xf32> to vector<2x8x8xf32>
    %421 = arith.subf %417, %420 : vector<2x8x8xf32>
    %422 = math.exp %421 : vector<2x8x8xf32>
    %cst_130 = arith.constant dense<0.000000e+00> : vector<2x8xf32>
    %423 = vector.multi_reduction <add>, %422, %cst_130 [2] : vector<2x8x8xf32> to vector<2x8xf32>
    %424 = vector.shape_cast %423 : vector<2x8xf32> to vector<2x8x1xf32>
    %425 = tpu.reciprocal %424 {approx = true} : vector<2x8x1xf32> -> vector<2x8x1xf32>
    %426 = vector.broadcast %425 : vector<2x8x1xf32> to vector<2x8x8xf32>
    %427 = arith.mulf %422, %426 : vector<2x8x8xf32>
    %428 = arith.truncf %427 : vector<2x8x8xf32> to vector<2x8x8xbf16>
    "tpu.trace_start"() <{level = 10 : i32, message = "bqk,bkd->bqd"}> : () -> ()
    %cst_131 = arith.constant dense<0.000000e+00> : vector<2x8x32xf32>
    %429 = tpu.matmul %428, %410, %cst_131 {dimension_numbers = #tpu.dot_dimension_numbers<[2], [1], [1], [2], [0, 0, 0, 1, 1, 2], [0], [0]>} : vector<2x8x8xbf16>, vector<2x8x32xbf16>, vector<2x8x32xf32> -> vector<2x8x32xf32>
    "tpu.trace_stop"() : () -> ()
    %430 = vector.extract_strided_slice %363 {offsets = [0, 0, 96], sizes = [2, 8, 32], strides = [1, 1, 1]} : vector<2x8x384xbf16> to vector<2x8x32xbf16>
    %431 = vector.extract_strided_slice %363 {offsets = [0, 0, 224], sizes = [2, 8, 32], strides = [1, 1, 1]} : vector<2x8x384xbf16> to vector<2x8x32xbf16>
    %432 = vector.extract_strided_slice %363 {offsets = [0, 0, 352], sizes = [2, 8, 32], strides = [1, 1, 1]} : vector<2x8x384xbf16> to vector<2x8x32xbf16>
    "tpu.trace_start"() <{level = 10 : i32, message = "bqd,bkd->bqk"}> : () -> ()
    %cst_132 = arith.constant dense<0.000000e+00> : vector<2x8x8xf32>
    %433 = tpu.matmul %430, %431, %cst_132 {dimension_numbers = #tpu.dot_dimension_numbers<[2], [2], [1], [1], [0, 0, 0, 1, 1, 1], [0], [0]>} : vector<2x8x32xbf16>, vector<2x8x32xbf16>, vector<2x8x8xf32> -> vector<2x8x8xf32>
    "tpu.trace_stop"() : () -> ()
    %cst_133 = arith.constant 0.176776692 : f32
    %434 = vector.broadcast %cst_133 : f32 to vector<2x8x8xf32>
    %435 = arith.mulf %433, %434 : vector<2x8x8xf32>
    %cst_134 = arith.constant 0xFF800000 : f32
    %436 = vector.shape_cast %3 : vector<1x8x8xi1> to vector<1x8x8xi1>
    %437 = vector.broadcast %436 : vector<1x8x8xi1> to vector<2x8x8xi1>
    %438 = vector.broadcast %cst_134 : f32 to vector<2x8x8xf32>
    %439 = arith.select %437, %435, %438 : vector<2x8x8xi1>, vector<2x8x8xf32>
    %cst_135 = arith.constant dense<0xFF800000> : vector<2x8xf32>
    %440 = vector.multi_reduction <maximumf>, %439, %cst_135 [2] : vector<2x8x8xf32> to vector<2x8xf32>
    %441 = vector.shape_cast %440 : vector<2x8xf32> to vector<2x8x1xf32>
    %442 = vector.broadcast %441 : vector<2x8x1xf32> to vector<2x8x8xf32>
    %443 = arith.subf %439, %442 : vector<2x8x8xf32>
    %444 = math.exp %443 : vector<2x8x8xf32>
    %cst_136 = arith.constant dense<0.000000e+00> : vector<2x8xf32>
    %445 = vector.multi_reduction <add>, %444, %cst_136 [2] : vector<2x8x8xf32> to vector<2x8xf32>
    %446 = vector.shape_cast %445 : vector<2x8xf32> to vector<2x8x1xf32>
    %447 = tpu.reciprocal %446 {approx = true} : vector<2x8x1xf32> -> vector<2x8x1xf32>
    %448 = vector.broadcast %447 : vector<2x8x1xf32> to vector<2x8x8xf32>
    %449 = arith.mulf %444, %448 : vector<2x8x8xf32>
    %450 = arith.truncf %449 : vector<2x8x8xf32> to vector<2x8x8xbf16>
    "tpu.trace_start"() <{level = 10 : i32, message = "bqk,bkd->bqd"}> : () -> ()
    %cst_137 = arith.constant dense<0.000000e+00> : vector<2x8x32xf32>
    %451 = tpu.matmul %450, %432, %cst_137 {dimension_numbers = #tpu.dot_dimension_numbers<[2], [1], [1], [2], [0, 0, 0, 1, 1, 2], [0], [0]>} : vector<2x8x8xbf16>, vector<2x8x32xbf16>, vector<2x8x32xf32> -> vector<2x8x32xf32>
    "tpu.trace_stop"() : () -> ()
    %452 = tpu.concatenate %385, %407, %429, %451 in 2 : vector<2x8x32xf32>, vector<2x8x32xf32>, vector<2x8x32xf32>, vector<2x8x32xf32> -> vector<2x8x128xf32>
    %453 = vector.shape_cast %452 : vector<2x8x128xf32> to vector<16x128xf32>
    %454 = arith.truncf %453 : vector<16x128xf32> to vector<16x128xbf16>
    %c2_138 = arith.constant 2 : index
    %c0_139 = arith.constant 0 : index
    %c0_140 = arith.constant 0 : index
    %455 = vector.load %arg3[%c2_138, %c0_139, %c0_140] : memref<4x128x128xbf16, #tpu.memory_space<vmem>>, vector<1x128x128xbf16>
    %456 = vector.shape_cast %455 : vector<1x128x128xbf16> to vector<128x128xbf16>
    %cst_141 = arith.constant dense<0.000000e+00> : vector<16x128xf32>
    %457 = tpu.matmul %454, %456, %cst_141 {dimension_numbers = #tpu.dot_dimension_numbers<[1], [0], [0], [1], [0, 0, 1, 1], [], []>} : vector<16x128xbf16>, vector<128x128xbf16>, vector<16x128xf32> -> vector<16x128xf32>
    %458 = vector.broadcast %349 : vector<1x128xf32> to vector<16x128xf32>
    %459 = arith.addf %457, %458 : vector<16x128xf32>
    %460 = arith.addf %345, %459 : vector<16x128xf32>
    %cst_142 = arith.constant dense<0.000000e+00> : vector<16xf32>
    %461 = vector.multi_reduction <add>, %460, %cst_142 [1] : vector<16x128xf32> to vector<16xf32>
    %462 = vector.shape_cast %461 : vector<16xf32> to vector<16x1xf32>
    %cst_143 = arith.constant 1.280000e+02 : f32
    %463 = vector.broadcast %cst_143 : f32 to vector<16x1xf32>
    %464 = arith.divf %462, %463 : vector<16x1xf32>
    %465 = vector.broadcast %464 : vector<16x1xf32> to vector<16x128xf32>
    %466 = arith.subf %460, %465 : vector<16x128xf32>
    %467 = arith.mulf %466, %466 : vector<16x128xf32>
    %cst_144 = arith.constant dense<0.000000e+00> : vector<16xf32>
    %468 = vector.multi_reduction <add>, %467, %cst_144 [1] : vector<16x128xf32> to vector<16xf32>
    %469 = vector.shape_cast %468 : vector<16xf32> to vector<16x1xf32>
    %cst_145 = arith.constant 1.280000e+02 : f32
    %470 = vector.broadcast %cst_145 : f32 to vector<16x1xf32>
    %471 = arith.divf %469, %470 : vector<16x1xf32>
    %cst_146 = arith.constant 9.99999974E-6 : f32
    %472 = vector.broadcast %cst_146 : f32 to vector<16x1xf32>
    %473 = arith.addf %471, %472 : vector<16x1xf32>
    %474 = math.rsqrt %473 : vector<16x1xf32>
    %475 = vector.broadcast %474 : vector<16x1xf32> to vector<16x128xf32>
    %476 = arith.mulf %466, %475 : vector<16x128xf32>
    %477 = vector.broadcast %350 : vector<1x128xf32> to vector<16x128xf32>
    %478 = arith.mulf %476, %477 : vector<16x128xf32>
    %479 = vector.broadcast %351 : vector<1x128xf32> to vector<16x128xf32>
    %480 = arith.addf %478, %479 : vector<16x128xf32>
    %481 = arith.truncf %480 : vector<16x128xf32> to vector<16x128xbf16>
    %c2_147 = arith.constant 2 : index
    %c0_148 = arith.constant 0 : index
    %c0_149 = arith.constant 0 : index
    %482 = vector.load %arg4[%c2_147, %c0_148, %c0_149] : memref<4x128x256xbf16, #tpu.memory_space<vmem>>, vector<1x128x256xbf16>
    %483 = vector.shape_cast %482 : vector<1x128x256xbf16> to vector<128x256xbf16>
    %cst_150 = arith.constant dense<0.000000e+00> : vector<16x256xf32>
    %484 = tpu.matmul %481, %483, %cst_150 {dimension_numbers = #tpu.dot_dimension_numbers<[1], [0], [0], [1], [0, 0, 1, 1], [], []>} : vector<16x128xbf16>, vector<128x256xbf16>, vector<16x256xf32> -> vector<16x256xf32>
    %485 = vector.broadcast %352 : vector<1x256xf32> to vector<16x256xf32>
    %486 = arith.addf %484, %485 : vector<16x256xf32>
    %cst_151 = arith.constant 0.000000e+00 : f32
    %487 = vector.broadcast %cst_151 : f32 to vector<16x256xf32>
    %488 = arith.maximumf %486, %487 : vector<16x256xf32>
    %489 = arith.truncf %488 : vector<16x256xf32> to vector<16x256xbf16>
    %c2_152 = arith.constant 2 : index
    %c0_153 = arith.constant 0 : index
    %c0_154 = arith.constant 0 : index
    %490 = vector.load %arg5[%c2_152, %c0_153, %c0_154] : memref<4x256x128xbf16, #tpu.memory_space<vmem>>, vector<1x256x128xbf16>
    %491 = vector.shape_cast %490 : vector<1x256x128xbf16> to vector<256x128xbf16>
    %cst_155 = arith.constant dense<0.000000e+00> : vector<16x128xf32>
    %492 = tpu.matmul %489, %491, %cst_155 {dimension_numbers = #tpu.dot_dimension_numbers<[1], [0], [0], [1], [0, 0, 1, 1], [], []>} : vector<16x256xbf16>, vector<256x128xbf16>, vector<16x128xf32> -> vector<16x128xf32>
    %493 = arith.addf %480, %492 : vector<16x128xf32>
    %494 = vector.broadcast %353 : vector<1x128xf32> to vector<16x128xf32>
    %495 = arith.addf %493, %494 : vector<16x128xf32>
    %cst_156 = arith.constant dense<0.000000e+00> : vector<16xf32>
    %496 = vector.multi_reduction <add>, %495, %cst_156 [1] : vector<16x128xf32> to vector<16xf32>
    %497 = vector.shape_cast %496 : vector<16xf32> to vector<16x1xf32>
    %cst_157 = arith.constant 1.280000e+02 : f32
    %498 = vector.broadcast %cst_157 : f32 to vector<16x1xf32>
    %499 = arith.divf %497, %498 : vector<16x1xf32>
    %500 = vector.broadcast %499 : vector<16x1xf32> to vector<16x128xf32>
    %501 = arith.subf %495, %500 : vector<16x128xf32>
    %502 = arith.mulf %501, %501 : vector<16x128xf32>
    %cst_158 = arith.constant dense<0.000000e+00> : vector<16xf32>
    %503 = vector.multi_reduction <add>, %502, %cst_158 [1] : vector<16x128xf32> to vector<16xf32>
    %504 = vector.shape_cast %503 : vector<16xf32> to vector<16x1xf32>
    %cst_159 = arith.constant 1.280000e+02 : f32
    %505 = vector.broadcast %cst_159 : f32 to vector<16x1xf32>
    %506 = arith.divf %504, %505 : vector<16x1xf32>
    %cst_160 = arith.constant 9.99999974E-6 : f32
    %507 = vector.broadcast %cst_160 : f32 to vector<16x1xf32>
    %508 = arith.addf %506, %507 : vector<16x1xf32>
    %509 = math.rsqrt %508 : vector<16x1xf32>
    %510 = vector.broadcast %509 : vector<16x1xf32> to vector<16x128xf32>
    %511 = arith.mulf %501, %510 : vector<16x128xf32>
    %512 = vector.broadcast %354 : vector<1x128xf32> to vector<16x128xf32>
    %513 = arith.mulf %511, %512 : vector<16x128xf32>
    %514 = vector.broadcast %355 : vector<1x128xf32> to vector<16x128xf32>
    %515 = arith.addf %513, %514 : vector<16x128xf32>
    %c3 = arith.constant 3 : index
    %c0_161 = arith.constant 0 : index
    %c0_162 = arith.constant 0 : index
    %516 = vector.load %arg6[%c3, %c0_161, %c0_162] : memref<4x8x384xf32, #tpu.memory_space<vmem>>, vector<1x8x384xf32>
    %517 = vector.shape_cast %516 : vector<1x8x384xf32> to vector<8x384xf32>
    %518 = vector.extract_strided_slice %517 {offsets = [0, 0], sizes = [1, 384], strides = [1, 1]} : vector<8x384xf32> to vector<1x384xf32>
    %519 = vector.extract_strided_slice %517 {offsets = [1, 0], sizes = [1, 128], strides = [1, 1]} : vector<8x384xf32> to vector<1x128xf32>
    %520 = vector.extract_strided_slice %517 {offsets = [1, 128], sizes = [1, 128], strides = [1, 1]} : vector<8x384xf32> to vector<1x128xf32>
    %521 = vector.extract_strided_slice %517 {offsets = [1, 256], sizes = [1, 128], strides = [1, 1]} : vector<8x384xf32> to vector<1x128xf32>
    %522 = vector.extract_strided_slice %517 {offsets = [2, 0], sizes = [1, 256], strides = [1, 1]} : vector<8x384xf32> to vector<1x256xf32>
    %523 = vector.extract_strided_slice %517 {offsets = [2, 256], sizes = [1, 128], strides = [1, 1]} : vector<8x384xf32> to vector<1x128xf32>
    %524 = vector.extract_strided_slice %517 {offsets = [3, 0], sizes = [1, 128], strides = [1, 1]} : vector<8x384xf32> to vector<1x128xf32>
    %525 = vector.extract_strided_slice %517 {offsets = [3, 128], sizes = [1, 128], strides = [1, 1]} : vector<8x384xf32> to vector<1x128xf32>
    %526 = arith.truncf %515 : vector<16x128xf32> to vector<16x128xbf16>
    %c3_163 = arith.constant 3 : index
    %c0_164 = arith.constant 0 : index
    %c0_165 = arith.constant 0 : index
    %527 = vector.load %arg2[%c3_163, %c0_164, %c0_165] : memref<4x128x384xbf16, #tpu.memory_space<vmem>>, vector<1x128x384xbf16>
    %528 = vector.shape_cast %527 : vector<1x128x384xbf16> to vector<128x384xbf16>
    %cst_166 = arith.constant dense<0.000000e+00> : vector<16x384xf32>
    %529 = tpu.matmul %526, %528, %cst_166 {dimension_numbers = #tpu.dot_dimension_numbers<[1], [0], [0], [1], [0, 0, 1, 1], [], []>} : vector<16x128xbf16>, vector<128x384xbf16>, vector<16x384xf32> -> vector<16x384xf32>
    %530 = vector.broadcast %518 : vector<1x384xf32> to vector<16x384xf32>
    %531 = arith.addf %529, %530 : vector<16x384xf32>
    %532 = vector.shape_cast %531 : vector<16x384xf32> to vector<2x8x384xf32>
    %533 = arith.truncf %532 : vector<2x8x384xf32> to vector<2x8x384xbf16>
    %534 = vector.extract_strided_slice %533 {offsets = [0, 0, 0], sizes = [2, 8, 32], strides = [1, 1, 1]} : vector<2x8x384xbf16> to vector<2x8x32xbf16>
    %535 = vector.extract_strided_slice %533 {offsets = [0, 0, 128], sizes = [2, 8, 32], strides = [1, 1, 1]} : vector<2x8x384xbf16> to vector<2x8x32xbf16>
    %536 = vector.extract_strided_slice %533 {offsets = [0, 0, 256], sizes = [2, 8, 32], strides = [1, 1, 1]} : vector<2x8x384xbf16> to vector<2x8x32xbf16>
    "tpu.trace_start"() <{level = 10 : i32, message = "bqd,bkd->bqk"}> : () -> ()
    %cst_167 = arith.constant dense<0.000000e+00> : vector<2x8x8xf32>
    %537 = tpu.matmul %534, %535, %cst_167 {dimension_numbers = #tpu.dot_dimension_numbers<[2], [2], [1], [1], [0, 0, 0, 1, 1, 1], [0], [0]>} : vector<2x8x32xbf16>, vector<2x8x32xbf16>, vector<2x8x8xf32> -> vector<2x8x8xf32>
    "tpu.trace_stop"() : () -> ()
    %cst_168 = arith.constant 0.176776692 : f32
    %538 = vector.broadcast %cst_168 : f32 to vector<2x8x8xf32>
    %539 = arith.mulf %537, %538 : vector<2x8x8xf32>
    %cst_169 = arith.constant 0xFF800000 : f32
    %540 = vector.shape_cast %3 : vector<1x8x8xi1> to vector<1x8x8xi1>
    %541 = vector.broadcast %540 : vector<1x8x8xi1> to vector<2x8x8xi1>
    %542 = vector.broadcast %cst_169 : f32 to vector<2x8x8xf32>
    %543 = arith.select %541, %539, %542 : vector<2x8x8xi1>, vector<2x8x8xf32>
    %cst_170 = arith.constant dense<0xFF800000> : vector<2x8xf32>
    %544 = vector.multi_reduction <maximumf>, %543, %cst_170 [2] : vector<2x8x8xf32> to vector<2x8xf32>
    %545 = vector.shape_cast %544 : vector<2x8xf32> to vector<2x8x1xf32>
    %546 = vector.broadcast %545 : vector<2x8x1xf32> to vector<2x8x8xf32>
    %547 = arith.subf %543, %546 : vector<2x8x8xf32>
    %548 = math.exp %547 : vector<2x8x8xf32>
    %cst_171 = arith.constant dense<0.000000e+00> : vector<2x8xf32>
    %549 = vector.multi_reduction <add>, %548, %cst_171 [2] : vector<2x8x8xf32> to vector<2x8xf32>
    %550 = vector.shape_cast %549 : vector<2x8xf32> to vector<2x8x1xf32>
    %551 = tpu.reciprocal %550 {approx = true} : vector<2x8x1xf32> -> vector<2x8x1xf32>
    %552 = vector.broadcast %551 : vector<2x8x1xf32> to vector<2x8x8xf32>
    %553 = arith.mulf %548, %552 : vector<2x8x8xf32>
    %554 = arith.truncf %553 : vector<2x8x8xf32> to vector<2x8x8xbf16>
    "tpu.trace_start"() <{level = 10 : i32, message = "bqk,bkd->bqd"}> : () -> ()
    %cst_172 = arith.constant dense<0.000000e+00> : vector<2x8x32xf32>
    %555 = tpu.matmul %554, %536, %cst_172 {dimension_numbers = #tpu.dot_dimension_numbers<[2], [1], [1], [2], [0, 0, 0, 1, 1, 2], [0], [0]>} : vector<2x8x8xbf16>, vector<2x8x32xbf16>, vector<2x8x32xf32> -> vector<2x8x32xf32>
    "tpu.trace_stop"() : () -> ()
    %556 = vector.extract_strided_slice %533 {offsets = [0, 0, 32], sizes = [2, 8, 32], strides = [1, 1, 1]} : vector<2x8x384xbf16> to vector<2x8x32xbf16>
    %557 = vector.extract_strided_slice %533 {offsets = [0, 0, 160], sizes = [2, 8, 32], strides = [1, 1, 1]} : vector<2x8x384xbf16> to vector<2x8x32xbf16>
    %558 = vector.extract_strided_slice %533 {offsets = [0, 0, 288], sizes = [2, 8, 32], strides = [1, 1, 1]} : vector<2x8x384xbf16> to vector<2x8x32xbf16>
    "tpu.trace_start"() <{level = 10 : i32, message = "bqd,bkd->bqk"}> : () -> ()
    %cst_173 = arith.constant dense<0.000000e+00> : vector<2x8x8xf32>
    %559 = tpu.matmul %556, %557, %cst_173 {dimension_numbers = #tpu.dot_dimension_numbers<[2], [2], [1], [1], [0, 0, 0, 1, 1, 1], [0], [0]>} : vector<2x8x32xbf16>, vector<2x8x32xbf16>, vector<2x8x8xf32> -> vector<2x8x8xf32>
    "tpu.trace_stop"() : () -> ()
    %cst_174 = arith.constant 0.176776692 : f32
    %560 = vector.broadcast %cst_174 : f32 to vector<2x8x8xf32>
    %561 = arith.mulf %559, %560 : vector<2x8x8xf32>
    %cst_175 = arith.constant 0xFF800000 : f32
    %562 = vector.shape_cast %3 : vector<1x8x8xi1> to vector<1x8x8xi1>
    %563 = vector.broadcast %562 : vector<1x8x8xi1> to vector<2x8x8xi1>
    %564 = vector.broadcast %cst_175 : f32 to vector<2x8x8xf32>
    %565 = arith.select %563, %561, %564 : vector<2x8x8xi1>, vector<2x8x8xf32>
    %cst_176 = arith.constant dense<0xFF800000> : vector<2x8xf32>
    %566 = vector.multi_reduction <maximumf>, %565, %cst_176 [2] : vector<2x8x8xf32> to vector<2x8xf32>
    %567 = vector.shape_cast %566 : vector<2x8xf32> to vector<2x8x1xf32>
    %568 = vector.broadcast %567 : vector<2x8x1xf32> to vector<2x8x8xf32>
    %569 = arith.subf %565, %568 : vector<2x8x8xf32>
    %570 = math.exp %569 : vector<2x8x8xf32>
    %cst_177 = arith.constant dense<0.000000e+00> : vector<2x8xf32>
    %571 = vector.multi_reduction <add>, %570, %cst_177 [2] : vector<2x8x8xf32> to vector<2x8xf32>
    %572 = vector.shape_cast %571 : vector<2x8xf32> to vector<2x8x1xf32>
    %573 = tpu.reciprocal %572 {approx = true} : vector<2x8x1xf32> -> vector<2x8x1xf32>
    %574 = vector.broadcast %573 : vector<2x8x1xf32> to vector<2x8x8xf32>
    %575 = arith.mulf %570, %574 : vector<2x8x8xf32>
    %576 = arith.truncf %575 : vector<2x8x8xf32> to vector<2x8x8xbf16>
    "tpu.trace_start"() <{level = 10 : i32, message = "bqk,bkd->bqd"}> : () -> ()
    %cst_178 = arith.constant dense<0.000000e+00> : vector<2x8x32xf32>
    %577 = tpu.matmul %576, %558, %cst_178 {dimension_numbers = #tpu.dot_dimension_numbers<[2], [1], [1], [2], [0, 0, 0, 1, 1, 2], [0], [0]>} : vector<2x8x8xbf16>, vector<2x8x32xbf16>, vector<2x8x32xf32> -> vector<2x8x32xf32>
    "tpu.trace_stop"() : () -> ()
    %578 = vector.extract_strided_slice %533 {offsets = [0, 0, 64], sizes = [2, 8, 32], strides = [1, 1, 1]} : vector<2x8x384xbf16> to vector<2x8x32xbf16>
    %579 = vector.extract_strided_slice %533 {offsets = [0, 0, 192], sizes = [2, 8, 32], strides = [1, 1, 1]} : vector<2x8x384xbf16> to vector<2x8x32xbf16>
    %580 = vector.extract_strided_slice %533 {offsets = [0, 0, 320], sizes = [2, 8, 32], strides = [1, 1, 1]} : vector<2x8x384xbf16> to vector<2x8x32xbf16>
    "tpu.trace_start"() <{level = 10 : i32, message = "bqd,bkd->bqk"}> : () -> ()
    %cst_179 = arith.constant dense<0.000000e+00> : vector<2x8x8xf32>
    %581 = tpu.matmul %578, %579, %cst_179 {dimension_numbers = #tpu.dot_dimension_numbers<[2], [2], [1], [1], [0, 0, 0, 1, 1, 1], [0], [0]>} : vector<2x8x32xbf16>, vector<2x8x32xbf16>, vector<2x8x8xf32> -> vector<2x8x8xf32>
    "tpu.trace_stop"() : () -> ()
    %cst_180 = arith.constant 0.176776692 : f32
    %582 = vector.broadcast %cst_180 : f32 to vector<2x8x8xf32>
    %583 = arith.mulf %581, %582 : vector<2x8x8xf32>
    %cst_181 = arith.constant 0xFF800000 : f32
    %584 = vector.shape_cast %3 : vector<1x8x8xi1> to vector<1x8x8xi1>
    %585 = vector.broadcast %584 : vector<1x8x8xi1> to vector<2x8x8xi1>
    %586 = vector.broadcast %cst_181 : f32 to vector<2x8x8xf32>
    %587 = arith.select %585, %583, %586 : vector<2x8x8xi1>, vector<2x8x8xf32>
    %cst_182 = arith.constant dense<0xFF800000> : vector<2x8xf32>
    %588 = vector.multi_reduction <maximumf>, %587, %cst_182 [2] : vector<2x8x8xf32> to vector<2x8xf32>
    %589 = vector.shape_cast %588 : vector<2x8xf32> to vector<2x8x1xf32>
    %590 = vector.broadcast %589 : vector<2x8x1xf32> to vector<2x8x8xf32>
    %591 = arith.subf %587, %590 : vector<2x8x8xf32>
    %592 = math.exp %591 : vector<2x8x8xf32>
    %cst_183 = arith.constant dense<0.000000e+00> : vector<2x8xf32>
    %593 = vector.multi_reduction <add>, %592, %cst_183 [2] : vector<2x8x8xf32> to vector<2x8xf32>
    %594 = vector.shape_cast %593 : vector<2x8xf32> to vector<2x8x1xf32>
    %595 = tpu.reciprocal %594 {approx = true} : vector<2x8x1xf32> -> vector<2x8x1xf32>
    %596 = vector.broadcast %595 : vector<2x8x1xf32> to vector<2x8x8xf32>
    %597 = arith.mulf %592, %596 : vector<2x8x8xf32>
    %598 = arith.truncf %597 : vector<2x8x8xf32> to vector<2x8x8xbf16>
    "tpu.trace_start"() <{level = 10 : i32, message = "bqk,bkd->bqd"}> : () -> ()
    %cst_184 = arith.constant dense<0.000000e+00> : vector<2x8x32xf32>
    %599 = tpu.matmul %598, %580, %cst_184 {dimension_numbers = #tpu.dot_dimension_numbers<[2], [1], [1], [2], [0, 0, 0, 1, 1, 2], [0], [0]>} : vector<2x8x8xbf16>, vector<2x8x32xbf16>, vector<2x8x32xf32> -> vector<2x8x32xf32>
    "tpu.trace_stop"() : () -> ()
    %600 = vector.extract_strided_slice %533 {offsets = [0, 0, 96], sizes = [2, 8, 32], strides = [1, 1, 1]} : vector<2x8x384xbf16> to vector<2x8x32xbf16>
    %601 = vector.extract_strided_slice %533 {offsets = [0, 0, 224], sizes = [2, 8, 32], strides = [1, 1, 1]} : vector<2x8x384xbf16> to vector<2x8x32xbf16>
    %602 = vector.extract_strided_slice %533 {offsets = [0, 0, 352], sizes = [2, 8, 32], strides = [1, 1, 1]} : vector<2x8x384xbf16> to vector<2x8x32xbf16>
    "tpu.trace_start"() <{level = 10 : i32, message = "bqd,bkd->bqk"}> : () -> ()
    %cst_185 = arith.constant dense<0.000000e+00> : vector<2x8x8xf32>
    %603 = tpu.matmul %600, %601, %cst_185 {dimension_numbers = #tpu.dot_dimension_numbers<[2], [2], [1], [1], [0, 0, 0, 1, 1, 1], [0], [0]>} : vector<2x8x32xbf16>, vector<2x8x32xbf16>, vector<2x8x8xf32> -> vector<2x8x8xf32>
    "tpu.trace_stop"() : () -> ()
    %cst_186 = arith.constant 0.176776692 : f32
    %604 = vector.broadcast %cst_186 : f32 to vector<2x8x8xf32>
    %605 = arith.mulf %603, %604 : vector<2x8x8xf32>
    %cst_187 = arith.constant 0xFF800000 : f32
    %606 = vector.shape_cast %3 : vector<1x8x8xi1> to vector<1x8x8xi1>
    %607 = vector.broadcast %606 : vector<1x8x8xi1> to vector<2x8x8xi1>
    %608 = vector.broadcast %cst_187 : f32 to vector<2x8x8xf32>
    %609 = arith.select %607, %605, %608 : vector<2x8x8xi1>, vector<2x8x8xf32>
    %cst_188 = arith.constant dense<0xFF800000> : vector<2x8xf32>
    %610 = vector.multi_reduction <maximumf>, %609, %cst_188 [2] : vector<2x8x8xf32> to vector<2x8xf32>
    %611 = vector.shape_cast %610 : vector<2x8xf32> to vector<2x8x1xf32>
    %612 = vector.broadcast %611 : vector<2x8x1xf32> to vector<2x8x8xf32>
    %613 = arith.subf %609, %612 : vector<2x8x8xf32>
    %614 = math.exp %613 : vector<2x8x8xf32>
    %cst_189 = arith.constant dense<0.000000e+00> : vector<2x8xf32>
    %615 = vector.multi_reduction <add>, %614, %cst_189 [2] : vector<2x8x8xf32> to vector<2x8xf32>
    %616 = vector.shape_cast %615 : vector<2x8xf32> to vector<2x8x1xf32>
    %617 = tpu.reciprocal %616 {approx = true} : vector<2x8x1xf32> -> vector<2x8x1xf32>
    %618 = vector.broadcast %617 : vector<2x8x1xf32> to vector<2x8x8xf32>
    %619 = arith.mulf %614, %618 : vector<2x8x8xf32>
    %620 = arith.truncf %619 : vector<2x8x8xf32> to vector<2x8x8xbf16>
    "tpu.trace_start"() <{level = 10 : i32, message = "bqk,bkd->bqd"}> : () -> ()
    %cst_190 = arith.constant dense<0.000000e+00> : vector<2x8x32xf32>
    %621 = tpu.matmul %620, %602, %cst_190 {dimension_numbers = #tpu.dot_dimension_numbers<[2], [1], [1], [2], [0, 0, 0, 1, 1, 2], [0], [0]>} : vector<2x8x8xbf16>, vector<2x8x32xbf16>, vector<2x8x32xf32> -> vector<2x8x32xf32>
    "tpu.trace_stop"() : () -> ()
    %622 = tpu.concatenate %555, %577, %599, %621 in 2 : vector<2x8x32xf32>, vector<2x8x32xf32>, vector<2x8x32xf32>, vector<2x8x32xf32> -> vector<2x8x128xf32>
    %623 = vector.shape_cast %622 : vector<2x8x128xf32> to vector<16x128xf32>
    %624 = arith.truncf %623 : vector<16x128xf32> to vector<16x128xbf16>
    %c3_191 = arith.constant 3 : index
    %c0_192 = arith.constant 0 : index
    %c0_193 = arith.constant 0 : index
    %625 = vector.load %arg3[%c3_191, %c0_192, %c0_193] : memref<4x128x128xbf16, #tpu.memory_space<vmem>>, vector<1x128x128xbf16>
    %626 = vector.shape_cast %625 : vector<1x128x128xbf16> to vector<128x128xbf16>
    %cst_194 = arith.constant dense<0.000000e+00> : vector<16x128xf32>
    %627 = tpu.matmul %624, %626, %cst_194 {dimension_numbers = #tpu.dot_dimension_numbers<[1], [0], [0], [1], [0, 0, 1, 1], [], []>} : vector<16x128xbf16>, vector<128x128xbf16>, vector<16x128xf32> -> vector<16x128xf32>
    %628 = vector.broadcast %519 : vector<1x128xf32> to vector<16x128xf32>
    %629 = arith.addf %627, %628 : vector<16x128xf32>
    %630 = arith.addf %515, %629 : vector<16x128xf32>
    %cst_195 = arith.constant dense<0.000000e+00> : vector<16xf32>
    %631 = vector.multi_reduction <add>, %630, %cst_195 [1] : vector<16x128xf32> to vector<16xf32>
    %632 = vector.shape_cast %631 : vector<16xf32> to vector<16x1xf32>
    %cst_196 = arith.constant 1.280000e+02 : f32
    %633 = vector.broadcast %cst_196 : f32 to vector<16x1xf32>
    %634 = arith.divf %632, %633 : vector<16x1xf32>
    %635 = vector.broadcast %634 : vector<16x1xf32> to vector<16x128xf32>
    %636 = arith.subf %630, %635 : vector<16x128xf32>
    %637 = arith.mulf %636, %636 : vector<16x128xf32>
    %cst_197 = arith.constant dense<0.000000e+00> : vector<16xf32>
    %638 = vector.multi_reduction <add>, %637, %cst_197 [1] : vector<16x128xf32> to vector<16xf32>
    %639 = vector.shape_cast %638 : vector<16xf32> to vector<16x1xf32>
    %cst_198 = arith.constant 1.280000e+02 : f32
    %640 = vector.broadcast %cst_198 : f32 to vector<16x1xf32>
    %641 = arith.divf %639, %640 : vector<16x1xf32>
    %cst_199 = arith.constant 9.99999974E-6 : f32
    %642 = vector.broadcast %cst_199 : f32 to vector<16x1xf32>
    %643 = arith.addf %641, %642 : vector<16x1xf32>
    %644 = math.rsqrt %643 : vector<16x1xf32>
    %645 = vector.broadcast %644 : vector<16x1xf32> to vector<16x128xf32>
    %646 = arith.mulf %636, %645 : vector<16x128xf32>
    %647 = vector.broadcast %520 : vector<1x128xf32> to vector<16x128xf32>
    %648 = arith.mulf %646, %647 : vector<16x128xf32>
    %649 = vector.broadcast %521 : vector<1x128xf32> to vector<16x128xf32>
    %650 = arith.addf %648, %649 : vector<16x128xf32>
    %651 = arith.truncf %650 : vector<16x128xf32> to vector<16x128xbf16>
    %c3_200 = arith.constant 3 : index
    %c0_201 = arith.constant 0 : index
    %c0_202 = arith.constant 0 : index
    %652 = vector.load %arg4[%c3_200, %c0_201, %c0_202] : memref<4x128x256xbf16, #tpu.memory_space<vmem>>, vector<1x128x256xbf16>
    %653 = vector.shape_cast %652 : vector<1x128x256xbf16> to vector<128x256xbf16>
    %cst_203 = arith.constant dense<0.000000e+00> : vector<16x256xf32>
    %654 = tpu.matmul %651, %653, %cst_203 {dimension_numbers = #tpu.dot_dimension_numbers<[1], [0], [0], [1], [0, 0, 1, 1], [], []>} : vector<16x128xbf16>, vector<128x256xbf16>, vector<16x256xf32> -> vector<16x256xf32>
    %655 = vector.broadcast %522 : vector<1x256xf32> to vector<16x256xf32>
    %656 = arith.addf %654, %655 : vector<16x256xf32>
    %cst_204 = arith.constant 0.000000e+00 : f32
    %657 = vector.broadcast %cst_204 : f32 to vector<16x256xf32>
    %658 = arith.maximumf %656, %657 : vector<16x256xf32>
    %659 = arith.truncf %658 : vector<16x256xf32> to vector<16x256xbf16>
    %c3_205 = arith.constant 3 : index
    %c0_206 = arith.constant 0 : index
    %c0_207 = arith.constant 0 : index
    %660 = vector.load %arg5[%c3_205, %c0_206, %c0_207] : memref<4x256x128xbf16, #tpu.memory_space<vmem>>, vector<1x256x128xbf16>
    %661 = vector.shape_cast %660 : vector<1x256x128xbf16> to vector<256x128xbf16>
    %cst_208 = arith.constant dense<0.000000e+00> : vector<16x128xf32>
    %662 = tpu.matmul %659, %661, %cst_208 {dimension_numbers = #tpu.dot_dimension_numbers<[1], [0], [0], [1], [0, 0, 1, 1], [], []>} : vector<16x256xbf16>, vector<256x128xbf16>, vector<16x128xf32> -> vector<16x128xf32>
    %663 = arith.addf %650, %662 : vector<16x128xf32>
    %664 = vector.broadcast %523 : vector<1x128xf32> to vector<16x128xf32>
    %665 = arith.addf %663, %664 : vector<16x128xf32>
    %cst_209 = arith.constant dense<0.000000e+00> : vector<16xf32>
    %666 = vector.multi_reduction <add>, %665, %cst_209 [1] : vector<16x128xf32> to vector<16xf32>
    %667 = vector.shape_cast %666 : vector<16xf32> to vector<16x1xf32>
    %cst_210 = arith.constant 1.280000e+02 : f32
    %668 = vector.broadcast %cst_210 : f32 to vector<16x1xf32>
    %669 = arith.divf %667, %668 : vector<16x1xf32>
    %670 = vector.broadcast %669 : vector<16x1xf32> to vector<16x128xf32>
    %671 = arith.subf %665, %670 : vector<16x128xf32>
    %672 = arith.mulf %671, %671 : vector<16x128xf32>
    %cst_211 = arith.constant dense<0.000000e+00> : vector<16xf32>
    %673 = vector.multi_reduction <add>, %672, %cst_211 [1] : vector<16x128xf32> to vector<16xf32>
    %674 = vector.shape_cast %673 : vector<16xf32> to vector<16x1xf32>
    %cst_212 = arith.constant 1.280000e+02 : f32
    %675 = vector.broadcast %cst_212 : f32 to vector<16x1xf32>
    %676 = arith.divf %674, %675 : vector<16x1xf32>
    %cst_213 = arith.constant 9.99999974E-6 : f32
    %677 = vector.broadcast %cst_213 : f32 to vector<16x1xf32>
    %678 = arith.addf %676, %677 : vector<16x1xf32>
    %679 = math.rsqrt %678 : vector<16x1xf32>
    %680 = vector.broadcast %679 : vector<16x1xf32> to vector<16x128xf32>
    %681 = arith.mulf %671, %680 : vector<16x128xf32>
    %682 = vector.broadcast %524 : vector<1x128xf32> to vector<16x128xf32>
    %683 = arith.mulf %681, %682 : vector<16x128xf32>
    %684 = vector.broadcast %525 : vector<1x128xf32> to vector<16x128xf32>
    %685 = arith.addf %683, %684 : vector<16x128xf32>
    %686 = arith.truncf %685 : vector<16x128xf32> to vector<16x128xbf16>
    %c0_214 = arith.constant 0 : index
    %c0_215 = arith.constant 0 : index
    %687 = vector.load %arg7[%c0_214, %c0_215] : memref<128x128xbf16, #tpu.memory_space<vmem>>, vector<128x128xbf16>
    %cst_216 = arith.constant dense<0.000000e+00> : vector<16x128xf32>
    %688 = tpu.matmul %686, %687, %cst_216 {dimension_numbers = #tpu.dot_dimension_numbers<[1], [0], [0], [1], [0, 0, 1, 1], [], []>} : vector<16x128xbf16>, vector<128x128xbf16>, vector<16x128xf32> -> vector<16x128xf32>
    %c0_217 = arith.constant 0 : index
    %c0_218 = arith.constant 0 : index
    %689 = vector.load %arg8[%c0_217, %c0_218] : memref<1x128xf32, #tpu.memory_space<vmem>>, vector<1x128xf32>
    %690 = vector.broadcast %689 : vector<1x128xf32> to vector<16x128xf32>
    %691 = arith.addf %688, %690 : vector<16x128xf32>
    %692 = vector.shape_cast %691 : vector<16x128xf32> to vector<2x8x128xf32>
    %c0_219 = arith.constant 0 : index
    %c0_220 = arith.constant 0 : index
    %c0_221 = arith.constant 0 : index
    %693 = vector.load %arg9[%c0_219, %c0_220, %c0_221] : memref<2x8x128xf32, #tpu.memory_space<vmem>>, vector<2x8x128xf32>
    tpu.vector_store %arg9[%c0_219, %c0_220, %c0_221], %692 {strides = array<i32>} : memref<2x8x128xf32, #tpu.memory_space<vmem>>, vector<2x8x128xf32>,
    return
  }
  func.func @transform_0(%arg0: i32) -> (i32, i32, i32) {
    %c0_i32 = arith.constant 0 : i32
    %c0_i32_0 = arith.constant 0 : i32
    %c0_i32_1 = arith.constant 0 : i32
    return %arg0, %c0_i32, %c0_i32_0 : i32, i32, i32
  }
  func.func @transform_1(%arg0: i32) -> (i32, i32, i32) {
    %c0_i32 = arith.constant 0 : i32
    %c0_i32_0 = arith.constant 0 : i32
    %c0_i32_1 = arith.constant 0 : i32
    %c0_i32_2 = arith.constant 0 : i32
    return %c0_i32, %c0_i32_0, %c0_i32_1 : i32, i32, i32
  }
  func.func @transform_2(%arg0: i32) -> (i32, i32, i32) {
    %c0_i32 = arith.constant 0 : i32
    %c0_i32_0 = arith.constant 0 : i32
    %c0_i32_1 = arith.constant 0 : i32
    %c0_i32_2 = arith.constant 0 : i32
    return %c0_i32, %c0_i32_0, %c0_i32_1 : i32, i32, i32
  }
  func.func @transform_3(%arg0: i32) -> (i32, i32, i32) {
    %c0_i32 = arith.constant 0 : i32
    %c0_i32_0 = arith.constant 0 : i32
    %c0_i32_1 = arith.constant 0 : i32
    %c0_i32_2 = arith.constant 0 : i32
    return %c0_i32, %c0_i32_0, %c0_i32_1 : i32, i32, i32
  }
  func.func @transform_4(%arg0: i32) -> (i32, i32, i32) {
    %c0_i32 = arith.constant 0 : i32
    %c0_i32_0 = arith.constant 0 : i32
    %c0_i32_1 = arith.constant 0 : i32
    %c0_i32_2 = arith.constant 0 : i32
    return %c0_i32, %c0_i32_0, %c0_i32_1 : i32, i32, i32
  }
  func.func @transform_5(%arg0: i32) -> (i32, i32, i32) {
    %c0_i32 = arith.constant 0 : i32
    %c0_i32_0 = arith.constant 0 : i32
    %c0_i32_1 = arith.constant 0 : i32
    %c0_i32_2 = arith.constant 0 : i32
    return %c0_i32, %c0_i32_0, %c0_i32_1 : i32, i32, i32
  }
  func.func @transform_6(%arg0: i32) -> (i32, i32) {
    %c0_i32 = arith.constant 0 : i32
    %c0_i32_0 = arith.constant 0 : i32
    %c0_i32_1 = arith.constant 0 : i32
    return %c0_i32, %c0_i32_0 : i32, i32
  }
  func.func @transform_7(%arg0: i32) -> (i32, i32) {
    %c0_i32 = arith.constant 0 : i32
    %c0_i32_0 = arith.constant 0 : i32
    %c0_i32_1 = arith.constant 0 : i32
    return %c0_i32, %c0_i32_0 : i32, i32
  }
  func.func @transform_8(%arg0: i32) -> (i32, i32, i32) {
    %c0_i32 = arith.constant 0 : i32
    %c0_i32_0 = arith.constant 0 : i32
    %c0_i32_1 = arith.constant 0 : i32
    return %arg0, %c0_i32, %c0_i32_0 : i32, i32, i32
  }
}

</mosaic_0001>

<llo_original>
// kernel: poet_transformer_forward.1
$region0: #{poet_transformer_forward.1}
  #allocation0 [shape = 'u32[]', space=smem, size = 0x4, offset = 0x4, fixed_abs, tag = 'smem constant byte address 0x4 - core index']
  #allocation1 [shape = 'u32[72,128]{1,0:T(1,128)}', space=vmem, size = 0x9000, scoped, tag = 'internal scratch']
  %s0 = inlined_call_operand.vmem [shape: f32[2,8,128], index: 0, kind: input, shape index: {}]
  %s1 = inlined_call_operand.hbm [shape: bf16[4,128,384], index: 1, kind: input, shape index: {}]
  %s2 = inlined_call_operand.hbm [shape: bf16[4,128,128], index: 2, kind: input, shape index: {}]
  %s3 = inlined_call_operand.hbm [shape: bf16[4,128,256], index: 3, kind: input, shape index: {}]
  %s4 = inlined_call_operand.hbm [shape: bf16[4,256,128], index: 4, kind: input, shape index: {}]
  %s5 = inlined_call_operand.vmem [shape: f32[4,8,384], index: 5, kind: input, shape index: {}]
  %s6 = inlined_call_operand.vmem [shape: bf16[128,128], index: 6, kind: input, shape index: {}]
  %s7 = inlined_call_operand.vmem [shape: f32[1,128], index: 7, kind: input, shape index: {}]
  %s8 = inlined_call_operand.hbm [shape: f32[2,8,128], index: 8, kind: output, shape index: {}]
  %s9 = sld [smem:[#allocation0]]
  $region58: #{poet_transformer_forward.1} parent=0
    _
  %s11 = ssub.s32 1, %s9
  %s12 = scalar_select 0, %s11, %s9
  $region1: #{poet_transformer_forward.1} parent=0
    #allocation2 [shape = 'u8[393216]{0}', space=vmem, size = 0x60000, scoped, tag = 'input window, operand 1, single buffered']
    #allocation3 [shape = 's32[1]{0}', space=sflag, size = 0x4, scoped, tag = 'scoped memory for poet_transformer_forward.1']
    #allocation4 [shape = 's32[1]{0}', space=sflag, size = 0x4, scoped, tag = 'scoped memory for poet_transformer_forward.1']
    #allocation5 [shape = 'u8[131072]{0}', space=vmem, size = 0x20000, scoped, tag = 'input window, operand 2, single buffered']
    #allocation6 [shape = 's32[1]{0}', space=sflag, size = 0x4, scoped, tag = 'scoped memory for poet_transformer_forward.1']
    #allocation7 [shape = 'u8[262144]{0}', space=vmem, size = 0x40000, scoped, tag = 'input window, operand 3, single buffered']
    #allocation8 [shape = 'u8[262144]{0}', space=vmem, size = 0x40000, scoped, tag = 'input window, operand 4, single buffered']
    #allocation9 [shape = 's32[1]{0}', space=sflag, size = 0x4, scoped, tag = 'scoped memory for poet_transformer_forward.1']
    #allocation10 [shape = 'u8[8192]{0}', space=vmem, size = 0x2000, scoped, tag = 'output window, operand 0, single buffered']
    %13 = vsyncpa [#allocation3], 0
    %14 = vsyncpa [#allocation6], 0
    %15 = vsyncpa [#allocation9], 0
    %16 = vsyncpa [#allocation4], 0
    // Predicated region
    $region2: #{poet_transformer_forward.1} parent=1 // pred_check
      _
    $region3: #{poet_transformer_forward.1} parent=1 // pred_check_branch
      %18 = sbr.rel (0) target = $region5
    $region4: #{poet_transformer_forward.1} parent=1 // pred_region
      _
    $region5: #{poet_transformer_forward.1} parent=1 // pred_fallthru
      _
    // Predicated region
    $region6: #{poet_transformer_forward.1} parent=1 // pred_check
      _
    $region7: #{poet_transformer_forward.1} parent=1 // pred_check_branch
      %20 = sbr.rel (0) target = $region9
    $region8: #{poet_transformer_forward.1} parent=1 // pred_region
      %22 = vsyncadd [#allocation3], 0
      %s23 = sshll.u32 %s1, 4
      %s24 = int_to_ptr.hbm [resolvable:$true] %s23
      %s25 = sshll.u32 [#allocation2], 4
      %s26 = int_to_ptr.vmem [resolvable:$true] %s25
      %31 = dma.hbm_to_vmem [thread:$0]  %s24, 12288, %s26, [#allocation3], 192, 192, 12
    $region9: #{poet_transformer_forward.1} parent=1 // pred_fallthru
      _
    // Predicated region
    $region10: #{poet_transformer_forward.1} parent=1 // pred_check
      _
    $region11: #{poet_transformer_forward.1} parent=1 // pred_check_branch
      %33 = sbr.rel (0) target = $region13
    $region12: #{poet_transformer_forward.1} parent=1 // pred_region
      %35 = vsyncadd [#allocation6], 0
      %s36 = sshll.u32 %s2, 4
      %s37 = int_to_ptr.hbm [resolvable:$true] %s36
      %s38 = sshll.u32 [#allocation5], 4
      %s39 = int_to_ptr.vmem [resolvable:$true] %s38
      %44 = dma.hbm_to_vmem [thread:$0]  %s37, 4096, %s39, [#allocation6], 64, 64, 4
    $region13: #{poet_transformer_forward.1} parent=1 // pred_fallthru
      _
    // Predicated region
    $region14: #{poet_transformer_forward.1} parent=1 // pred_check
      _
    $region15: #{poet_transformer_forward.1} parent=1 // pred_check_branch
      %46 = sbr.rel (0) target = $region17
    $region16: #{poet_transformer_forward.1} parent=1 // pred_region
      %48 = vsyncadd [#allocation6], 0
      %s49 = sshll.u32 %s3, 4
      %s50 = int_to_ptr.hbm [resolvable:$true] %s49
      %s51 = sshll.u32 [#allocation7], 4
      %s52 = int_to_ptr.vmem [resolvable:$true] %s51
      %57 = dma.hbm_to_vmem [thread:$0]  %s50, 8192, %s52, [#allocation6], 128, 128, 8
    $region17: #{poet_transformer_forward.1} parent=1 // pred_fallthru
      _
    // Predicated region
    $region18: #{poet_transformer_forward.1} parent=1 // pred_check
      _
    $region19: #{poet_transformer_forward.1} parent=1 // pred_check_branch
      %59 = sbr.rel (0) target = $region21
    $region20: #{poet_transformer_forward.1} parent=1 // pred_region
      %61 = vsyncadd [#allocation9], 0
      %s62 = sshll.u32 %s4, 4
      %s63 = int_to_ptr.hbm [resolvable:$true] %s62
      %s64 = sshll.u32 [#allocation8], 4
      %s65 = int_to_ptr.vmem [resolvable:$true] %s64
      %70 = dma.hbm_to_vmem [thread:$0]  %s63, 8192, %s65, [#allocation9], 64, 64, 4
    $region21: #{poet_transformer_forward.1} parent=1 // pred_fallthru
      _
    // Predicated region
    $region22: #{poet_transformer_forward.1} parent=1 // pred_check
      _
    $region23: #{poet_transformer_forward.1} parent=1 // pred_check_branch
      %72 = sbr.rel (0) target = $region25
    $region24: #{poet_transformer_forward.1} parent=1 // pred_region
      _
    $region25: #{poet_transformer_forward.1} parent=1 // pred_fallthru
      _
    // Predicated region
    $region26: #{poet_transformer_forward.1} parent=1 // pred_check
      _
    $region27: #{poet_transformer_forward.1} parent=1 // pred_check_branch
      %74 = sbr.rel (0) target = $region29
    $region28: #{poet_transformer_forward.1} parent=1 // pred_region
      _
    $region29: #{poet_transformer_forward.1} parent=1 // pred_fallthru
      _
    // Predicated region
    $region30: #{poet_transformer_forward.1} parent=1 // pred_check
      _
    $region31: #{poet_transformer_forward.1} parent=1 // pred_check_branch
      %76 = sbr.rel (0) target = $region33
    $region32: #{poet_transformer_forward.1} parent=1 // pred_region
      _
    $region33: #{poet_transformer_forward.1} parent=1 // pred_fallthru
      _
    // Predicated region
    $region34: #{poet_transformer_forward.1} parent=1 // pred_check
      _
    $region35: #{poet_transformer_forward.1} parent=1 // pred_check_branch
      %78 = sbr.rel (0) target = $region37
    $region36: #{poet_transformer_forward.1} parent=1 // pred_region
      %80 = dma.done [#allocation3], 12288
    $region37: #{poet_transformer_forward.1} parent=1 // pred_fallthru
      _
    // Predicated region
    $region38: #{poet_transformer_forward.1} parent=1 // pred_check
      _
    $region39: #{poet_transformer_forward.1} parent=1 // pred_check_branch
      %82 = sbr.rel (0) target = $region41
    $region40: #{poet_transformer_forward.1} parent=1 // pred_region
      %84 = dma.done [#allocation6], 4096
    $region41: #{poet_transformer_forward.1} parent=1 // pred_fallthru
      _
    // Predicated region
    $region42: #{poet_transformer_forward.1} parent=1 // pred_check
      _
    $region43: #{poet_transformer_forward.1} parent=1 // pred_check_branch
      %86 = sbr.rel (0) target = $region45
    $region44: #{poet_transformer_forward.1} parent=1 // pred_region
      %88 = dma.done [#allocation6], 8192
    $region45: #{poet_transformer_forward.1} parent=1 // pred_fallthru
      _
    // Predicated region
    $region46: #{poet_transformer_forward.1} parent=1 // pred_check
      _
    $region47: #{poet_transformer_forward.1} parent=1 // pred_check_branch
      %90 = sbr.rel (0) target = $region49
    $region48: #{poet_transformer_forward.1} parent=1 // pred_region
      %92 = dma.done [#allocation9], 8192
    $region49: #{poet_transformer_forward.1} parent=1 // pred_fallthru
      _
    %v94 = vlaneseq
    %v95 = vshrl.u32 %v94, 7
    %v96 = vlaneseq
    %v97 = vand.u32 %v96, 127
    %vm98 = vcmp.le.s32.totalorder %v97, %v95
    %v99 = vld [vmem:[%s0] sm:$0xff]
    %v100 = vld [vmem:[%s0 + $0x8] sm:$0xff]
    %v101 = vld [vmem:[%s5] sm:$0xff]
    %v102 = vld [vmem:[%s5 + $0x8] sm:$0xff]
    %v103 = vld [vmem:[%s5 + $0x10] sm:$0xff]
    %v104 = vpack.c.bf16 %v100, %v99
    %v105 = vld [vmem:[#allocation2] sm:$0xff]
    %v106 = vld [vmem:[#allocation2 + $0x8] sm:$0xf]
    %v107 = vld [vmem:[#allocation2 + $0xc] sm:$0xff]
    %v108 = vld [vmem:[#allocation2 + $0x14] sm:$0xf]
    %v109 = vld [vmem:[#allocation2 + $0x18] sm:$0xff]
    %v110 = vld [vmem:[#allocation2 + $0x20] sm:$0xf]
    %v111 = vld [vmem:[#allocation2 + $0x24] sm:$0xff]
    %v112 = vld [vmem:[#allocation2 + $0x2c] sm:$0xf]
    %v113 = vld [vmem:[#allocation2 + $0x30] sm:$0xff]
    %v114 = vld [vmem:[#allocation2 + $0x38] sm:$0xf]
    %v115 = vld [vmem:[#allocation2 + $0x3c] sm:$0xff]
    %v116 = vld [vmem:[#allocation2 + $0x44] sm:$0xf]
    %v117 = vld [vmem:[#allocation2 + $0x48] sm:$0xff]
    %v118 = vld [vmem:[#allocation2 + $0x50] sm:$0xf]
    %v119 = vld [vmem:[#allocation2 + $0x54] sm:$0xff]
    %v120 = vld [vmem:[#allocation2 + $0x5c] sm:$0xf]
    %v121 = vld [vmem:[#allocation2 + $0x60] sm:$0xff]
    %v122 = vld [vmem:[#allocation2 + $0x68] sm:$0xf]
    %v123 = vld [vmem:[#allocation2 + $0x6c] sm:$0xff]
    %v124 = vld [vmem:[#allocation2 + $0x74] sm:$0xf]
    %v125 = vld [vmem:[#allocation2 + $0x78] sm:$0xff]
    %v126 = vld [vmem:[#allocation2 + $0x80] sm:$0xf]
    %v127 = vld [vmem:[#allocation2 + $0x84] sm:$0xff]
    %v128 = vld [vmem:[#allocation2 + $0x8c] sm:$0xf]
    %v129 = vld [vmem:[#allocation2 + $0x90] sm:$0xff]
    %v130 = vld [vmem:[#allocation2 + $0x98] sm:$0xf]
    %v131 = vld [vmem:[#allocation2 + $0x9c] sm:$0xff]
    %v132 = vld [vmem:[#allocation2 + $0xa4] sm:$0xf]
    %v133 = vld [vmem:[#allocation2 + $0xa8] sm:$0xff]
    %v134 = vld [vmem:[#allocation2 + $0xb0] sm:$0xf]
    %v135 = vld [vmem:[#allocation2 + $0xb4] sm:$0xff]
    %v136 = vld [vmem:[#allocation2 + $0xbc] sm:$0xf]
    %v137 = vperm.slane %v101, 0
    %v138 = vperm.slane %v102, 0
    %v139 = vperm.slane %v103, 0
    %v172 = vunpack.c.l.b16 %v105
    %v173 = vunpack.c.h.b16 %v105
    %v174 = vunpack.c.l.b16 %v106
    %v175 = vunpack.c.l.b16 %v107
    %v176 = vunpack.c.h.b16 %v107
    %v177 = vunpack.c.l.b16 %v108
    %v178 = vunpack.c.l.b16 %v109
    %v179 = vunpack.c.h.b16 %v109
    %v180 = vunpack.c.l.b16 %v110
    %v181 = vunpack.c.l.b16 %v111
    %v182 = vunpack.c.h.b16 %v111
    %v183 = vunpack.c.l.b16 %v112
    %v184 = vunpack.c.l.b16 %v113
    %v185 = vunpack.c.h.b16 %v113
    %v186 = vunpack.c.l.b16 %v114
    %v187 = vunpack.c.l.b16 %v115
    %v188 = vunpack.c.h.b16 %v115
    %v189 = vunpack.c.l.b16 %v116
    %v190 = vunpack.c.l.b16 %v117
    %v191 = vunpack.c.h.b16 %v117
    %v192 = vunpack.c.l.b16 %v118
    %v193 = vunpack.c.l.b16 %v119
    %v194 = vunpack.c.h.b16 %v119
    %v195 = vunpack.c.l.b16 %v120
    %v196 = vunpack.c.l.b16 %v121
    %v197 = vunpack.c.h.b16 %v121
    %v198 = vunpack.c.l.b16 %v122
    %v199 = vunpack.c.l.b16 %v123
    %v200 = vunpack.c.h.b16 %v123
    %v201 = vunpack.c.l.b16 %v124
    %v202 = vunpack.c.l.b16 %v125
    %v203 = vunpack.c.h.b16 %v125
    %v204 = vunpack.c.l.b16 %v126
    %v205 = vunpack.c.l.b16 %v127
    %v206 = vunpack.c.h.b16 %v127
    %v207 = vunpack.c.l.b16 %v128
    %v208 = vunpack.c.l.b16 %v129
    %v209 = vunpack.c.h.b16 %v129
    %v210 = vunpack.c.l.b16 %v130
    %v211 = vunpack.c.l.b16 %v131
    %v212 = vunpack.c.h.b16 %v131
    %v213 = vunpack.c.l.b16 %v132
    %v214 = vunpack.c.l.b16 %v133
    %v215 = vunpack.c.h.b16 %v133
    %v216 = vunpack.c.l.b16 %v134
    %v217 = vunpack.c.l.b16 %v135
    %v218 = vunpack.c.h.b16 %v135
    %v219 = vunpack.c.l.b16 %v136
    %v220 = vpack.c.b16 %v175, %v172
    %v221 = vpack.c.b16 %v176, %v173
    %v222 = vpack.c.b16 %v177, %v174
    %v223 = vpack.c.b16 %v181, %v178
    %v224 = vpack.c.b16 %v182, %v179
    %v225 = vpack.c.b16 %v183, %v180
    %v226 = vpack.c.b16 %v187, %v184
    %v227 = vpack.c.b16 %v188, %v185
    %v228 = vpack.c.b16 %v189, %v186
    %v229 = vpack.c.b16 %v193, %v190
    %v230 = vpack.c.b16 %v194, %v191
    %v231 = vpack.c.b16 %v195, %v192
    %v232 = vpack.c.b16 %v199, %v196
    %v233 = vpack.c.b16 %v200, %v197
    %v234 = vpack.c.b16 %v201, %v198
    %v235 = vpack.c.b16 %v205, %v202
    %v236 = vpack.c.b16 %v206, %v203
    %v237 = vpack.c.b16 %v207, %v204
    %v238 = vpack.c.b16 %v211, %v208
    %v239 = vpack.c.b16 %v212, %v209
    %v240 = vpack.c.b16 %v213, %v210
    %v241 = vpack.c.b16 %v217, %v214
    %v242 = vpack.c.b16 %v218, %v215
    %v243 = vpack.c.b16 %v219, %v216
    %268 = vmatpush.bf16.msra.mxu0 %v241
    %269 = vmatpush.bf16.msra.mxu0 %v238
    %270 = vmatpush.bf16.msra.mxu0 %v235
    %271 = vmatpush.bf16.msra.mxu0 %v232
    %272 = vmatpush.bf16.msra.mxu0 %v229
    %273 = vmatpush.bf16.msra.mxu0 %v226
    %274 = vmatpush.bf16.msra.mxu0 %v223
    %275 = vmatpush.bf16.msra.mxu0 %v220
    %276 = vmatmul.bf16.gmra.mxu0 %v104
    %v277 = vpop.f32.mrf.mxu0
    %v278 = vadd.f32 %v137, %v277
    %v279 = vpop.f32.mrf.mxu0
    %v280 = vadd.f32 %v137, %v279
    %281 = vdwg.mxu0
    %282 = vmatpush.bf16.msra.mxu0 %v242
    %283 = vmatpush.bf16.msra.mxu0 %v239
    %284 = vmatpush.bf16.msra.mxu0 %v236
    %285 = vmatpush.bf16.msra.mxu0 %v233
    %286 = vmatpush.bf16.msra.mxu0 %v230
    %287 = vmatpush.bf16.msra.mxu0 %v227
    %288 = vmatpush.bf16.msra.mxu0 %v224
    %289 = vmatpush.bf16.msra.mxu0 %v221
    %290 = vmatmul.bf16.gmra.mxu0 %v104
    %v291 = vpop.f32.mrf.mxu0
    %v292 = vadd.f32 %v138, %v291
    %v293 = vpop.f32.mrf.mxu0
    %v294 = vadd.f32 %v138, %v293
    %295 = vdwg.mxu0
    %296 = vmatpush.bf16.msra.mxu0 %v243
    %297 = vmatpush.bf16.msra.mxu0 %v240
    %298 = vmatpush.bf16.msra.mxu0 %v237
    %299 = vmatpush.bf16.msra.mxu0 %v234
    %300 = vmatpush.bf16.msra.mxu0 %v231
    %301 = vmatpush.bf16.msra.mxu0 %v228
    %302 = vmatpush.bf16.msra.mxu0 %v225
    %303 = vmatpush.bf16.msra.mxu0 %v222
    %304 = vmatmul.bf16.gmra.mxu0 %v104
    %v305 = vpop.f32.mrf.mxu0
    %v306 = vadd.f32 %v139, %v305
    %v307 = vpop.f32.mrf.mxu0
    %v308 = vadd.f32 %v139, %v307
    %309 = vdwg.mxu0
    %v310 = vpack.c.bf16 %v292, %v278
    %v311 = vpack.c.bf16 %v306, %v306
    %v312 = vpack.c.bf16 %v294, %v280
    %v313 = vpack.c.bf16 %v308, %v308
    %v315 = vrot.slane %v310, 4
    %vm316 = vcmask 261120
    %v318 = vsel %vm316, %v310, 0
    %v321 = vsel %vm316, %v315, 0
    %323 = vmatpush.bf16.xpose.msra.mxu0 0
    %324 = vmatpush.bf16.xpose.msra.mxu0 0
    %325 = vmatpush.bf16.xpose.msra.mxu0 0
    %326 = vmatpush.bf16.xpose.msra.mxu0 0
    %327 = vmatpush.bf16.xpose.msra.mxu0 0
    %328 = vmatpush.bf16.xpose.msra.mxu0 0
    %329 = vmatpush.bf16.xpose.msra.mxu0 0
    %330 = vmatpush.bf16.xpose.msra.mxu0 %v321
    %331 = vmatmul.bf16.gmra.mxu0 %v318
    %v332 = vpop.f32.mrf.mxu0
    %v333 = vadd.f32 0.0, %v332
    %v334 = vpop.f32.mrf.mxu0
    %335 = vdwg.mxu0
    %v337 = vrot.slane %v312, 4
    %v339 = vsel %vm316, %v312, 0
    %v342 = vsel %vm316, %v337, 0
    %344 = vmatpush.bf16.xpose.msra.mxu0 0
    %345 = vmatpush.bf16.xpose.msra.mxu0 0
    %346 = vmatpush.bf16.xpose.msra.mxu0 0
    %347 = vmatpush.bf16.xpose.msra.mxu0 0
    %348 = vmatpush.bf16.xpose.msra.mxu0 0
    %349 = vmatpush.bf16.xpose.msra.mxu0 0
    %350 = vmatpush.bf16.xpose.msra.mxu0 0
    %351 = vmatpush.bf16.xpose.msra.mxu0 %v342
    %352 = vmatmul.bf16.gmra.mxu0 %v339
    %v353 = vpop.f32.mrf.mxu0
    %v354 = vadd.f32 0.0, %v353
    %v355 = vpop.f32.mrf.mxu0
    %356 = vdwg.mxu0
    %v357 = vmul.f32 %v333, 0.17677669
    %v358 = vmul.f32 %v354, 0.17677669
    %v359 = vsel %vm98, 1, 0
    %vm360 = vcmp.eq.s32.totalorder %v359, 1
    %v361 = vsel %vm360, %v357, -inf
    %v362 = vsel %vm360, %v358, -inf
    %vm363 = vcmask 64512
    %v364 = vsel %vm363, %v361, -inf
    %365 = vmax.xlane.f32.xlu0 %v364
    %v366 = vpop.xlane.xlu0 %365
    %v367 = vsel %vm363, %v362, -inf
    %368 = vmax.xlane.f32.xlu0 %v367
    %v369 = vpop.xlane.xlu0 %368
    %v370 = vsub.f32 %v361, %v366
    %v371 = vsub.f32 %v362, %v369
    %v372 = vmul.f32 %v370, 1.442695
    %v373 = vpow.pop %v372
    %v374 = vmul.f32 %v371, 1.442695
    %v375 = vpow.pop %v374
    %v376 = vsel %vm363, %v373, 0.0
    %377 = vadd.xlane.f32.xlu0 %v376
    %v378 = vpop.xlane.xlu0 %377
    %v379 = vsel %vm363, %v375, 0.0
    %380 = vadd.xlane.f32.xlu0 %v379
    %v381 = vpop.xlane.xlu0 %380
    %v382 = vrcp.pop %v378
    %v383 = vrcp.pop %v381
    %v384 = vmul.f32 %v373, %v382
    %v385 = vmul.f32 %v375, %v383
    %v386 = vpack.c.bf16 %v384, %v384
    %v387 = vpack.c.bf16 %v385, %v385
    %v389 = vsel %vm363, %v386, 0
    %vm391 = vcmask 1043456
    %v393 = vsel %vm391, %v311, 0
    %395 = vmatpush.bf16.msra.mxu0 0
    %396 = vmatpush.bf16.msra.mxu0 0
    %397 = vmatpush.bf16.msra.mxu0 0
    %398 = vmatpush.bf16.msra.mxu0 0
    %399 = vmatpush.bf16.msra.mxu0 0
    %400 = vmatpush.bf16.msra.mxu0 0
    %401 = vmatpush.bf16.msra.mxu0 0
    %402 = vmatpush.bf16.msra.mxu0 %v393
    %403 = vmatmul.bf16.gmra.mxu0 %v389
    %v404 = vpop.f32.mrf.mxu0
    %v405 = vadd.f32 0.0, %v404
    %v406 = vpop.f32.mrf.mxu0
    %407 = vdwg.mxu0
    %v409 = vsel %vm363, %v387, 0
    %v412 = vsel %vm391, %v313, 0
    %414 = vmatpush.bf16.msra.mxu0 0
    %415 = vmatpush.bf16.msra.mxu0 0
    %416 = vmatpush.bf16.msra.mxu0 0
    %417 = vmatpush.bf16.msra.mxu0 0
    %418 = vmatpush.bf16.msra.mxu0 0
    %419 = vmatpush.bf16.msra.mxu0 0
    %420 = vmatpush.bf16.msra.mxu0 0
    %421 = vmatpush.bf16.msra.mxu0 %v412
    %422 = vmatmul.bf16.gmra.mxu0 %v409
    %v423 = vpop.f32.mrf.mxu0
    %v424 = vadd.f32 0.0, %v423
    %v425 = vpop.f32.mrf.mxu0
    %426 = vdwg.mxu0
    %427 = vrot.lane.b32.xlu0 %v310, 96
    %v428 = vpop.permute.xlu0 %427
    %v429 = vrot.slane %v428, 4
    %v430 = vunpack.c.l.b16 %v310
    %v431 = vpack.c.b16 %v430, %v430
    %432 = vrot.lane.b32.xlu0 %v431, 96
    %v433 = vpop.permute.xlu0 %432
    %v435 = vsel %vm316, %v433, 0
    %v438 = vsel %vm316, %v429, 0
    %440 = vmatpush.bf16.xpose.msra.mxu0 0
    %441 = vmatpush.bf16.xpose.msra.mxu0 0
    %442 = vmatpush.bf16.xpose.msra.mxu0 0
    %443 = vmatpush.bf16.xpose.msra.mxu0 0
    %444 = vmatpush.bf16.xpose.msra.mxu0 0
    %445 = vmatpush.bf16.xpose.msra.mxu0 0
    %446 = vmatpush.bf16.xpose.msra.mxu0 0
    %447 = vmatpush.bf16.xpose.msra.mxu0 %v438
    %448 = vmatmul.bf16.gmra.mxu0 %v435
    %v449 = vpop.f32.mrf.mxu0
    %v450 = vadd.f32 0.0, %v449
    %v451 = vpop.f32.mrf.mxu0
    %452 = vdwg.mxu0
    %453 = vrot.lane.b32.xlu0 %v312, 96
    %v454 = vpop.permute.xlu0 %453
    %v455 = vrot.slane %v454, 4
    %v456 = vunpack.c.l.b16 %v312
    %v457 = vpack.c.b16 %v456, %v456
    %458 = vrot.lane.b32.xlu0 %v457, 96
    %v459 = vpop.permute.xlu0 %458
    %v461 = vsel %vm316, %v459, 0
    %v464 = vsel %vm316, %v455, 0
    %466 = vmatpush.bf16.xpose.msra.mxu0 0
    %467 = vmatpush.bf16.xpose.msra.mxu0 0
    %468 = vmatpush.bf16.xpose.msra.mxu0 0
    %469 = vmatpush.bf16.xpose.msra.mxu0 0
    %470 = vmatpush.bf16.xpose.msra.mxu0 0
    %471 = vmatpush.bf16.xpose.msra.mxu0 0
    %472 = vmatpush.bf16.xpose.msra.mxu0 0
    %473 = vmatpush.bf16.xpose.msra.mxu0 %v464
    %474 = vmatmul.bf16.gmra.mxu0 %v461
    %v475 = vpop.f32.mrf.mxu0
    %v476 = vadd.f32 0.0, %v475
    %v477 = vpop.f32.mrf.mxu0
    %478 = vdwg.mxu0
    %v479 = vmul.f32 %v450, 0.17677669
    %v480 = vmul.f32 %v476, 0.17677669
    %v481 = vsel %vm360, %v479, -inf
    %v482 = vsel %vm360, %v480, -inf
    %v483 = vsel %vm363, %v481, -inf
    %484 = vmax.xlane.f32.xlu0 %v483
    %v485 = vpop.xlane.xlu0 %484
    %v486 = vsel %vm363, %v482, -inf
    %487 = vmax.xlane.f32.xlu0 %v486
    %v488 = vpop.xlane.xlu0 %487
    %v489 = vsub.f32 %v481, %v485
    %v490 = vsub.f32 %v482, %v488
    %v491 = vmul.f32 %v489, 1.442695
    %v492 = vpow.pop %v491
    %v493 = vmul.f32 %v490, 1.442695
    %v494 = vpow.pop %v493
    %v495 = vsel %vm363, %v492, 0.0
    %496 = vadd.xlane.f32.xlu0 %v495
    %v497 = vpop.xlane.xlu0 %496
    %v498 = vsel %vm363, %v494, 0.0
    %499 = vadd.xlane.f32.xlu0 %v498
    %v500 = vpop.xlane.xlu0 %499
    %v501 = vrcp.pop %v497
    %v502 = vrcp.pop %v500
    %v503 = vmul.f32 %v492, %v501
    %v504 = vmul.f32 %v494, %v502
    %v505 = vpack.c.bf16 %v503, %v503
    %v506 = vpack.c.bf16 %v504, %v504
    %v508 = vunpack.c.l.b16 %v311
    %v509 = vpack.c.b16 %v508, %v508
    %510 = vrot.lane.b32.xlu0 %v509, 96
    %v511 = vpop.permute.xlu0 %510
    %v513 = vsel %vm363, %v505, 0
    %v516 = vsel %vm391, %v511, 0
    %518 = vmatpush.bf16.msra.mxu0 0
    %519 = vmatpush.bf16.msra.mxu0 0
    %520 = vmatpush.bf16.msra.mxu0 0
    %521 = vmatpush.bf16.msra.mxu0 0
    %522 = vmatpush.bf16.msra.mxu0 0
    %523 = vmatpush.bf16.msra.mxu0 0
    %524 = vmatpush.bf16.msra.mxu0 0
    %525 = vmatpush.bf16.msra.mxu0 %v516
    %526 = vmatmul.bf16.gmra.mxu0 %v513
    %v527 = vpop.f32.mrf.mxu0
    %v528 = vadd.f32 0.0, %v527
    %v529 = vpop.f32.mrf.mxu0
    %530 = vdwg.mxu0
    %v532 = vunpack.c.l.b16 %v313
    %v533 = vpack.c.b16 %v532, %v532
    %534 = vrot.lane.b32.xlu0 %v533, 96
    %v535 = vpop.permute.xlu0 %534
    %v537 = vsel %vm363, %v506, 0
    %v540 = vsel %vm391, %v535, 0
    %542 = vmatpush.bf16.msra.mxu0 0
    %543 = vmatpush.bf16.msra.mxu0 0
    %544 = vmatpush.bf16.msra.mxu0 0
    %545 = vmatpush.bf16.msra.mxu0 0
    %546 = vmatpush.bf16.msra.mxu0 0
    %547 = vmatpush.bf16.msra.mxu0 0
    %548 = vmatpush.bf16.msra.mxu0 0
    %549 = vmatpush.bf16.msra.mxu0 %v540
    %550 = vmatmul.bf16.gmra.mxu0 %v537
    %v551 = vpop.f32.mrf.mxu0
    %v552 = vadd.f32 0.0, %v551
    %v553 = vpop.f32.mrf.mxu0
    %554 = vdwg.mxu0
    %555 = vrot.lane.b32.xlu0 %v310, 64
    %v556 = vpop.permute.xlu0 %555
    %v557 = vrot.slane %v556, 4
    %558 = vrot.lane.b32.xlu0 %v431, 64
    %v559 = vpop.permute.xlu0 %558
    %v561 = vsel %vm316, %v559, 0
    %v564 = vsel %vm316, %v557, 0
    %566 = vmatpush.bf16.xpose.msra.mxu0 0
    %567 = vmatpush.bf16.xpose.msra.mxu0 0
    %568 = vmatpush.bf16.xpose.msra.mxu0 0
    %569 = vmatpush.bf16.xpose.msra.mxu0 0
    %570 = vmatpush.bf16.xpose.msra.mxu0 0
    %571 = vmatpush.bf16.xpose.msra.mxu0 0
    %572 = vmatpush.bf16.xpose.msra.mxu0 0
    %573 = vmatpush.bf16.xpose.msra.mxu0 %v564
    %574 = vmatmul.bf16.gmra.mxu0 %v561
    %v575 = vpop.f32.mrf.mxu0
    %v576 = vadd.f32 0.0, %v575
    %v577 = vpop.f32.mrf.mxu0
    %578 = vdwg.mxu0
    %579 = vrot.lane.b32.xlu0 %v312, 64
    %v580 = vpop.permute.xlu0 %579
    %v581 = vrot.slane %v580, 4
    %582 = vrot.lane.b32.xlu0 %v457, 64
    %v583 = vpop.permute.xlu0 %582
    %v585 = vsel %vm316, %v583, 0
    %v588 = vsel %vm316, %v581, 0
    %590 = vmatpush.bf16.xpose.msra.mxu0 0
    %591 = vmatpush.bf16.xpose.msra.mxu0 0
    %592 = vmatpush.bf16.xpose.msra.mxu0 0
    %593 = vmatpush.bf16.xpose.msra.mxu0 0
    %594 = vmatpush.bf16.xpose.msra.mxu0 0
    %595 = vmatpush.bf16.xpose.msra.mxu0 0
    %596 = vmatpush.bf16.xpose.msra.mxu0 0
    %597 = vmatpush.bf16.xpose.msra.mxu0 %v588
    %598 = vmatmul.bf16.gmra.mxu0 %v585
    %v599 = vpop.f32.mrf.mxu0
    %v600 = vadd.f32 0.0, %v599
    %v601 = vpop.f32.mrf.mxu0
    %602 = vdwg.mxu0
    %v603 = vmul.f32 %v576, 0.17677669
    %v604 = vmul.f32 %v600, 0.17677669
    %v605 = vsel %vm360, %v603, -inf
    %v606 = vsel %vm360, %v604, -inf
    %v607 = vsel %vm363, %v605, -inf
    %608 = vmax.xlane.f32.xlu0 %v607
    %v609 = vpop.xlane.xlu0 %608
    %v610 = vsel %vm363, %v606, -inf
    %611 = vmax.xlane.f32.xlu0 %v610
    %v612 = vpop.xlane.xlu0 %611
    %v613 = vsub.f32 %v605, %v609
    %v614 = vsub.f32 %v606, %v612
    %v615 = vmul.f32 %v613, 1.442695
    %v616 = vpow.pop %v615
    %v617 = vmul.f32 %v614, 1.442695
    %v618 = vpow.pop %v617
    %v619 = vsel %vm363, %v616, 0.0
    %620 = vadd.xlane.f32.xlu0 %v619
    %v621 = vpop.xlane.xlu0 %620
    %v622 = vsel %vm363, %v618, 0.0
    %623 = vadd.xlane.f32.xlu0 %v622
    %v624 = vpop.xlane.xlu0 %623
    %v625 = vrcp.pop %v621
    %v626 = vrcp.pop %v624
    %v627 = vmul.f32 %v616, %v625
    %v628 = vmul.f32 %v618, %v626
    %v629 = vpack.c.bf16 %v627, %v627
    %v630 = vpack.c.bf16 %v628, %v628
    %631 = vrot.lane.b32.xlu0 %v509, 64
    %v632 = vpop.permute.xlu0 %631
    %v634 = vsel %vm363, %v629, 0
    %v637 = vsel %vm391, %v632, 0
    %639 = vmatpush.bf16.msra.mxu0 0
    %640 = vmatpush.bf16.msra.mxu0 0
    %641 = vmatpush.bf16.msra.mxu0 0
    %642 = vmatpush.bf16.msra.mxu0 0
    %643 = vmatpush.bf16.msra.mxu0 0
    %644 = vmatpush.bf16.msra.mxu0 0
    %645 = vmatpush.bf16.msra.mxu0 0
    %646 = vmatpush.bf16.msra.mxu0 %v637
    %647 = vmatmul.bf16.gmra.mxu0 %v634
    %v648 = vpop.f32.mrf.mxu0
    %v649 = vadd.f32 0.0, %v648
    %v650 = vpop.f32.mrf.mxu0
    %651 = vdwg.mxu0
    %652 = vrot.lane.b32.xlu0 %v533, 64
    %v653 = vpop.permute.xlu0 %652
    %v655 = vsel %vm363, %v630, 0
    %v658 = vsel %vm391, %v653, 0
    %660 = vmatpush.bf16.msra.mxu0 0
    %661 = vmatpush.bf16.msra.mxu0 0
    %662 = vmatpush.bf16.msra.mxu0 0
    %663 = vmatpush.bf16.msra.mxu0 0
    %664 = vmatpush.bf16.msra.mxu0 0
    %665 = vmatpush.bf16.msra.mxu0 0
    %666 = vmatpush.bf16.msra.mxu0 0
    %667 = vmatpush.bf16.msra.mxu0 %v658
    %668 = vmatmul.bf16.gmra.mxu0 %v655
    %v669 = vpop.f32.mrf.mxu0
    %v670 = vadd.f32 0.0, %v669
    %v671 = vpop.f32.mrf.mxu0
    %672 = vdwg.mxu0
    %673 = vrot.lane.b32.xlu0 %v310, 32
    %v674 = vpop.permute.xlu0 %673
    %v675 = vrot.slane %v674, 4
    %676 = vrot.lane.b32.xlu0 %v431, 32
    %v677 = vpop.permute.xlu0 %676
    %v679 = vsel %vm316, %v677, 0
    %v682 = vsel %vm316, %v675, 0
    %684 = vmatpush.bf16.xpose.msra.mxu0 0
    %685 = vmatpush.bf16.xpose.msra.mxu0 0
    %686 = vmatpush.bf16.xpose.msra.mxu0 0
    %687 = vmatpush.bf16.xpose.msra.mxu0 0
    %688 = vmatpush.bf16.xpose.msra.mxu0 0
    %689 = vmatpush.bf16.xpose.msra.mxu0 0
    %690 = vmatpush.bf16.xpose.msra.mxu0 0
    %691 = vmatpush.bf16.xpose.msra.mxu0 %v682
    %692 = vmatmul.bf16.gmra.mxu0 %v679
    %v693 = vpop.f32.mrf.mxu0
    %v694 = vadd.f32 0.0, %v693
    %v695 = vpop.f32.mrf.mxu0
    %696 = vdwg.mxu0
    %697 = vrot.lane.b32.xlu0 %v312, 32
    %v698 = vpop.permute.xlu0 %697
    %v699 = vrot.slane %v698, 4
    %700 = vrot.lane.b32.xlu0 %v457, 32
    %v701 = vpop.permute.xlu0 %700
    %v703 = vsel %vm316, %v701, 0
    %v706 = vsel %vm316, %v699, 0
    %708 = vmatpush.bf16.xpose.msra.mxu0 0
    %709 = vmatpush.bf16.xpose.msra.mxu0 0
    %710 = vmatpush.bf16.xpose.msra.mxu0 0
    %711 = vmatpush.bf16.xpose.msra.mxu0 0
    %712 = vmatpush.bf16.xpose.msra.mxu0 0
    %713 = vmatpush.bf16.xpose.msra.mxu0 0
    %714 = vmatpush.bf16.xpose.msra.mxu0 0
    %715 = vmatpush.bf16.xpose.msra.mxu0 %v706
    %716 = vmatmul.bf16.gmra.mxu0 %v703
    %v717 = vpop.f32.mrf.mxu0
    %v718 = vadd.f32 0.0, %v717
    %v719 = vpop.f32.mrf.mxu0
    %720 = vdwg.mxu0
    %v721 = vmul.f32 %v694, 0.17677669
    %v722 = vmul.f32 %v718, 0.17677669
    %v723 = vsel %vm360, %v721, -inf
    %v724 = vsel %vm360, %v722, -inf
    %v725 = vsel %vm363, %v723, -inf
    %726 = vmax.xlane.f32.xlu0 %v725
    %v727 = vpop.xlane.xlu0 %726
    %v728 = vsel %vm363, %v724, -inf
    %729 = vmax.xlane.f32.xlu0 %v728
    %v730 = vpop.xlane.xlu0 %729
    %v731 = vsub.f32 %v723, %v727
    %v732 = vsub.f32 %v724, %v730
    %v733 = vmul.f32 %v731, 1.442695
    %v734 = vpow.pop %v733
    %v735 = vmul.f32 %v732, 1.442695
    %v736 = vpow.pop %v735
    %v737 = vsel %vm363, %v734, 0.0
    %738 = vadd.xlane.f32.xlu0 %v737
    %v739 = vpop.xlane.xlu0 %738
    %v740 = vsel %vm363, %v736, 0.0
    %741 = vadd.xlane.f32.xlu0 %v740
    %v742 = vpop.xlane.xlu0 %741
    %v743 = vrcp.pop %v739
    %v744 = vrcp.pop %v742
    %v745 = vmul.f32 %v734, %v743
    %v746 = vmul.f32 %v736, %v744
    %v747 = vpack.c.bf16 %v745, %v745
    %v748 = vpack.c.bf16 %v746, %v746
    %749 = vrot.lane.b32.xlu0 %v509, 32
    %v750 = vpop.permute.xlu0 %749
    %v752 = vsel %vm363, %v747, 0
    %v755 = vsel %vm391, %v750, 0
    %757 = vmatpush.bf16.msra.mxu0 0
    %758 = vmatpush.bf16.msra.mxu0 0
    %759 = vmatpush.bf16.msra.mxu0 0
    %760 = vmatpush.bf16.msra.mxu0 0
    %761 = vmatpush.bf16.msra.mxu0 0
    %762 = vmatpush.bf16.msra.mxu0 0
    %763 = vmatpush.bf16.msra.mxu0 0
    %764 = vmatpush.bf16.msra.mxu0 %v755
    %765 = vmatmul.bf16.gmra.mxu0 %v752
    %v766 = vpop.f32.mrf.mxu0
    %v767 = vadd.f32 0.0, %v766
    %v768 = vpop.f32.mrf.mxu0
    %769 = vdwg.mxu0
    %770 = vrot.lane.b32.xlu0 %v533, 32
    %v771 = vpop.permute.xlu0 %770
    %v773 = vsel %vm363, %v748, 0
    %v776 = vsel %vm391, %v771, 0
    %778 = vmatpush.bf16.msra.mxu0 0
    %779 = vmatpush.bf16.msra.mxu0 0
    %780 = vmatpush.bf16.msra.mxu0 0
    %781 = vmatpush.bf16.msra.mxu0 0
    %782 = vmatpush.bf16.msra.mxu0 0
    %783 = vmatpush.bf16.msra.mxu0 0
    %784 = vmatpush.bf16.msra.mxu0 0
    %785 = vmatpush.bf16.msra.mxu0 %v776
    %786 = vmatmul.bf16.gmra.mxu0 %v773
    %v787 = vpop.f32.mrf.mxu0
    %v788 = vadd.f32 0.0, %v787
    %v789 = vpop.f32.mrf.mxu0
    %790 = vdwg.mxu0
    %793 = vrot.lane.b32.xlu0 %v528, 32
    %v794 = vpop.permute.xlu0 %793
    %795 = vrot.lane.b32.xlu0 %v552, 32
    %v796 = vpop.permute.xlu0 %795
    %801 = vrot.lane.b32.xlu0 %v649, 64
    %v802 = vpop.permute.xlu0 %801
    %803 = vrot.lane.b32.xlu0 %v670, 64
    %v804 = vpop.permute.xlu0 %803
    %809 = vrot.lane.b32.xlu0 %v767, 96
    %v810 = vpop.permute.xlu0 %809
    %811 = vrot.lane.b32.xlu0 %v788, 96
    %v812 = vpop.permute.xlu0 %811
    %v815 = vsel %vm316, %v405, %v794
    %v816 = vsel %vm316, %v424, %v796
    %vm817 = vcmask 523264
    %v818 = vsel %vm817, %v815, %v802
    %v819 = vsel %vm817, %v816, %v804
    %vm820 = vcmask 785408
    %v821 = vsel %vm820, %v818, %v810
    %v822 = vsel %vm820, %v819, %v812
    %v823 = vpack.c.bf16 %v822, %v821
    %v824 = vld [vmem:[#allocation5] sm:$0xf]
    %v825 = vld [vmem:[#allocation5 + $0x4] sm:$0xf]
    %v826 = vld [vmem:[#allocation5 + $0x8] sm:$0xf]
    %v827 = vld [vmem:[#allocation5 + $0xc] sm:$0xf]
    %v828 = vld [vmem:[#allocation5 + $0x10] sm:$0xf]
    %v829 = vld [vmem:[#allocation5 + $0x14] sm:$0xf]
    %v830 = vld [vmem:[#allocation5 + $0x18] sm:$0xf]
    %v831 = vld [vmem:[#allocation5 + $0x1c] sm:$0xf]
    %v832 = vld [vmem:[#allocation5 + $0x20] sm:$0xf]
    %v833 = vld [vmem:[#allocation5 + $0x24] sm:$0xf]
    %v834 = vld [vmem:[#allocation5 + $0x28] sm:$0xf]
    %v835 = vld [vmem:[#allocation5 + $0x2c] sm:$0xf]
    %v836 = vld [vmem:[#allocation5 + $0x30] sm:$0xf]
    %v837 = vld [vmem:[#allocation5 + $0x34] sm:$0xf]
    %v838 = vld [vmem:[#allocation5 + $0x38] sm:$0xf]
    %v839 = vld [vmem:[#allocation5 + $0x3c] sm:$0xf]
    %v840 = vperm.slane %v101, 1
    %v857 = vunpack.c.l.b16 %v824
    %v858 = vunpack.c.l.b16 %v825
    %v859 = vunpack.c.l.b16 %v826
    %v860 = vunpack.c.l.b16 %v827
    %v861 = vunpack.c.l.b16 %v828
    %v862 = vunpack.c.l.b16 %v829
    %v863 = vunpack.c.l.b16 %v830
    %v864 = vunpack.c.l.b16 %v831
    %v865 = vunpack.c.l.b16 %v832
    %v866 = vunpack.c.l.b16 %v833
    %v867 = vunpack.c.l.b16 %v834
    %v868 = vunpack.c.l.b16 %v835
    %v869 = vunpack.c.l.b16 %v836
    %v870 = vunpack.c.l.b16 %v837
    %v871 = vunpack.c.l.b16 %v838
    %v872 = vunpack.c.l.b16 %v839
    %v873 = vpack.c.b16 %v858, %v857
    %v874 = vpack.c.b16 %v860, %v859
    %v875 = vpack.c.b16 %v862, %v861
    %v876 = vpack.c.b16 %v864, %v863
    %v877 = vpack.c.b16 %v866, %v865
    %v878 = vpack.c.b16 %v868, %v867
    %v879 = vpack.c.b16 %v870, %v869
    %v880 = vpack.c.b16 %v872, %v871
    %889 = vmatpush.bf16.msra.mxu0 %v880
    %890 = vmatpush.bf16.msra.mxu0 %v879
    %891 = vmatpush.bf16.msra.mxu0 %v878
    %892 = vmatpush.bf16.msra.mxu0 %v877
    %893 = vmatpush.bf16.msra.mxu0 %v876
    %894 = vmatpush.bf16.msra.mxu0 %v875
    %895 = vmatpush.bf16.msra.mxu0 %v874
    %896 = vmatpush.bf16.msra.mxu0 %v873
    %897 = vmatmul.bf16.gmra.mxu0 %v823
    %v898 = vpop.f32.mrf.mxu0
    %v899 = vadd.f32 %v840, %v898
    %v900 = vpop.f32.mrf.mxu0
    %v901 = vadd.f32 %v840, %v900
    %902 = vdwg.mxu0
    %v903 = vadd.f32 %v99, %v899
    %v904 = vadd.f32 %v100, %v901
    %905 = vadd.xlane.f32.xlu0 %v903
    %v906 = vpop.xlane.xlu0 %905
    %907 = vadd.xlane.f32.xlu0 %v904
    %v908 = vpop.xlane.xlu0 %907
    %v909 = vrcp.pop 128.0
    %v910 = vmul.f32 128.0, %v909
    %v911 = vsub.f32 1.0, %v910
    %v912 = vmul.f32 %v909, %v911
    %v913 = vadd.f32 %v909, %v912
    %vm914 = vweird.f32 %v909
    %v915 = vsel %vm914, %v909, %v913
    %v916 = vmul.f32 %v906, %v915
    %v917 = vmul.f32 %v908, %v915
    %v918 = vsub.f32 %v903, %v916
    %v919 = vsub.f32 %v904, %v917
    %v920 = vmul.f32 %v918, %v918
    %v921 = vmul.f32 %v919, %v919
    %922 = vadd.xlane.f32.xlu0 %v920
    %v923 = vpop.xlane.xlu0 %922
    %924 = vadd.xlane.f32.xlu0 %v921
    %v925 = vpop.xlane.xlu0 %924
    %v926 = vmul.f32 %v923, %v915
    %v927 = vmul.f32 %v925, %v915
    %v928 = vadd.f32 %v926, 1e-05
    %v929 = vadd.f32 %v927, 1e-05
    %v930 = vrsqrt.pop %v928
    %v931 = vmul.f32 %v930, %v928
    %v932 = vmul.f32 %v931, %v930
    %v933 = vmul.f32 0.5, %v932
    %v934 = vsub.f32 1.5, %v933
    %v935 = vmul.f32 %v930, %v934
    %vm936 = vweird.f32 %v928
    %vm937 = vweird.f32 %v930
    %vm938 = vmor %vm936, %vm937
    %v939 = vsel %vm938, %v930, %v935
    %v940 = vrsqrt.pop %v929
    %v941 = vmul.f32 %v940, %v929
    %v942 = vmul.f32 %v941, %v940
    %v943 = vmul.f32 0.5, %v942
    %v944 = vsub.f32 1.5, %v943
    %v945 = vmul.f32 %v940, %v944
    %vm946 = vweird.f32 %v929
    %vm947 = vweird.f32 %v940
    %vm948 = vmor %vm946, %vm947
    %v949 = vsel %vm948, %v940, %v945
    %v950 = vmul.f32 %v918, %v939
    %v951 = vmul.f32 %v919, %v949
    %v952 = vperm.slane %v102, 1
    %v953 = vmul.f32 %v950, %v952
    %v954 = vmul.f32 %v951, %v952
    %v955 = vperm.slane %v103, 1
    %v956 = vadd.f32 %v953, %v955
    %v957 = vadd.f32 %v954, %v955
    %v958 = vpack.c.bf16 %v957, %v956
    %v959 = vld [vmem:[#allocation7] sm:$0xff]
    %v960 = vld [vmem:[#allocation7 + $0x8] sm:$0xff]
    %v961 = vld [vmem:[#allocation7 + $0x10] sm:$0xff]
    %v962 = vld [vmem:[#allocation7 + $0x18] sm:$0xff]
    %v963 = vld [vmem:[#allocation7 + $0x20] sm:$0xff]
    %v964 = vld [vmem:[#allocation7 + $0x28] sm:$0xff]
    %v965 = vld [vmem:[#allocation7 + $0x30] sm:$0xff]
    %v966 = vld [vmem:[#allocation7 + $0x38] sm:$0xff]
    %v967 = vld [vmem:[#allocation7 + $0x40] sm:$0xff]
    %v968 = vld [vmem:[#allocation7 + $0x48] sm:$0xff]
    %v969 = vld [vmem:[#allocation7 + $0x50] sm:$0xff]
    %v970 = vld [vmem:[#allocation7 + $0x58] sm:$0xff]
    %v971 = vld [vmem:[#allocation7 + $0x60] sm:$0xff]
    %v972 = vld [vmem:[#allocation7 + $0x68] sm:$0xff]
    %v973 = vld [vmem:[#allocation7 + $0x70] sm:$0xff]
    %v974 = vld [vmem:[#allocation7 + $0x78] sm:$0xff]
    %v975 = vperm.slane %v101, 2
    %v976 = vperm.slane %v102, 2
    %v993 = vunpack.c.l.b16 %v959
    %v994 = vunpack.c.h.b16 %v959
    %v995 = vunpack.c.l.b16 %v960
    %v996 = vunpack.c.h.b16 %v960
    %v997 = vunpack.c.l.b16 %v961
    %v998 = vunpack.c.h.b16 %v961
    %v999 = vunpack.c.l.b16 %v962
    %v1000 = vunpack.c.h.b16 %v962
    %v1001 = vunpack.c.l.b16 %v963
    %v1002 = vunpack.c.h.b16 %v963
    %v1003 = vunpack.c.l.b16 %v964
    %v1004 = vunpack.c.h.b16 %v964
    %v1005 = vunpack.c.l.b16 %v965
    %v1006 = vunpack.c.h.b16 %v965
    %v1007 = vunpack.c.l.b16 %v966
    %v1008 = vunpack.c.h.b16 %v966
    %v1009 = vunpack.c.l.b16 %v967
    %v1010 = vunpack.c.h.b16 %v967
    %v1011 = vunpack.c.l.b16 %v968
    %v1012 = vunpack.c.h.b16 %v968
    %v1013 = vunpack.c.l.b16 %v969
    %v1014 = vunpack.c.h.b16 %v969
    %v1015 = vunpack.c.l.b16 %v970
    %v1016 = vunpack.c.h.b16 %v970
    %v1017 = vunpack.c.l.b16 %v971
    %v1018 = vunpack.c.h.b16 %v971
    %v1019 = vunpack.c.l.b16 %v972
    %v1020 = vunpack.c.h.b16 %v972
    %v1021 = vunpack.c.l.b16 %v973
    %v1022 = vunpack.c.h.b16 %v973
    %v1023 = vunpack.c.l.b16 %v974
    %v1024 = vunpack.c.h.b16 %v974
    %v1025 = vpack.c.b16 %v995, %v993
    %v1026 = vpack.c.b16 %v996, %v994
    %v1027 = vpack.c.b16 %v999, %v997
    %v1028 = vpack.c.b16 %v1000, %v998
    %v1029 = vpack.c.b16 %v1003, %v1001
    %v1030 = vpack.c.b16 %v1004, %v1002
    %v1031 = vpack.c.b16 %v1007, %v1005
    %v1032 = vpack.c.b16 %v1008, %v1006
    %v1033 = vpack.c.b16 %v1011, %v1009
    %v1034 = vpack.c.b16 %v1012, %v1010
    %v1035 = vpack.c.b16 %v1015, %v1013
    %v1036 = vpack.c.b16 %v1016, %v1014
    %v1037 = vpack.c.b16 %v1019, %v1017
    %v1038 = vpack.c.b16 %v1020, %v1018
    %v1039 = vpack.c.b16 %v1023, %v1021
    %v1040 = vpack.c.b16 %v1024, %v1022
    %1057 = vmatpush.bf16.msra.mxu0 %v1039
    %1058 = vmatpush.bf16.msra.mxu0 %v1037
    %1059 = vmatpush.bf16.msra.mxu0 %v1035
    %1060 = vmatpush.bf16.msra.mxu0 %v1033
    %1061 = vmatpush.bf16.msra.mxu0 %v1031
    %1062 = vmatpush.bf16.msra.mxu0 %v1029
    %1063 = vmatpush.bf16.msra.mxu0 %v1027
    %1064 = vmatpush.bf16.msra.mxu0 %v1025
    %1065 = vmatmul.bf16.gmra.mxu0 %v958
    %v1066 = vpop.f32.mrf.mxu0
    %v1067 = vadd.f32 %v975, %v1066
    %v1068 = vpop.f32.mrf.mxu0
    %v1069 = vadd.f32 %v975, %v1068
    %1070 = vdwg.mxu0
    %1071 = vmatpush.bf16.msra.mxu0 %v1040
    %1072 = vmatpush.bf16.msra.mxu0 %v1038
    %1073 = vmatpush.bf16.msra.mxu0 %v1036
    %1074 = vmatpush.bf16.msra.mxu0 %v1034
    %1075 = vmatpush.bf16.msra.mxu0 %v1032
    %1076 = vmatpush.bf16.msra.mxu0 %v1030
    %1077 = vmatpush.bf16.msra.mxu0 %v1028
    %1078 = vmatpush.bf16.msra.mxu0 %v1026
    %1079 = vmatmul.bf16.gmra.mxu0 %v958
    %v1080 = vpop.f32.mrf.mxu0
    %v1081 = vadd.f32 %v976, %v1080
    %v1082 = vpop.f32.mrf.mxu0
    %v1083 = vadd.f32 %v976, %v1082
    %1084 = vdwg.mxu0
    %v1085 = vmax.f32 %v1067, 0.0
    %v1086 = vmax.f32 %v1081, 0.0
    %v1087 = vmax.f32 %v1069, 0.0
    %v1088 = vmax.f32 %v1083, 0.0
    %v1089 = vpack.c.bf16 %v1087, %v1085
    %v1090 = vpack.c.bf16 %v1088, %v1086
    %v1091 = vld [vmem:[#allocation8] sm:$0xf]
    %v1092 = vld [vmem:[#allocation8 + $0x4] sm:$0xf]
    %v1093 = vld [vmem:[#allocation8 + $0x8] sm:$0xf]
    %v1094 = vld [vmem:[#allocation8 + $0xc] sm:$0xf]
    %v1095 = vld [vmem:[#allocation8 + $0x10] sm:$0xf]
    %v1096 = vld [vmem:[#allocation8 + $0x14] sm:$0xf]
    %v1097 = vld [vmem:[#allocation8 + $0x18] sm:$0xf]
    %v1098 = vld [vmem:[#allocation8 + $0x1c] sm:$0xf]
    %v1099 = vld [vmem:[#allocation8 + $0x20] sm:$0xf]
    %v1100 = vld [vmem:[#allocation8 + $0x24] sm:$0xf]
    %v1101 = vld [vmem:[#allocation8 + $0x28] sm:$0xf]
    %v1102 = vld [vmem:[#allocation8 + $0x2c] sm:$0xf]
    %v1103 = vld [vmem:[#allocation8 + $0x30] sm:$0xf]
    %v1104 = vld [vmem:[#allocation8 + $0x34] sm:$0xf]
    %v1105 = vld [vmem:[#allocation8 + $0x38] sm:$0xf]
    %v1106 = vld [vmem:[#allocation8 + $0x3c] sm:$0xf]
    %v1107 = vld [vmem:[#allocation8 + $0x40] sm:$0xf]
    %v1108 = vld [vmem:[#allocation8 + $0x44] sm:$0xf]
    %v1109 = vld [vmem:[#allocation8 + $0x48] sm:$0xf]
    %v1110 = vld [vmem:[#allocation8 + $0x4c] sm:$0xf]
    %v1111 = vld [vmem:[#allocation8 + $0x50] sm:$0xf]
    %v1112 = vld [vmem:[#allocation8 + $0x54] sm:$0xf]
    %v1113 = vld [vmem:[#allocation8 + $0x58] sm:$0xf]
    %v1114 = vld [vmem:[#allocation8 + $0x5c] sm:$0xf]
    %v1115 = vld [vmem:[#allocation8 + $0x60] sm:$0xf]
    %v1116 = vld [vmem:[#allocation8 + $0x64] sm:$0xf]
    %v1117 = vld [vmem:[#allocation8 + $0x68] sm:$0xf]
    %v1118 = vld [vmem:[#allocation8 + $0x6c] sm:$0xf]
    %v1119 = vld [vmem:[#allocation8 + $0x70] sm:$0xf]
    %v1120 = vld [vmem:[#allocation8 + $0x74] sm:$0xf]
    %v1121 = vld [vmem:[#allocation8 + $0x78] sm:$0xf]
    %v1122 = vld [vmem:[#allocation8 + $0x7c] sm:$0xf]
    %v1155 = vunpack.c.l.b16 %v1091
    %v1156 = vunpack.c.l.b16 %v1092
    %v1157 = vunpack.c.l.b16 %v1093
    %v1158 = vunpack.c.l.b16 %v1094
    %v1159 = vunpack.c.l.b16 %v1095
    %v1160 = vunpack.c.l.b16 %v1096
    %v1161 = vunpack.c.l.b16 %v1097
    %v1162 = vunpack.c.l.b16 %v1098
    %v1163 = vunpack.c.l.b16 %v1099
    %v1164 = vunpack.c.l.b16 %v1100
    %v1165 = vunpack.c.l.b16 %v1101
    %v1166 = vunpack.c.l.b16 %v1102
    %v1167 = vunpack.c.l.b16 %v1103
    %v1168 = vunpack.c.l.b16 %v1104
    %v1169 = vunpack.c.l.b16 %v1105
    %v1170 = vunpack.c.l.b16 %v1106
    %v1171 = vunpack.c.l.b16 %v1107
    %v1172 = vunpack.c.l.b16 %v1108
    %v1173 = vunpack.c.l.b16 %v1109
    %v1174 = vunpack.c.l.b16 %v1110
    %v1175 = vunpack.c.l.b16 %v1111
    %v1176 = vunpack.c.l.b16 %v1112
    %v1177 = vunpack.c.l.b16 %v1113
    %v1178 = vunpack.c.l.b16 %v1114
    %v1179 = vunpack.c.l.b16 %v1115
    %v1180 = vunpack.c.l.b16 %v1116
    %v1181 = vunpack.c.l.b16 %v1117
    %v1182 = vunpack.c.l.b16 %v1118
    %v1183 = vunpack.c.l.b16 %v1119
    %v1184 = vunpack.c.l.b16 %v1120
    %v1185 = vunpack.c.l.b16 %v1121
    %v1186 = vunpack.c.l.b16 %v1122
    %v1187 = vpack.c.b16 %v1156, %v1155
    %v1188 = vpack.c.b16 %v1158, %v1157
    %v1189 = vpack.c.b16 %v1160, %v1159
    %v1190 = vpack.c.b16 %v1162, %v1161
    %v1191 = vpack.c.b16 %v1164, %v1163
    %v1192 = vpack.c.b16 %v1166, %v1165
    %v1193 = vpack.c.b16 %v1168, %v1167
    %v1194 = vpack.c.b16 %v1170, %v1169
    %v1195 = vpack.c.b16 %v1172, %v1171
    %v1196 = vpack.c.b16 %v1174, %v1173
    %v1197 = vpack.c.b16 %v1176, %v1175
    %v1198 = vpack.c.b16 %v1178, %v1177
    %v1199 = vpack.c.b16 %v1180, %v1179
    %v1200 = vpack.c.b16 %v1182, %v1181
    %v1201 = vpack.c.b16 %v1184, %v1183
    %v1202 = vpack.c.b16 %v1186, %v1185
    %1219 = vmatpush.bf16.msra.mxu0 %v1194
    %1220 = vmatpush.bf16.msra.mxu0 %v1193
    %1221 = vmatpush.bf16.msra.mxu0 %v1192
    %1222 = vmatpush.bf16.msra.mxu0 %v1191
    %1223 = vmatpush.bf16.msra.mxu0 %v1190
    %1224 = vmatpush.bf16.msra.mxu0 %v1189
    %1225 = vmatpush.bf16.msra.mxu0 %v1188
    %1226 = vmatpush.bf16.msra.mxu0 %v1187
    %1227 = vmatmul.bf16.gmra.mxu0 %v1089
    %v1228 = vpop.f32.mrf.mxu0
    %v1229 = vadd.f32 0.0, %v1228
    %v1230 = vpop.f32.mrf.mxu0
    %v1231 = vadd.f32 0.0, %v1230
    %1232 = vdwg.mxu0
    %1233 = vmatpush.bf16.msra.mxu0 %v1202
    %1234 = vmatpush.bf16.msra.mxu0 %v1201
    %1235 = vmatpush.bf16.msra.mxu0 %v1200
    %1236 = vmatpush.bf16.msra.mxu0 %v1199
    %1237 = vmatpush.bf16.msra.mxu0 %v1198
    %1238 = vmatpush.bf16.msra.mxu0 %v1197
    %1239 = vmatpush.bf16.msra.mxu0 %v1196
    %1240 = vmatpush.bf16.msra.mxu0 %v1195
    %1241 = vmatmul.bf16.gmra.mxu0 %v1090
    %v1242 = vpop.f32.mrf.mxu0
    %v1243 = vadd.f32 %v1229, %v1242
    %v1244 = vpop.f32.mrf.mxu0
    %v1245 = vadd.f32 %v1231, %v1244
    %1246 = vdwg.mxu0
    %v1247 = vadd.f32 %v956, %v1243
    %v1248 = vadd.f32 %v957, %v1245
    %v1249 = vperm.slane %v103, 2
    %v1250 = vadd.f32 %v1247, %v1249
    %v1251 = vadd.f32 %v1248, %v1249
    %1252 = vadd.xlane.f32.xlu0 %v1250
    %v1253 = vpop.xlane.xlu0 %1252
    %1254 = vadd.xlane.f32.xlu0 %v1251
    %v1255 = vpop.xlane.xlu0 %1254
    %v1256 = vmul.f32 %v1253, %v915
    %v1257 = vmul.f32 %v1255, %v915
    %v1258 = vsub.f32 %v1250, %v1256
    %v1259 = vsub.f32 %v1251, %v1257
    %v1260 = vmul.f32 %v1258, %v1258
    %v1261 = vmul.f32 %v1259, %v1259
    %1262 = vadd.xlane.f32.xlu0 %v1260
    %v1263 = vpop.xlane.xlu0 %1262
    %1264 = vadd.xlane.f32.xlu0 %v1261
    %v1265 = vpop.xlane.xlu0 %1264
    %v1266 = vmul.f32 %v1263, %v915
    %v1267 = vmul.f32 %v1265, %v915
    %v1268 = vadd.f32 %v1266, 1e-05
    %v1269 = vadd.f32 %v1267, 1e-05
    %v1270 = vrsqrt.pop %v1268
    %v1271 = vmul.f32 %v1270, %v1268
    %v1272 = vmul.f32 %v1271, %v1270
    %v1273 = vmul.f32 0.5, %v1272
    %v1274 = vsub.f32 1.5, %v1273
    %v1275 = vmul.f32 %v1270, %v1274
    %vm1276 = vweird.f32 %v1268
    %vm1277 = vweird.f32 %v1270
    %vm1278 = vmor %vm1276, %vm1277
    %v1279 = vsel %vm1278, %v1270, %v1275
    %v1280 = vrsqrt.pop %v1269
    %v1281 = vmul.f32 %v1280, %v1269
    %v1282 = vmul.f32 %v1281, %v1280
    %v1283 = vmul.f32 0.5, %v1282
    %v1284 = vsub.f32 1.5, %v1283
    %v1285 = vmul.f32 %v1280, %v1284
    %vm1286 = vweird.f32 %v1269
    %vm1287 = vweird.f32 %v1280
    %vm1288 = vmor %vm1286, %vm1287
    %v1289 = vsel %vm1288, %v1280, %v1285
    %v1290 = vmul.f32 %v1258, %v1279
    %v1291 = vmul.f32 %v1259, %v1289
    %v1292 = vperm.slane %v101, 3
    %v1293 = vmul.f32 %v1290, %v1292
    %v1294 = vmul.f32 %v1291, %v1292
    %v1295 = vperm.slane %v102, 3
    %v1296 = vadd.f32 %v1293, %v1295
    %v1297 = vadd.f32 %v1294, %v1295
    %s1298 = scalar_lea.vmem %s5, 24
    %v1299 = vld [vmem:[%s1298] sm:$0xff]
    %v1300 = vld [vmem:[%s1298 + $0x8] sm:$0xff]
    %v1301 = vld [vmem:[%s1298 + $0x10] sm:$0xff]
    %v1302 = vpack.c.bf16 %v1297, %v1296
    %s1303 = scalar_lea.vmem [#allocation2], 192
    %v1304 = vld [vmem:[%s1303] sm:$0xff]
    %v1305 = vld [vmem:[%s1303 + $0x8] sm:$0xf]
    %v1306 = vld [vmem:[%s1303 + $0xc] sm:$0xff]
    %v1307 = vld [vmem:[%s1303 + $0x14] sm:$0xf]
    %v1308 = vld [vmem:[%s1303 + $0x18] sm:$0xff]
    %v1309 = vld [vmem:[%s1303 + $0x20] sm:$0xf]
    %v1310 = vld [vmem:[%s1303 + $0x24] sm:$0xff]
    %v1311 = vld [vmem:[%s1303 + $0x2c] sm:$0xf]
    %v1312 = vld [vmem:[%s1303 + $0x30] sm:$0xff]
    %v1313 = vld [vmem:[%s1303 + $0x38] sm:$0xf]
    %v1314 = vld [vmem:[%s1303 + $0x3c] sm:$0xff]
    %v1315 = vld [vmem:[%s1303 + $0x44] sm:$0xf]
    %v1316 = vld [vmem:[%s1303 + $0x48] sm:$0xff]
    %v1317 = vld [vmem:[%s1303 + $0x50] sm:$0xf]
    %v1318 = vld [vmem:[%s1303 + $0x54] sm:$0xff]
    %v1319 = vld [vmem:[%s1303 + $0x5c] sm:$0xf]
    %v1320 = vld [vmem:[%s1303 + $0x60] sm:$0xff]
    %v1321 = vld [vmem:[%s1303 + $0x68] sm:$0xf]
    %v1322 = vld [vmem:[%s1303 + $0x6c] sm:$0xff]
    %v1323 = vld [vmem:[%s1303 + $0x74] sm:$0xf]
    %v1324 = vld [vmem:[%s1303 + $0x78] sm:$0xff]
    %v1325 = vld [vmem:[%s1303 + $0x80] sm:$0xf]
    %v1326 = vld [vmem:[%s1303 + $0x84] sm:$0xff]
    %v1327 = vld [vmem:[%s1303 + $0x8c] sm:$0xf]
    %v1328 = vld [vmem:[%s1303 + $0x90] sm:$0xff]
    %v1329 = vld [vmem:[%s1303 + $0x98] sm:$0xf]
    %v1330 = vld [vmem:[%s1303 + $0x9c] sm:$0xff]
    %v1331 = vld [vmem:[%s1303 + $0xa4] sm:$0xf]
    %v1332 = vld [vmem:[%s1303 + $0xa8] sm:$0xff]
    %v1333 = vld [vmem:[%s1303 + $0xb0] sm:$0xf]
    %v1334 = vld [vmem:[%s1303 + $0xb4] sm:$0xff]
    %v1335 = vld [vmem:[%s1303 + $0xbc] sm:$0xf]
    %v1336 = vperm.slane %v1299, 0
    %v1337 = vperm.slane %v1300, 0
    %v1338 = vperm.slane %v1301, 0
    %v1371 = vunpack.c.l.b16 %v1304
    %v1372 = vunpack.c.h.b16 %v1304
    %v1373 = vunpack.c.l.b16 %v1305
    %v1374 = vunpack.c.l.b16 %v1306
    %v1375 = vunpack.c.h.b16 %v1306
    %v1376 = vunpack.c.l.b16 %v1307
    %v1377 = vunpack.c.l.b16 %v1308
    %v1378 = vunpack.c.h.b16 %v1308
    %v1379 = vunpack.c.l.b16 %v1309
    %v1380 = vunpack.c.l.b16 %v1310
    %v1381 = vunpack.c.h.b16 %v1310
    %v1382 = vunpack.c.l.b16 %v1311
    %v1383 = vunpack.c.l.b16 %v1312
    %v1384 = vunpack.c.h.b16 %v1312
    %v1385 = vunpack.c.l.b16 %v1313
    %v1386 = vunpack.c.l.b16 %v1314
    %v1387 = vunpack.c.h.b16 %v1314
    %v1388 = vunpack.c.l.b16 %v1315
    %v1389 = vunpack.c.l.b16 %v1316
    %v1390 = vunpack.c.h.b16 %v1316
    %v1391 = vunpack.c.l.b16 %v1317
    %v1392 = vunpack.c.l.b16 %v1318
    %v1393 = vunpack.c.h.b16 %v1318
    %v1394 = vunpack.c.l.b16 %v1319
    %v1395 = vunpack.c.l.b16 %v1320
    %v1396 = vunpack.c.h.b16 %v1320
    %v1397 = vunpack.c.l.b16 %v1321
    %v1398 = vunpack.c.l.b16 %v1322
    %v1399 = vunpack.c.h.b16 %v1322
    %v1400 = vunpack.c.l.b16 %v1323
    %v1401 = vunpack.c.l.b16 %v1324
    %v1402 = vunpack.c.h.b16 %v1324
    %v1403 = vunpack.c.l.b16 %v1325
    %v1404 = vunpack.c.l.b16 %v1326
    %v1405 = vunpack.c.h.b16 %v1326
    %v1406 = vunpack.c.l.b16 %v1327
    %v1407 = vunpack.c.l.b16 %v1328
    %v1408 = vunpack.c.h.b16 %v1328
    %v1409 = vunpack.c.l.b16 %v1329
    %v1410 = vunpack.c.l.b16 %v1330
    %v1411 = vunpack.c.h.b16 %v1330
    %v1412 = vunpack.c.l.b16 %v1331
    %v1413 = vunpack.c.l.b16 %v1332
    %v1414 = vunpack.c.h.b16 %v1332
    %v1415 = vunpack.c.l.b16 %v1333
    %v1416 = vunpack.c.l.b16 %v1334
    %v1417 = vunpack.c.h.b16 %v1334
    %v1418 = vunpack.c.l.b16 %v1335
    %v1419 = vpack.c.b16 %v1374, %v1371
    %v1420 = vpack.c.b16 %v1375, %v1372
    %v1421 = vpack.c.b16 %v1376, %v1373
    %v1422 = vpack.c.b16 %v1380, %v1377
    %v1423 = vpack.c.b16 %v1381, %v1378
    %v1424 = vpack.c.b16 %v1382, %v1379
    %v1425 = vpack.c.b16 %v1386, %v1383
    %v1426 = vpack.c.b16 %v1387, %v1384
    %v1427 = vpack.c.b16 %v1388, %v1385
    %v1428 = vpack.c.b16 %v1392, %v1389
    %v1429 = vpack.c.b16 %v1393, %v1390
    %v1430 = vpack.c.b16 %v1394, %v1391
    %v1431 = vpack.c.b16 %v1398, %v1395
    %v1432 = vpack.c.b16 %v1399, %v1396
    %v1433 = vpack.c.b16 %v1400, %v1397
    %v1434 = vpack.c.b16 %v1404, %v1401
    %v1435 = vpack.c.b16 %v1405, %v1402
    %v1436 = vpack.c.b16 %v1406, %v1403
    %v1437 = vpack.c.b16 %v1410, %v1407
    %v1438 = vpack.c.b16 %v1411, %v1408
    %v1439 = vpack.c.b16 %v1412, %v1409
    %v1440 = vpack.c.b16 %v1416, %v1413
    %v1441 = vpack.c.b16 %v1417, %v1414
    %v1442 = vpack.c.b16 %v1418, %v1415
    %1467 = vmatpush.bf16.msra.mxu0 %v1440
    %1468 = vmatpush.bf16.msra.mxu0 %v1437
    %1469 = vmatpush.bf16.msra.mxu0 %v1434
    %1470 = vmatpush.bf16.msra.mxu0 %v1431
    %1471 = vmatpush.bf16.msra.mxu0 %v1428
    %1472 = vmatpush.bf16.msra.mxu0 %v1425
    %1473 = vmatpush.bf16.msra.mxu0 %v1422
    %1474 = vmatpush.bf16.msra.mxu0 %v1419
    %1475 = vmatmul.bf16.gmra.mxu0 %v1302
    %v1476 = vpop.f32.mrf.mxu0
    %v1477 = vadd.f32 %v1336, %v1476
    %v1478 = vpop.f32.mrf.mxu0
    %v1479 = vadd.f32 %v1336, %v1478
    %1480 = vdwg.mxu0
    %1481 = vmatpush.bf16.msra.mxu0 %v1441
    %1482 = vmatpush.bf16.msra.mxu0 %v1438
    %1483 = vmatpush.bf16.msra.mxu0 %v1435
    %1484 = vmatpush.bf16.msra.mxu0 %v1432
    %1485 = vmatpush.bf16.msra.mxu0 %v1429
    %1486 = vmatpush.bf16.msra.mxu0 %v1426
    %1487 = vmatpush.bf16.msra.mxu0 %v1423
    %1488 = vmatpush.bf16.msra.mxu0 %v1420
    %1489 = vmatmul.bf16.gmra.mxu0 %v1302
    %v1490 = vpop.f32.mrf.mxu0
    %v1491 = vadd.f32 %v1337, %v1490
    %v1492 = vpop.f32.mrf.mxu0
    %v1493 = vadd.f32 %v1337, %v1492
    %1494 = vdwg.mxu0
    %1495 = vmatpush.bf16.msra.mxu0 %v1442
    %1496 = vmatpush.bf16.msra.mxu0 %v1439
    %1497 = vmatpush.bf16.msra.mxu0 %v1436
    %1498 = vmatpush.bf16.msra.mxu0 %v1433
    %1499 = vmatpush.bf16.msra.mxu0 %v1430
    %1500 = vmatpush.bf16.msra.mxu0 %v1427
    %1501 = vmatpush.bf16.msra.mxu0 %v1424
    %1502 = vmatpush.bf16.msra.mxu0 %v1421
    %1503 = vmatmul.bf16.gmra.mxu0 %v1302
    %v1504 = vpop.f32.mrf.mxu0
    %v1505 = vadd.f32 %v1338, %v1504
    %v1506 = vpop.f32.mrf.mxu0
    %v1507 = vadd.f32 %v1338, %v1506
    %1508 = vdwg.mxu0
    %v1509 = vpack.c.bf16 %v1491, %v1477
    %v1510 = vpack.c.bf16 %v1505, %v1505
    %v1511 = vpack.c.bf16 %v1493, %v1479
    %v1512 = vpack.c.bf16 %v1507, %v1507
    %v1514 = vrot.slane %v1509, 4
    %v1516 = vsel %vm316, %v1509, 0
    %v1519 = vsel %vm316, %v1514, 0
    %1521 = vmatpush.bf16.xpose.msra.mxu0 0
    %1522 = vmatpush.bf16.xpose.msra.mxu0 0
    %1523 = vmatpush.bf16.xpose.msra.mxu0 0
    %1524 = vmatpush.bf16.xpose.msra.mxu0 0
    %1525 = vmatpush.bf16.xpose.msra.mxu0 0
    %1526 = vmatpush.bf16.xpose.msra.mxu0 0
    %1527 = vmatpush.bf16.xpose.msra.mxu0 0
    %1528 = vmatpush.bf16.xpose.msra.mxu0 %v1519
    %1529 = vmatmul.bf16.gmra.mxu0 %v1516
    %v1530 = vpop.f32.mrf.mxu0
    %v1531 = vadd.f32 0.0, %v1530
    %v1532 = vpop.f32.mrf.mxu0
    %1533 = vdwg.mxu0
    %v1535 = vrot.slane %v1511, 4
    %v1537 = vsel %vm316, %v1511, 0
    %v1540 = vsel %vm316, %v1535, 0
    %1542 = vmatpush.bf16.xpose.msra.mxu0 0
    %1543 = vmatpush.bf16.xpose.msra.mxu0 0
    %1544 = vmatpush.bf16.xpose.msra.mxu0 0
    %1545 = vmatpush.bf16.xpose.msra.mxu0 0
    %1546 = vmatpush.bf16.xpose.msra.mxu0 0
    %1547 = vmatpush.bf16.xpose.msra.mxu0 0
    %1548 = vmatpush.bf16.xpose.msra.mxu0 0
    %1549 = vmatpush.bf16.xpose.msra.mxu0 %v1540
    %1550 = vmatmul.bf16.gmra.mxu0 %v1537
    %v1551 = vpop.f32.mrf.mxu0
    %v1552 = vadd.f32 0.0, %v1551
    %v1553 = vpop.f32.mrf.mxu0
    %1554 = vdwg.mxu0
    %v1555 = vmul.f32 %v1531, 0.17677669
    %v1556 = vmul.f32 %v1552, 0.17677669
    %v1557 = vsel %vm360, %v1555, -inf
    %v1558 = vsel %vm360, %v1556, -inf
    %v1559 = vsel %vm363, %v1557, -inf
    %1560 = vmax.xlane.f32.xlu0 %v1559
    %v1561 = vpop.xlane.xlu0 %1560
    %v1562 = vsel %vm363, %v1558, -inf
    %1563 = vmax.xlane.f32.xlu0 %v1562
    %v1564 = vpop.xlane.xlu0 %1563
    %v1565 = vsub.f32 %v1557, %v1561
    %v1566 = vsub.f32 %v1558, %v1564
    %v1567 = vmul.f32 %v1565, 1.442695
    %v1568 = vpow.pop %v1567
    %v1569 = vmul.f32 %v1566, 1.442695
    %v1570 = vpow.pop %v1569
    %v1571 = vsel %vm363, %v1568, 0.0
    %1572 = vadd.xlane.f32.xlu0 %v1571
    %v1573 = vpop.xlane.xlu0 %1572
    %v1574 = vsel %vm363, %v1570, 0.0
    %1575 = vadd.xlane.f32.xlu0 %v1574
    %v1576 = vpop.xlane.xlu0 %1575
    %v1577 = vrcp.pop %v1573
    %v1578 = vrcp.pop %v1576
    %v1579 = vmul.f32 %v1568, %v1577
    %v1580 = vmul.f32 %v1570, %v1578
    %v1581 = vpack.c.bf16 %v1579, %v1579
    %v1582 = vpack.c.bf16 %v1580, %v1580
    %v1584 = vsel %vm363, %v1581, 0
    %v1587 = vsel %vm391, %v1510, 0
    %1589 = vmatpush.bf16.msra.mxu0 0
    %1590 = vmatpush.bf16.msra.mxu0 0
    %1591 = vmatpush.bf16.msra.mxu0 0
    %1592 = vmatpush.bf16.msra.mxu0 0
    %1593 = vmatpush.bf16.msra.mxu0 0
    %1594 = vmatpush.bf16.msra.mxu0 0
    %1595 = vmatpush.bf16.msra.mxu0 0
    %1596 = vmatpush.bf16.msra.mxu0 %v1587
    %1597 = vmatmul.bf16.gmra.mxu0 %v1584
    %v1598 = vpop.f32.mrf.mxu0
    %v1599 = vadd.f32 0.0, %v1598
    %v1600 = vpop.f32.mrf.mxu0
    %1601 = vdwg.mxu0
    %v1603 = vsel %vm363, %v1582, 0
    %v1606 = vsel %vm391, %v1512, 0
    %1608 = vmatpush.bf16.msra.mxu0 0
    %1609 = vmatpush.bf16.msra.mxu0 0
    %1610 = vmatpush.bf16.msra.mxu0 0
    %1611 = vmatpush.bf16.msra.mxu0 0
    %1612 = vmatpush.bf16.msra.mxu0 0
    %1613 = vmatpush.bf16.msra.mxu0 0
    %1614 = vmatpush.bf16.msra.mxu0 0
    %1615 = vmatpush.bf16.msra.mxu0 %v1606
    %1616 = vmatmul.bf16.gmra.mxu0 %v1603
    %v1617 = vpop.f32.mrf.mxu0
    %v1618 = vadd.f32 0.0, %v1617
    %v1619 = vpop.f32.mrf.mxu0
    %1620 = vdwg.mxu0
    %1621 = vrot.lane.b32.xlu0 %v1509, 96
    %v1622 = vpop.permute.xlu0 %1621
    %v1623 = vrot.slane %v1622, 4
    %v1624 = vunpack.c.l.b16 %v1509
    %v1625 = vpack.c.b16 %v1624, %v1624
    %1626 = vrot.lane.b32.xlu0 %v1625, 96
    %v1627 = vpop.permute.xlu0 %1626
    %v1629 = vsel %vm316, %v1627, 0
    %v1632 = vsel %vm316, %v1623, 0
    %1634 = vmatpush.bf16.xpose.msra.mxu0 0
    %1635 = vmatpush.bf16.xpose.msra.mxu0 0
    %1636 = vmatpush.bf16.xpose.msra.mxu0 0
    %1637 = vmatpush.bf16.xpose.msra.mxu0 0
    %1638 = vmatpush.bf16.xpose.msra.mxu0 0
    %1639 = vmatpush.bf16.xpose.msra.mxu0 0
    %1640 = vmatpush.bf16.xpose.msra.mxu0 0
    %1641 = vmatpush.bf16.xpose.msra.mxu0 %v1632
    %1642 = vmatmul.bf16.gmra.mxu0 %v1629
    %v1643 = vpop.f32.mrf.mxu0
    %v1644 = vadd.f32 0.0, %v1643
    %v1645 = vpop.f32.mrf.mxu0
    %1646 = vdwg.mxu0
    %1647 = vrot.lane.b32.xlu0 %v1511, 96
    %v1648 = vpop.permute.xlu0 %1647
    %v1649 = vrot.slane %v1648, 4
    %v1650 = vunpack.c.l.b16 %v1511
    %v1651 = vpack.c.b16 %v1650, %v1650
    %1652 = vrot.lane.b32.xlu0 %v1651, 96
    %v1653 = vpop.permute.xlu0 %1652
    %v1655 = vsel %vm316, %v1653, 0
    %v1658 = vsel %vm316, %v1649, 0
    %1660 = vmatpush.bf16.xpose.msra.mxu0 0
    %1661 = vmatpush.bf16.xpose.msra.mxu0 0
    %1662 = vmatpush.bf16.xpose.msra.mxu0 0
    %1663 = vmatpush.bf16.xpose.msra.mxu0 0
    %1664 = vmatpush.bf16.xpose.msra.mxu0 0
    %1665 = vmatpush.bf16.xpose.msra.mxu0 0
    %1666 = vmatpush.bf16.xpose.msra.mxu0 0
    %1667 = vmatpush.bf16.xpose.msra.mxu0 %v1658
    %1668 = vmatmul.bf16.gmra.mxu0 %v1655
    %v1669 = vpop.f32.mrf.mxu0
    %v1670 = vadd.f32 0.0, %v1669
    %v1671 = vpop.f32.mrf.mxu0
    %1672 = vdwg.mxu0
    %v1673 = vmul.f32 %v1644, 0.17677669
    %v1674 = vmul.f32 %v1670, 0.17677669
    %v1675 = vsel %vm360, %v1673, -inf
    %v1676 = vsel %vm360, %v1674, -inf
    %v1677 = vsel %vm363, %v1675, -inf
    %1678 = vmax.xlane.f32.xlu0 %v1677
    %v1679 = vpop.xlane.xlu0 %1678
    %v1680 = vsel %vm363, %v1676, -inf
    %1681 = vmax.xlane.f32.xlu0 %v1680
    %v1682 = vpop.xlane.xlu0 %1681
    %v1683 = vsub.f32 %v1675, %v1679
    %v1684 = vsub.f32 %v1676, %v1682
    %v1685 = vmul.f32 %v1683, 1.442695
    %v1686 = vpow.pop %v1685
    %v1687 = vmul.f32 %v1684, 1.442695
    %v1688 = vpow.pop %v1687
    %v1689 = vsel %vm363, %v1686, 0.0
    %1690 = vadd.xlane.f32.xlu0 %v1689
    %v1691 = vpop.xlane.xlu0 %1690
    %v1692 = vsel %vm363, %v1688, 0.0
    %1693 = vadd.xlane.f32.xlu0 %v1692
    %v1694 = vpop.xlane.xlu0 %1693
    %v1695 = vrcp.pop %v1691
    %v1696 = vrcp.pop %v1694
    %v1697 = vmul.f32 %v1686, %v1695
    %v1698 = vmul.f32 %v1688, %v1696
    %v1699 = vpack.c.bf16 %v1697, %v1697
    %v1700 = vpack.c.bf16 %v1698, %v1698
    %v1702 = vunpack.c.l.b16 %v1510
    %v1703 = vpack.c.b16 %v1702, %v1702
    %1704 = vrot.lane.b32.xlu0 %v1703, 96
    %v1705 = vpop.permute.xlu0 %1704
    %v1707 = vsel %vm363, %v1699, 0
    %v1710 = vsel %vm391, %v1705, 0
    %1712 = vmatpush.bf16.msra.mxu0 0
    %1713 = vmatpush.bf16.msra.mxu0 0
    %1714 = vmatpush.bf16.msra.mxu0 0
    %1715 = vmatpush.bf16.msra.mxu0 0
    %1716 = vmatpush.bf16.msra.mxu0 0
    %1717 = vmatpush.bf16.msra.mxu0 0
    %1718 = vmatpush.bf16.msra.mxu0 0
    %1719 = vmatpush.bf16.msra.mxu0 %v1710
    %1720 = vmatmul.bf16.gmra.mxu0 %v1707
    %v1721 = vpop.f32.mrf.mxu0
    %v1722 = vadd.f32 0.0, %v1721
    %v1723 = vpop.f32.mrf.mxu0
    %1724 = vdwg.mxu0
    %v1726 = vunpack.c.l.b16 %v1512
    %v1727 = vpack.c.b16 %v1726, %v1726
    %1728 = vrot.lane.b32.xlu0 %v1727, 96
    %v1729 = vpop.permute.xlu0 %1728
    %v1731 = vsel %vm363, %v1700, 0
    %v1734 = vsel %vm391, %v1729, 0
    %1736 = vmatpush.bf16.msra.mxu0 0
    %1737 = vmatpush.bf16.msra.mxu0 0
    %1738 = vmatpush.bf16.msra.mxu0 0
    %1739 = vmatpush.bf16.msra.mxu0 0
    %1740 = vmatpush.bf16.msra.mxu0 0
    %1741 = vmatpush.bf16.msra.mxu0 0
    %1742 = vmatpush.bf16.msra.mxu0 0
    %1743 = vmatpush.bf16.msra.mxu0 %v1734
    %1744 = vmatmul.bf16.gmra.mxu0 %v1731
    %v1745 = vpop.f32.mrf.mxu0
    %v1746 = vadd.f32 0.0, %v1745
    %v1747 = vpop.f32.mrf.mxu0
    %1748 = vdwg.mxu0
    %1749 = vrot.lane.b32.xlu0 %v1509, 64
    %v1750 = vpop.permute.xlu0 %1749
    %v1751 = vrot.slane %v1750, 4
    %1752 = vrot.lane.b32.xlu0 %v1625, 64
    %v1753 = vpop.permute.xlu0 %1752
    %v1755 = vsel %vm316, %v1753, 0
    %v1758 = vsel %vm316, %v1751, 0
    %1760 = vmatpush.bf16.xpose.msra.mxu0 0
    %1761 = vmatpush.bf16.xpose.msra.mxu0 0
    %1762 = vmatpush.bf16.xpose.msra.mxu0 0
    %1763 = vmatpush.bf16.xpose.msra.mxu0 0
    %1764 = vmatpush.bf16.xpose.msra.mxu0 0
    %1765 = vmatpush.bf16.xpose.msra.mxu0 0
    %1766 = vmatpush.bf16.xpose.msra.mxu0 0
    %1767 = vmatpush.bf16.xpose.msra.mxu0 %v1758
    %1768 = vmatmul.bf16.gmra.mxu0 %v1755
    %v1769 = vpop.f32.mrf.mxu0
    %v1770 = vadd.f32 0.0, %v1769
    %v1771 = vpop.f32.mrf.mxu0
    %1772 = vdwg.mxu0
    %1773 = vrot.lane.b32.xlu0 %v1511, 64
    %v1774 = vpop.permute.xlu0 %1773
    %v1775 = vrot.slane %v1774, 4
    %1776 = vrot.lane.b32.xlu0 %v1651, 64
    %v1777 = vpop.permute.xlu0 %1776
    %v1779 = vsel %vm316, %v1777, 0
    %v1782 = vsel %vm316, %v1775, 0
    %1784 = vmatpush.bf16.xpose.msra.mxu0 0
    %1785 = vmatpush.bf16.xpose.msra.mxu0 0
    %1786 = vmatpush.bf16.xpose.msra.mxu0 0
    %1787 = vmatpush.bf16.xpose.msra.mxu0 0
    %1788 = vmatpush.bf16.xpose.msra.mxu0 0
    %1789 = vmatpush.bf16.xpose.msra.mxu0 0
    %1790 = vmatpush.bf16.xpose.msra.mxu0 0
    %1791 = vmatpush.bf16.xpose.msra.mxu0 %v1782
    %1792 = vmatmul.bf16.gmra.mxu0 %v1779
    %v1793 = vpop.f32.mrf.mxu0
    %v1794 = vadd.f32 0.0, %v1793
    %v1795 = vpop.f32.mrf.mxu0
    %1796 = vdwg.mxu0
    %v1797 = vmul.f32 %v1770, 0.17677669
    %v1798 = vmul.f32 %v1794, 0.17677669
    %v1799 = vsel %vm360, %v1797, -inf
    %v1800 = vsel %vm360, %v1798, -inf
    %v1801 = vsel %vm363, %v1799, -inf
    %1802 = vmax.xlane.f32.xlu0 %v1801
    %v1803 = vpop.xlane.xlu0 %1802
    %v1804 = vsel %vm363, %v1800, -inf
    %1805 = vmax.xlane.f32.xlu0 %v1804
    %v1806 = vpop.xlane.xlu0 %1805
    %v1807 = vsub.f32 %v1799, %v1803
    %v1808 = vsub.f32 %v1800, %v1806
    %v1809 = vmul.f32 %v1807, 1.442695
    %v1810 = vpow.pop %v1809
    %v1811 = vmul.f32 %v1808, 1.442695
    %v1812 = vpow.pop %v1811
    %v1813 = vsel %vm363, %v1810, 0.0
    %1814 = vadd.xlane.f32.xlu0 %v1813
    %v1815 = vpop.xlane.xlu0 %1814
    %v1816 = vsel %vm363, %v1812, 0.0
    %1817 = vadd.xlane.f32.xlu0 %v1816
    %v1818 = vpop.xlane.xlu0 %1817
    %v1819 = vrcp.pop %v1815
    %v1820 = vrcp.pop %v1818
    %v1821 = vmul.f32 %v1810, %v1819
    %v1822 = vmul.f32 %v1812, %v1820
    %v1823 = vpack.c.bf16 %v1821, %v1821
    %v1824 = vpack.c.bf16 %v1822, %v1822
    %1825 = vrot.lane.b32.xlu0 %v1703, 64
    %v1826 = vpop.permute.xlu0 %1825
    %v1828 = vsel %vm363, %v1823, 0
    %v1831 = vsel %vm391, %v1826, 0
    %1833 = vmatpush.bf16.msra.mxu0 0
    %1834 = vmatpush.bf16.msra.mxu0 0
    %1835 = vmatpush.bf16.msra.mxu0 0
    %1836 = vmatpush.bf16.msra.mxu0 0
    %1837 = vmatpush.bf16.msra.mxu0 0
    %1838 = vmatpush.bf16.msra.mxu0 0
    %1839 = vmatpush.bf16.msra.mxu0 0
    %1840 = vmatpush.bf16.msra.mxu0 %v1831
    %1841 = vmatmul.bf16.gmra.mxu0 %v1828
    %v1842 = vpop.f32.mrf.mxu0
    %v1843 = vadd.f32 0.0, %v1842
    %v1844 = vpop.f32.mrf.mxu0
    %1845 = vdwg.mxu0
    %1846 = vrot.lane.b32.xlu0 %v1727, 64
    %v1847 = vpop.permute.xlu0 %1846
    %v1849 = vsel %vm363, %v1824, 0
    %v1852 = vsel %vm391, %v1847, 0
    %1854 = vmatpush.bf16.msra.mxu0 0
    %1855 = vmatpush.bf16.msra.mxu0 0
    %1856 = vmatpush.bf16.msra.mxu0 0
    %1857 = vmatpush.bf16.msra.mxu0 0
    %1858 = vmatpush.bf16.msra.mxu0 0
    %1859 = vmatpush.bf16.msra.mxu0 0
    %1860 = vmatpush.bf16.msra.mxu0 0
    %1861 = vmatpush.bf16.msra.mxu0 %v1852
    %1862 = vmatmul.bf16.gmra.mxu0 %v1849
    %v1863 = vpop.f32.mrf.mxu0
    %v1864 = vadd.f32 0.0, %v1863
    %v1865 = vpop.f32.mrf.mxu0
    %1866 = vdwg.mxu0
    %1867 = vrot.lane.b32.xlu0 %v1509, 32
    %v1868 = vpop.permute.xlu0 %1867
    %v1869 = vrot.slane %v1868, 4
    %1870 = vrot.lane.b32.xlu0 %v1625, 32
    %v1871 = vpop.permute.xlu0 %1870
    %v1873 = vsel %vm316, %v1871, 0
    %v1876 = vsel %vm316, %v1869, 0
    %1878 = vmatpush.bf16.xpose.msra.mxu0 0
    %1879 = vmatpush.bf16.xpose.msra.mxu0 0
    %1880 = vmatpush.bf16.xpose.msra.mxu0 0
    %1881 = vmatpush.bf16.xpose.msra.mxu0 0
    %1882 = vmatpush.bf16.xpose.msra.mxu0 0
    %1883 = vmatpush.bf16.xpose.msra.mxu0 0
    %1884 = vmatpush.bf16.xpose.msra.mxu0 0
    %1885 = vmatpush.bf16.xpose.msra.mxu0 %v1876
    %1886 = vmatmul.bf16.gmra.mxu0 %v1873
    %v1887 = vpop.f32.mrf.mxu0
    %v1888 = vadd.f32 0.0, %v1887
    %v1889 = vpop.f32.mrf.mxu0
    %1890 = vdwg.mxu0
    %1891 = vrot.lane.b32.xlu0 %v1511, 32
    %v1892 = vpop.permute.xlu0 %1891
    %v1893 = vrot.slane %v1892, 4
    %1894 = vrot.lane.b32.xlu0 %v1651, 32
    %v1895 = vpop.permute.xlu0 %1894
    %v1897 = vsel %vm316, %v1895, 0
    %v1900 = vsel %vm316, %v1893, 0
    %1902 = vmatpush.bf16.xpose.msra.mxu0 0
    %1903 = vmatpush.bf16.xpose.msra.mxu0 0
    %1904 = vmatpush.bf16.xpose.msra.mxu0 0
    %1905 = vmatpush.bf16.xpose.msra.mxu0 0
    %1906 = vmatpush.bf16.xpose.msra.mxu0 0
    %1907 = vmatpush.bf16.xpose.msra.mxu0 0
    %1908 = vmatpush.bf16.xpose.msra.mxu0 0
    %1909 = vmatpush.bf16.xpose.msra.mxu0 %v1900
    %1910 = vmatmul.bf16.gmra.mxu0 %v1897
    %v1911 = vpop.f32.mrf.mxu0
    %v1912 = vadd.f32 0.0, %v1911
    %v1913 = vpop.f32.mrf.mxu0
    %1914 = vdwg.mxu0
    %v1915 = vmul.f32 %v1888, 0.17677669
    %v1916 = vmul.f32 %v1912, 0.17677669
    %v1917 = vsel %vm360, %v1915, -inf
    %v1918 = vsel %vm360, %v1916, -inf
    %v1919 = vsel %vm363, %v1917, -inf
    %1920 = vmax.xlane.f32.xlu0 %v1919
    %v1921 = vpop.xlane.xlu0 %1920
    %v1922 = vsel %vm363, %v1918, -inf
    %1923 = vmax.xlane.f32.xlu0 %v1922
    %v1924 = vpop.xlane.xlu0 %1923
    %v1925 = vsub.f32 %v1917, %v1921
    %v1926 = vsub.f32 %v1918, %v1924
    %v1927 = vmul.f32 %v1925, 1.442695
    %v1928 = vpow.pop %v1927
    %v1929 = vmul.f32 %v1926, 1.442695
    %v1930 = vpow.pop %v1929
    %v1931 = vsel %vm363, %v1928, 0.0
    %1932 = vadd.xlane.f32.xlu0 %v1931
    %v1933 = vpop.xlane.xlu0 %1932
    %v1934 = vsel %vm363, %v1930, 0.0
    %1935 = vadd.xlane.f32.xlu0 %v1934
    %v1936 = vpop.xlane.xlu0 %1935
    %v1937 = vrcp.pop %v1933
    %v1938 = vrcp.pop %v1936
    %v1939 = vmul.f32 %v1928, %v1937
    %v1940 = vmul.f32 %v1930, %v1938
    %v1941 = vpack.c.bf16 %v1939, %v1939
    %v1942 = vpack.c.bf16 %v1940, %v1940
    %1943 = vrot.lane.b32.xlu0 %v1703, 32
    %v1944 = vpop.permute.xlu0 %1943
    %v1946 = vsel %vm363, %v1941, 0
    %v1949 = vsel %vm391, %v1944, 0
    %1951 = vmatpush.bf16.msra.mxu0 0
    %1952 = vmatpush.bf16.msra.mxu0 0
    %1953 = vmatpush.bf16.msra.mxu0 0
    %1954 = vmatpush.bf16.msra.mxu0 0
    %1955 = vmatpush.bf16.msra.mxu0 0
    %1956 = vmatpush.bf16.msra.mxu0 0
    %1957 = vmatpush.bf16.msra.mxu0 0
    %1958 = vmatpush.bf16.msra.mxu0 %v1949
    %1959 = vmatmul.bf16.gmra.mxu0 %v1946
    %v1960 = vpop.f32.mrf.mxu0
    %v1961 = vadd.f32 0.0, %v1960
    %v1962 = vpop.f32.mrf.mxu0
    %1963 = vdwg.mxu0
    %1964 = vrot.lane.b32.xlu0 %v1727, 32
    %v1965 = vpop.permute.xlu0 %1964
    %v1967 = vsel %vm363, %v1942, 0
    %v1970 = vsel %vm391, %v1965, 0
    %1972 = vmatpush.bf16.msra.mxu0 0
    %1973 = vmatpush.bf16.msra.mxu0 0
    %1974 = vmatpush.bf16.msra.mxu0 0
    %1975 = vmatpush.bf16.msra.mxu0 0
    %1976 = vmatpush.bf16.msra.mxu0 0
    %1977 = vmatpush.bf16.msra.mxu0 0
    %1978 = vmatpush.bf16.msra.mxu0 0
    %1979 = vmatpush.bf16.msra.mxu0 %v1970
    %1980 = vmatmul.bf16.gmra.mxu0 %v1967
    %v1981 = vpop.f32.mrf.mxu0
    %v1982 = vadd.f32 0.0, %v1981
    %v1983 = vpop.f32.mrf.mxu0
    %1984 = vdwg.mxu0
    %1987 = vrot.lane.b32.xlu0 %v1722, 32
    %v1988 = vpop.permute.xlu0 %1987
    %1989 = vrot.lane.b32.xlu0 %v1746, 32
    %v1990 = vpop.permute.xlu0 %1989
    %1995 = vrot.lane.b32.xlu0 %v1843, 64
    %v1996 = vpop.permute.xlu0 %1995
    %1997 = vrot.lane.b32.xlu0 %v1864, 64
    %v1998 = vpop.permute.xlu0 %1997
    %2003 = vrot.lane.b32.xlu0 %v1961, 96
    %v2004 = vpop.permute.xlu0 %2003
    %2005 = vrot.lane.b32.xlu0 %v1982, 96
    %v2006 = vpop.permute.xlu0 %2005
    %v2009 = vsel %vm316, %v1599, %v1988
    %v2010 = vsel %vm316, %v1618, %v1990
    %v2011 = vsel %vm817, %v2009, %v1996
    %v2012 = vsel %vm817, %v2010, %v1998
    %v2013 = vsel %vm820, %v2011, %v2004
    %v2014 = vsel %vm820, %v2012, %v2006
    %v2015 = vpack.c.bf16 %v2014, %v2013
    %s2016 = scalar_lea.vmem [#allocation5], 64
    %v2017 = vld [vmem:[%s2016] sm:$0xf]
    %v2018 = vld [vmem:[%s2016 + $0x4] sm:$0xf]
    %v2019 = vld [vmem:[%s2016 + $0x8] sm:$0xf]
    %v2020 = vld [vmem:[%s2016 + $0xc] sm:$0xf]
    %v2021 = vld [vmem:[%s2016 + $0x10] sm:$0xf]
    %v2022 = vld [vmem:[%s2016 + $0x14] sm:$0xf]
    %v2023 = vld [vmem:[%s2016 + $0x18] sm:$0xf]
    %v2024 = vld [vmem:[%s2016 + $0x1c] sm:$0xf]
    %v2025 = vld [vmem:[%s2016 + $0x20] sm:$0xf]
    %v2026 = vld [vmem:[%s2016 + $0x24] sm:$0xf]
    %v2027 = vld [vmem:[%s2016 + $0x28] sm:$0xf]
    %v2028 = vld [vmem:[%s2016 + $0x2c] sm:$0xf]
    %v2029 = vld [vmem:[%s2016 + $0x30] sm:$0xf]
    %v2030 = vld [vmem:[%s2016 + $0x34] sm:$0xf]
    %v2031 = vld [vmem:[%s2016 + $0x38] sm:$0xf]
    %v2032 = vld [vmem:[%s2016 + $0x3c] sm:$0xf]
    %v2033 = vperm.slane %v1299, 1
    %v2050 = vunpack.c.l.b16 %v2017
    %v2051 = vunpack.c.l.b16 %v2018
    %v2052 = vunpack.c.l.b16 %v2019
    %v2053 = vunpack.c.l.b16 %v2020
    %v2054 = vunpack.c.l.b16 %v2021
    %v2055 = vunpack.c.l.b16 %v2022
    %v2056 = vunpack.c.l.b16 %v2023
    %v2057 = vunpack.c.l.b16 %v2024
    %v2058 = vunpack.c.l.b16 %v2025
    %v2059 = vunpack.c.l.b16 %v2026
    %v2060 = vunpack.c.l.b16 %v2027
    %v2061 = vunpack.c.l.b16 %v2028
    %v2062 = vunpack.c.l.b16 %v2029
    %v2063 = vunpack.c.l.b16 %v2030
    %v2064 = vunpack.c.l.b16 %v2031
    %v2065 = vunpack.c.l.b16 %v2032
    %v2066 = vpack.c.b16 %v2051, %v2050
    %v2067 = vpack.c.b16 %v2053, %v2052
    %v2068 = vpack.c.b16 %v2055, %v2054
    %v2069 = vpack.c.b16 %v2057, %v2056
    %v2070 = vpack.c.b16 %v2059, %v2058
    %v2071 = vpack.c.b16 %v2061, %v2060
    %v2072 = vpack.c.b16 %v2063, %v2062
    %v2073 = vpack.c.b16 %v2065, %v2064
    %2082 = vmatpush.bf16.msra.mxu0 %v2073
    %2083 = vmatpush.bf16.msra.mxu0 %v2072
    %2084 = vmatpush.bf16.msra.mxu0 %v2071
    %2085 = vmatpush.bf16.msra.mxu0 %v2070
    %2086 = vmatpush.bf16.msra.mxu0 %v2069
    %2087 = vmatpush.bf16.msra.mxu0 %v2068
    %2088 = vmatpush.bf16.msra.mxu0 %v2067
    %2089 = vmatpush.bf16.msra.mxu0 %v2066
    %2090 = vmatmul.bf16.gmra.mxu0 %v2015
    %v2091 = vpop.f32.mrf.mxu0
    %v2092 = vadd.f32 %v2033, %v2091
    %v2093 = vpop.f32.mrf.mxu0
    %v2094 = vadd.f32 %v2033, %v2093
    %2095 = vdwg.mxu0
    %v2096 = vadd.f32 %v1296, %v2092
    %v2097 = vadd.f32 %v1297, %v2094
    %2098 = vadd.xlane.f32.xlu0 %v2096
    %v2099 = vpop.xlane.xlu0 %2098
    %2100 = vadd.xlane.f32.xlu0 %v2097
    %v2101 = vpop.xlane.xlu0 %2100
    %v2102 = vmul.f32 %v2099, %v915
    %v2103 = vmul.f32 %v2101, %v915
    %v2104 = vsub.f32 %v2096, %v2102
    %v2105 = vsub.f32 %v2097, %v2103
    %v2106 = vmul.f32 %v2104, %v2104
    %v2107 = vmul.f32 %v2105, %v2105
    %2108 = vadd.xlane.f32.xlu0 %v2106
    %v2109 = vpop.xlane.xlu0 %2108
    %2110 = vadd.xlane.f32.xlu0 %v2107
    %v2111 = vpop.xlane.xlu0 %2110
    %v2112 = vmul.f32 %v2109, %v915
    %v2113 = vmul.f32 %v2111, %v915
    %v2114 = vadd.f32 %v2112, 1e-05
    %v2115 = vadd.f32 %v2113, 1e-05
    %v2116 = vrsqrt.pop %v2114
    %v2117 = vmul.f32 %v2116, %v2114
    %v2118 = vmul.f32 %v2117, %v2116
    %v2119 = vmul.f32 0.5, %v2118
    %v2120 = vsub.f32 1.5, %v2119
    %v2121 = vmul.f32 %v2116, %v2120
    %vm2122 = vweird.f32 %v2114
    %vm2123 = vweird.f32 %v2116
    %vm2124 = vmor %vm2122, %vm2123
    %v2125 = vsel %vm2124, %v2116, %v2121
    %v2126 = vrsqrt.pop %v2115
    %v2127 = vmul.f32 %v2126, %v2115
    %v2128 = vmul.f32 %v2127, %v2126
    %v2129 = vmul.f32 0.5, %v2128
    %v2130 = vsub.f32 1.5, %v2129
    %v2131 = vmul.f32 %v2126, %v2130
    %vm2132 = vweird.f32 %v2115
    %vm2133 = vweird.f32 %v2126
    %vm2134 = vmor %vm2132, %vm2133
    %v2135 = vsel %vm2134, %v2126, %v2131
    %v2136 = vmul.f32 %v2104, %v2125
    %v2137 = vmul.f32 %v2105, %v2135
    %v2138 = vperm.slane %v1300, 1
    %v2139 = vmul.f32 %v2136, %v2138
    %v2140 = vmul.f32 %v2137, %v2138
    %v2141 = vperm.slane %v1301, 1
    %v2142 = vadd.f32 %v2139, %v2141
    %v2143 = vadd.f32 %v2140, %v2141
    %v2144 = vpack.c.bf16 %v2143, %v2142
    %s2145 = scalar_lea.vmem [#allocation7], 128
    %v2146 = vld [vmem:[%s2145] sm:$0xff]
    %v2147 = vld [vmem:[%s2145 + $0x8] sm:$0xff]
    %v2148 = vld [vmem:[%s2145 + $0x10] sm:$0xff]
    %v2149 = vld [vmem:[%s2145 + $0x18] sm:$0xff]
    %v2150 = vld [vmem:[%s2145 + $0x20] sm:$0xff]
    %v2151 = vld [vmem:[%s2145 + $0x28] sm:$0xff]
    %v2152 = vld [vmem:[%s2145 + $0x30] sm:$0xff]
    %v2153 = vld [vmem:[%s2145 + $0x38] sm:$0xff]
    %v2154 = vld [vmem:[%s2145 + $0x40] sm:$0xff]
    %v2155 = vld [vmem:[%s2145 + $0x48] sm:$0xff]
    %v2156 = vld [vmem:[%s2145 + $0x50] sm:$0xff]
    %v2157 = vld [vmem:[%s2145 + $0x58] sm:$0xff]
    %v2158 = vld [vmem:[%s2145 + $0x60] sm:$0xff]
    %v2159 = vld [vmem:[%s2145 + $0x68] sm:$0xff]
    %v2160 = vld [vmem:[%s2145 + $0x70] sm:$0xff]
    %v2161 = vld [vmem:[%s2145 + $0x78] sm:$0xff]
    %v2162 = vperm.slane %v1299, 2
    %v2163 = vperm.slane %v1300, 2
    %v2180 = vunpack.c.l.b16 %v2146
    %v2181 = vunpack.c.h.b16 %v2146
    %v2182 = vunpack.c.l.b16 %v2147
    %v2183 = vunpack.c.h.b16 %v2147
    %v2184 = vunpack.c.l.b16 %v2148
    %v2185 = vunpack.c.h.b16 %v2148
    %v2186 = vunpack.c.l.b16 %v2149
    %v2187 = vunpack.c.h.b16 %v2149
    %v2188 = vunpack.c.l.b16 %v2150
    %v2189 = vunpack.c.h.b16 %v2150
    %v2190 = vunpack.c.l.b16 %v2151
    %v2191 = vunpack.c.h.b16 %v2151
    %v2192 = vunpack.c.l.b16 %v2152
    %v2193 = vunpack.c.h.b16 %v2152
    %v2194 = vunpack.c.l.b16 %v2153
    %v2195 = vunpack.c.h.b16 %v2153
    %v2196 = vunpack.c.l.b16 %v2154
    %v2197 = vunpack.c.h.b16 %v2154
    %v2198 = vunpack.c.l.b16 %v2155
    %v2199 = vunpack.c.h.b16 %v2155
    %v2200 = vunpack.c.l.b16 %v2156
    %v2201 = vunpack.c.h.b16 %v2156
    %v2202 = vunpack.c.l.b16 %v2157
    %v2203 = vunpack.c.h.b16 %v2157
    %v2204 = vunpack.c.l.b16 %v2158
    %v2205 = vunpack.c.h.b16 %v2158
    %v2206 = vunpack.c.l.b16 %v2159
    %v2207 = vunpack.c.h.b16 %v2159
    %v2208 = vunpack.c.l.b16 %v2160
    %v2209 = vunpack.c.h.b16 %v2160
    %v2210 = vunpack.c.l.b16 %v2161
    %v2211 = vunpack.c.h.b16 %v2161
    %v2212 = vpack.c.b16 %v2182, %v2180
    %v2213 = vpack.c.b16 %v2183, %v2181
    %v2214 = vpack.c.b16 %v2186, %v2184
    %v2215 = vpack.c.b16 %v2187, %v2185
    %v2216 = vpack.c.b16 %v2190, %v2188
    %v2217 = vpack.c.b16 %v2191, %v2189
    %v2218 = vpack.c.b16 %v2194, %v2192
    %v2219 = vpack.c.b16 %v2195, %v2193
    %v2220 = vpack.c.b16 %v2198, %v2196
    %v2221 = vpack.c.b16 %v2199, %v2197
    %v2222 = vpack.c.b16 %v2202, %v2200
    %v2223 = vpack.c.b16 %v2203, %v2201
    %v2224 = vpack.c.b16 %v2206, %v2204
    %v2225 = vpack.c.b16 %v2207, %v2205
    %v2226 = vpack.c.b16 %v2210, %v2208
    %v2227 = vpack.c.b16 %v2211, %v2209
    %2244 = vmatpush.bf16.msra.mxu0 %v2226
    %2245 = vmatpush.bf16.msra.mxu0 %v2224
    %2246 = vmatpush.bf16.msra.mxu0 %v2222
    %2247 = vmatpush.bf16.msra.mxu0 %v2220
    %2248 = vmatpush.bf16.msra.mxu0 %v2218
    %2249 = vmatpush.bf16.msra.mxu0 %v2216
    %2250 = vmatpush.bf16.msra.mxu0 %v2214
    %2251 = vmatpush.bf16.msra.mxu0 %v2212
    %2252 = vmatmul.bf16.gmra.mxu0 %v2144
    %v2253 = vpop.f32.mrf.mxu0
    %v2254 = vadd.f32 %v2162, %v2253
    %v2255 = vpop.f32.mrf.mxu0
    %v2256 = vadd.f32 %v2162, %v2255
    %2257 = vdwg.mxu0
    %2258 = vmatpush.bf16.msra.mxu0 %v2227
    %2259 = vmatpush.bf16.msra.mxu0 %v2225
    %2260 = vmatpush.bf16.msra.mxu0 %v2223
    %2261 = vmatpush.bf16.msra.mxu0 %v2221
    %2262 = vmatpush.bf16.msra.mxu0 %v2219
    %2263 = vmatpush.bf16.msra.mxu0 %v2217
    %2264 = vmatpush.bf16.msra.mxu0 %v2215
    %2265 = vmatpush.bf16.msra.mxu0 %v2213
    %2266 = vmatmul.bf16.gmra.mxu0 %v2144
    %v2267 = vpop.f32.mrf.mxu0
    %v2268 = vadd.f32 %v2163, %v2267
    %v2269 = vpop.f32.mrf.mxu0
    %v2270 = vadd.f32 %v2163, %v2269
    %2271 = vdwg.mxu0
    %v2272 = vmax.f32 %v2254, 0.0
    %v2273 = vmax.f32 %v2268, 0.0
    %v2274 = vmax.f32 %v2256, 0.0
    %v2275 = vmax.f32 %v2270, 0.0
    %v2276 = vpack.c.bf16 %v2274, %v2272
    %v2277 = vpack.c.bf16 %v2275, %v2273
    %s2278 = scalar_lea.vmem [#allocation8], 128
    %v2279 = vld [vmem:[%s2278] sm:$0xf]
    %v2280 = vld [vmem:[%s2278 + $0x4] sm:$0xf]
    %v2281 = vld [vmem:[%s2278 + $0x8] sm:$0xf]
    %v2282 = vld [vmem:[%s2278 + $0xc] sm:$0xf]
    %v2283 = vld [vmem:[%s2278 + $0x10] sm:$0xf]
    %v2284 = vld [vmem:[%s2278 + $0x14] sm:$0xf]
    %v2285 = vld [vmem:[%s2278 + $0x18] sm:$0xf]
    %v2286 = vld [vmem:[%s2278 + $0x1c] sm:$0xf]
    %v2287 = vld [vmem:[%s2278 + $0x20] sm:$0xf]
    %v2288 = vld [vmem:[%s2278 + $0x24] sm:$0xf]
    %v2289 = vld [vmem:[%s2278 + $0x28] sm:$0xf]
    %v2290 = vld [vmem:[%s2278 + $0x2c] sm:$0xf]
    %v2291 = vld [vmem:[%s2278 + $0x30] sm:$0xf]
    %v2292 = vld [vmem:[%s2278 + $0x34] sm:$0xf]
    %v2293 = vld [vmem:[%s2278 + $0x38] sm:$0xf]
    %v2294 = vld [vmem:[%s2278 + $0x3c] sm:$0xf]
    %v2295 = vld [vmem:[%s2278 + $0x40] sm:$0xf]
    %v2296 = vld [vmem:[%s2278 + $0x44] sm:$0xf]
    %v2297 = vld [vmem:[%s2278 + $0x48] sm:$0xf]
    %v2298 = vld [vmem:[%s2278 + $0x4c] sm:$0xf]
    %v2299 = vld [vmem:[%s2278 + $0x50] sm:$0xf]
    %v2300 = vld [vmem:[%s2278 + $0x54] sm:$0xf]
    %v2301 = vld [vmem:[%s2278 + $0x58] sm:$0xf]
    %v2302 = vld [vmem:[%s2278 + $0x5c] sm:$0xf]
    %v2303 = vld [vmem:[%s2278 + $0x60] sm:$0xf]
    %v2304 = vld [vmem:[%s2278 + $0x64] sm:$0xf]
    %v2305 = vld [vmem:[%s2278 + $0x68] sm:$0xf]
    %v2306 = vld [vmem:[%s2278 + $0x6c] sm:$0xf]
    %v2307 = vld [vmem:[%s2278 + $0x70] sm:$0xf]
    %v2308 = vld [vmem:[%s2278 + $0x74] sm:$0xf]
    %v2309 = vld [vmem:[%s2278 + $0x78] sm:$0xf]
    %v2310 = vld [vmem:[%s2278 + $0x7c] sm:$0xf]
    %v2343 = vunpack.c.l.b16 %v2279
    %v2344 = vunpack.c.l.b16 %v2280
    %v2345 = vunpack.c.l.b16 %v2281
    %v2346 = vunpack.c.l.b16 %v2282
    %v2347 = vunpack.c.l.b16 %v2283
    %v2348 = vunpack.c.l.b16 %v2284
    %v2349 = vunpack.c.l.b16 %v2285
    %v2350 = vunpack.c.l.b16 %v2286
    %v2351 = vunpack.c.l.b16 %v2287
    %v2352 = vunpack.c.l.b16 %v2288
    %v2353 = vunpack.c.l.b16 %v2289
    %v2354 = vunpack.c.l.b16 %v2290
    %v2355 = vunpack.c.l.b16 %v2291
    %v2356 = vunpack.c.l.b16 %v2292
    %v2357 = vunpack.c.l.b16 %v2293
    %v2358 = vunpack.c.l.b16 %v2294
    %v2359 = vunpack.c.l.b16 %v2295
    %v2360 = vunpack.c.l.b16 %v2296
    %v2361 = vunpack.c.l.b16 %v2297
    %v2362 = vunpack.c.l.b16 %v2298
    %v2363 = vunpack.c.l.b16 %v2299
    %v2364 = vunpack.c.l.b16 %v2300
    %v2365 = vunpack.c.l.b16 %v2301
    %v2366 = vunpack.c.l.b16 %v2302
    %v2367 = vunpack.c.l.b16 %v2303
    %v2368 = vunpack.c.l.b16 %v2304
    %v2369 = vunpack.c.l.b16 %v2305
    %v2370 = vunpack.c.l.b16 %v2306
    %v2371 = vunpack.c.l.b16 %v2307
    %v2372 = vunpack.c.l.b16 %v2308
    %v2373 = vunpack.c.l.b16 %v2309
    %v2374 = vunpack.c.l.b16 %v2310
    %v2375 = vpack.c.b16 %v2344, %v2343
    %v2376 = vpack.c.b16 %v2346, %v2345
    %v2377 = vpack.c.b16 %v2348, %v2347
    %v2378 = vpack.c.b16 %v2350, %v2349
    %v2379 = vpack.c.b16 %v2352, %v2351
    %v2380 = vpack.c.b16 %v2354, %v2353
    %v2381 = vpack.c.b16 %v2356, %v2355
    %v2382 = vpack.c.b16 %v2358, %v2357
    %v2383 = vpack.c.b16 %v2360, %v2359
    %v2384 = vpack.c.b16 %v2362, %v2361
    %v2385 = vpack.c.b16 %v2364, %v2363
    %v2386 = vpack.c.b16 %v2366, %v2365
    %v2387 = vpack.c.b16 %v2368, %v2367
    %v2388 = vpack.c.b16 %v2370, %v2369
    %v2389 = vpack.c.b16 %v2372, %v2371
    %v2390 = vpack.c.b16 %v2374, %v2373
    %2407 = vmatpush.bf16.msra.mxu0 %v2382
    %2408 = vmatpush.bf16.msra.mxu0 %v2381
    %2409 = vmatpush.bf16.msra.mxu0 %v2380
    %2410 = vmatpush.bf16.msra.mxu0 %v2379
    %2411 = vmatpush.bf16.msra.mxu0 %v2378
    %2412 = vmatpush.bf16.msra.mxu0 %v2377
    %2413 = vmatpush.bf16.msra.mxu0 %v2376
    %2414 = vmatpush.bf16.msra.mxu0 %v2375
    %2415 = vmatmul.bf16.gmra.mxu0 %v2276
    %v2416 = vpop.f32.mrf.mxu0
    %v2417 = vadd.f32 0.0, %v2416
    %v2418 = vpop.f32.mrf.mxu0
    %v2419 = vadd.f32 0.0, %v2418
    %2420 = vdwg.mxu0
    %2421 = vmatpush.bf16.msra.mxu0 %v2390
    %2422 = vmatpush.bf16.msra.mxu0 %v2389
    %2423 = vmatpush.bf16.msra.mxu0 %v2388
    %2424 = vmatpush.bf16.msra.mxu0 %v2387
    %2425 = vmatpush.bf16.msra.mxu0 %v2386
    %2426 = vmatpush.bf16.msra.mxu0 %v2385
    %2427 = vmatpush.bf16.msra.mxu0 %v2384
    %2428 = vmatpush.bf16.msra.mxu0 %v2383
    %2429 = vmatmul.bf16.gmra.mxu0 %v2277
    %v2430 = vpop.f32.mrf.mxu0
    %v2431 = vadd.f32 %v2417, %v2430
    %v2432 = vpop.f32.mrf.mxu0
    %v2433 = vadd.f32 %v2419, %v2432
    %2434 = vdwg.mxu0
    %v2435 = vadd.f32 %v2142, %v2431
    %v2436 = vadd.f32 %v2143, %v2433
    %v2437 = vperm.slane %v1301, 2
    %v2438 = vadd.f32 %v2435, %v2437
    %v2439 = vadd.f32 %v2436, %v2437
    %2440 = vadd.xlane.f32.xlu0 %v2438
    %v2441 = vpop.xlane.xlu0 %2440
    %2442 = vadd.xlane.f32.xlu0 %v2439
    %v2443 = vpop.xlane.xlu0 %2442
    %v2444 = vmul.f32 %v2441, %v915
    %v2445 = vmul.f32 %v2443, %v915
    %v2446 = vsub.f32 %v2438, %v2444
    %v2447 = vsub.f32 %v2439, %v2445
    %v2448 = vmul.f32 %v2446, %v2446
    %v2449 = vmul.f32 %v2447, %v2447
    %2450 = vadd.xlane.f32.xlu0 %v2448
    %v2451 = vpop.xlane.xlu0 %2450
    %2452 = vadd.xlane.f32.xlu0 %v2449
    %v2453 = vpop.xlane.xlu0 %2452
    %v2454 = vmul.f32 %v2451, %v915
    %v2455 = vmul.f32 %v2453, %v915
    %v2456 = vadd.f32 %v2454, 1e-05
    %v2457 = vadd.f32 %v2455, 1e-05
    %v2458 = vrsqrt.pop %v2456
    %v2459 = vmul.f32 %v2458, %v2456
    %v2460 = vmul.f32 %v2459, %v2458
    %v2461 = vmul.f32 0.5, %v2460
    %v2462 = vsub.f32 1.5, %v2461
    %v2463 = vmul.f32 %v2458, %v2462
    %vm2464 = vweird.f32 %v2456
    %vm2465 = vweird.f32 %v2458
    %vm2466 = vmor %vm2464, %vm2465
    %v2467 = vsel %vm2466, %v2458, %v2463
    %v2468 = vrsqrt.pop %v2457
    %v2469 = vmul.f32 %v2468, %v2457
    %v2470 = vmul.f32 %v2469, %v2468
    %v2471 = vmul.f32 0.5, %v2470
    %v2472 = vsub.f32 1.5, %v2471
    %v2473 = vmul.f32 %v2468, %v2472
    %vm2474 = vweird.f32 %v2457
    %vm2475 = vweird.f32 %v2468
    %vm2476 = vmor %vm2474, %vm2475
    %v2477 = vsel %vm2476, %v2468, %v2473
    %v2478 = vmul.f32 %v2446, %v2467
    %v2479 = vmul.f32 %v2447, %v2477
    %v2480 = vperm.slane %v1299, 3
    %v2481 = vmul.f32 %v2478, %v2480
    %v2482 = vmul.f32 %v2479, %v2480
    %v2483 = vperm.slane %v1300, 3
    %v2484 = vadd.f32 %v2481, %v2483
    %v2485 = vadd.f32 %v2482, %v2483
    %s2486 = scalar_lea.vmem %s5, 48
    %v2487 = vld [vmem:[%s2486] sm:$0xff]
    %v2488 = vld [vmem:[%s2486 + $0x8] sm:$0xff]
    %v2489 = vld [vmem:[%s2486 + $0x10] sm:$0xff]
    %v2490 = vpack.c.bf16 %v2485, %v2484
    %s2491 = scalar_lea.vmem [#allocation2], 384
    %v2492 = vld [vmem:[%s2491] sm:$0xff]
    %v2493 = vld [vmem:[%s2491 + $0x8] sm:$0xf]
    %v2494 = vld [vmem:[%s2491 + $0xc] sm:$0xff]
    %v2495 = vld [vmem:[%s2491 + $0x14] sm:$0xf]
    %v2496 = vld [vmem:[%s2491 + $0x18] sm:$0xff]
    %v2497 = vld [vmem:[%s2491 + $0x20] sm:$0xf]
    %v2498 = vld [vmem:[%s2491 + $0x24] sm:$0xff]
    %v2499 = vld [vmem:[%s2491 + $0x2c] sm:$0xf]
    %v2500 = vld [vmem:[%s2491 + $0x30] sm:$0xff]
    %v2501 = vld [vmem:[%s2491 + $0x38] sm:$0xf]
    %v2502 = vld [vmem:[%s2491 + $0x3c] sm:$0xff]
    %v2503 = vld [vmem:[%s2491 + $0x44] sm:$0xf]
    %v2504 = vld [vmem:[%s2491 + $0x48] sm:$0xff]
    %v2505 = vld [vmem:[%s2491 + $0x50] sm:$0xf]
    %v2506 = vld [vmem:[%s2491 + $0x54] sm:$0xff]
    %v2507 = vld [vmem:[%s2491 + $0x5c] sm:$0xf]
    %v2508 = vld [vmem:[%s2491 + $0x60] sm:$0xff]
    %v2509 = vld [vmem:[%s2491 + $0x68] sm:$0xf]
    %v2510 = vld [vmem:[%s2491 + $0x6c] sm:$0xff]
    %v2511 = vld [vmem:[%s2491 + $0x74] sm:$0xf]
    %v2512 = vld [vmem:[%s2491 + $0x78] sm:$0xff]
    %v2513 = vld [vmem:[%s2491 + $0x80] sm:$0xf]
    %v2514 = vld [vmem:[%s2491 + $0x84] sm:$0xff]
    %v2515 = vld [vmem:[%s2491 + $0x8c] sm:$0xf]
    %v2516 = vld [vmem:[%s2491 + $0x90] sm:$0xff]
    %v2517 = vld [vmem:[%s2491 + $0x98] sm:$0xf]
    %v2518 = vld [vmem:[%s2491 + $0x9c] sm:$0xff]
    %v2519 = vld [vmem:[%s2491 + $0xa4] sm:$0xf]
    %v2520 = vld [vmem:[%s2491 + $0xa8] sm:$0xff]
    %v2521 = vld [vmem:[%s2491 + $0xb0] sm:$0xf]
    %v2522 = vld [vmem:[%s2491 + $0xb4] sm:$0xff]
    %v2523 = vld [vmem:[%s2491 + $0xbc] sm:$0xf]
    %v2524 = vperm.slane %v2487, 0
    %v2525 = vperm.slane %v2488, 0
    %v2526 = vperm.slane %v2489, 0
    %v2559 = vunpack.c.l.b16 %v2492
    %v2560 = vunpack.c.h.b16 %v2492
    %v2561 = vunpack.c.l.b16 %v2493
    %v2562 = vunpack.c.l.b16 %v2494
    %v2563 = vunpack.c.h.b16 %v2494
    %v2564 = vunpack.c.l.b16 %v2495
    %v2565 = vunpack.c.l.b16 %v2496
    %v2566 = vunpack.c.h.b16 %v2496
    %v2567 = vunpack.c.l.b16 %v2497
    %v2568 = vunpack.c.l.b16 %v2498
    %v2569 = vunpack.c.h.b16 %v2498
    %v2570 = vunpack.c.l.b16 %v2499
    %v2571 = vunpack.c.l.b16 %v2500
    %v2572 = vunpack.c.h.b16 %v2500
    %v2573 = vunpack.c.l.b16 %v2501
    %v2574 = vunpack.c.l.b16 %v2502
    %v2575 = vunpack.c.h.b16 %v2502
    %v2576 = vunpack.c.l.b16 %v2503
    %v2577 = vunpack.c.l.b16 %v2504
    %v2578 = vunpack.c.h.b16 %v2504
    %v2579 = vunpack.c.l.b16 %v2505
    %v2580 = vunpack.c.l.b16 %v2506
    %v2581 = vunpack.c.h.b16 %v2506
    %v2582 = vunpack.c.l.b16 %v2507
    %v2583 = vunpack.c.l.b16 %v2508
    %v2584 = vunpack.c.h.b16 %v2508
    %v2585 = vunpack.c.l.b16 %v2509
    %v2586 = vunpack.c.l.b16 %v2510
    %v2587 = vunpack.c.h.b16 %v2510
    %v2588 = vunpack.c.l.b16 %v2511
    %v2589 = vunpack.c.l.b16 %v2512
    %v2590 = vunpack.c.h.b16 %v2512
    %v2591 = vunpack.c.l.b16 %v2513
    %v2592 = vunpack.c.l.b16 %v2514
    %v2593 = vunpack.c.h.b16 %v2514
    %v2594 = vunpack.c.l.b16 %v2515
    %v2595 = vunpack.c.l.b16 %v2516
    %v2596 = vunpack.c.h.b16 %v2516
    %v2597 = vunpack.c.l.b16 %v2517
    %v2598 = vunpack.c.l.b16 %v2518
    %v2599 = vunpack.c.h.b16 %v2518
    %v2600 = vunpack.c.l.b16 %v2519
    %v2601 = vunpack.c.l.b16 %v2520
    %v2602 = vunpack.c.h.b16 %v2520
    %v2603 = vunpack.c.l.b16 %v2521
    %v2604 = vunpack.c.l.b16 %v2522
    %v2605 = vunpack.c.h.b16 %v2522
    %v2606 = vunpack.c.l.b16 %v2523
    %v2607 = vpack.c.b16 %v2562, %v2559
    %v2608 = vpack.c.b16 %v2563, %v2560
    %v2609 = vpack.c.b16 %v2564, %v2561
    %v2610 = vpack.c.b16 %v2568, %v2565
    %v2611 = vpack.c.b16 %v2569, %v2566
    %v2612 = vpack.c.b16 %v2570, %v2567
    %v2613 = vpack.c.b16 %v2574, %v2571
    %v2614 = vpack.c.b16 %v2575, %v2572
    %v2615 = vpack.c.b16 %v2576, %v2573
    %v2616 = vpack.c.b16 %v2580, %v2577
    %v2617 = vpack.c.b16 %v2581, %v2578
    %v2618 = vpack.c.b16 %v2582, %v2579
    %v2619 = vpack.c.b16 %v2586, %v2583
    %v2620 = vpack.c.b16 %v2587, %v2584
    %v2621 = vpack.c.b16 %v2588, %v2585
    %v2622 = vpack.c.b16 %v2592, %v2589
    %v2623 = vpack.c.b16 %v2593, %v2590
    %v2624 = vpack.c.b16 %v2594, %v2591
    %v2625 = vpack.c.b16 %v2598, %v2595
    %v2626 = vpack.c.b16 %v2599, %v2596
    %v2627 = vpack.c.b16 %v2600, %v2597
    %v2628 = vpack.c.b16 %v2604, %v2601
    %v2629 = vpack.c.b16 %v2605, %v2602
    %v2630 = vpack.c.b16 %v2606, %v2603
    %2655 = vmatpush.bf16.msra.mxu0 %v2628
    %2656 = vmatpush.bf16.msra.mxu0 %v2625
    %2657 = vmatpush.bf16.msra.mxu0 %v2622
    %2658 = vmatpush.bf16.msra.mxu0 %v2619
    %2659 = vmatpush.bf16.msra.mxu0 %v2616
    %2660 = vmatpush.bf16.msra.mxu0 %v2613
    %2661 = vmatpush.bf16.msra.mxu0 %v2610
    %2662 = vmatpush.bf16.msra.mxu0 %v2607
    %2663 = vmatmul.bf16.gmra.mxu0 %v2490
    %v2664 = vpop.f32.mrf.mxu0
    %v2665 = vadd.f32 %v2524, %v2664
    %v2666 = vpop.f32.mrf.mxu0
    %v2667 = vadd.f32 %v2524, %v2666
    %2668 = vdwg.mxu0
    %2669 = vmatpush.bf16.msra.mxu0 %v2629
    %2670 = vmatpush.bf16.msra.mxu0 %v2626
    %2671 = vmatpush.bf16.msra.mxu0 %v2623
    %2672 = vmatpush.bf16.msra.mxu0 %v2620
    %2673 = vmatpush.bf16.msra.mxu0 %v2617
    %2674 = vmatpush.bf16.msra.mxu0 %v2614
    %2675 = vmatpush.bf16.msra.mxu0 %v2611
    %2676 = vmatpush.bf16.msra.mxu0 %v2608
    %2677 = vmatmul.bf16.gmra.mxu0 %v2490
    %v2678 = vpop.f32.mrf.mxu0
    %v2679 = vadd.f32 %v2525, %v2678
    %v2680 = vpop.f32.mrf.mxu0
    %v2681 = vadd.f32 %v2525, %v2680
    %2682 = vdwg.mxu0
    %2683 = vmatpush.bf16.msra.mxu0 %v2630
    %2684 = vmatpush.bf16.msra.mxu0 %v2627
    %2685 = vmatpush.bf16.msra.mxu0 %v2624
    %2686 = vmatpush.bf16.msra.mxu0 %v2621
    %2687 = vmatpush.bf16.msra.mxu0 %v2618
    %2688 = vmatpush.bf16.msra.mxu0 %v2615
    %2689 = vmatpush.bf16.msra.mxu0 %v2612
    %2690 = vmatpush.bf16.msra.mxu0 %v2609
    %2691 = vmatmul.bf16.gmra.mxu0 %v2490
    %v2692 = vpop.f32.mrf.mxu0
    %v2693 = vadd.f32 %v2526, %v2692
    %v2694 = vpop.f32.mrf.mxu0
    %v2695 = vadd.f32 %v2526, %v2694
    %2696 = vdwg.mxu0
    %v2697 = vpack.c.bf16 %v2679, %v2665
    %v2698 = vpack.c.bf16 %v2693, %v2693
    %v2699 = vpack.c.bf16 %v2681, %v2667
    %v2700 = vpack.c.bf16 %v2695, %v2695
    %v2702 = vrot.slane %v2697, 4
    %v2704 = vsel %vm316, %v2697, 0
    %v2707 = vsel %vm316, %v2702, 0
    %2709 = vmatpush.bf16.xpose.msra.mxu0 0
    %2710 = vmatpush.bf16.xpose.msra.mxu0 0
    %2711 = vmatpush.bf16.xpose.msra.mxu0 0
    %2712 = vmatpush.bf16.xpose.msra.mxu0 0
    %2713 = vmatpush.bf16.xpose.msra.mxu0 0
    %2714 = vmatpush.bf16.xpose.msra.mxu0 0
    %2715 = vmatpush.bf16.xpose.msra.mxu0 0
    %2716 = vmatpush.bf16.xpose.msra.mxu0 %v2707
    %2717 = vmatmul.bf16.gmra.mxu0 %v2704
    %v2718 = vpop.f32.mrf.mxu0
    %v2719 = vadd.f32 0.0, %v2718
    %v2720 = vpop.f32.mrf.mxu0
    %2721 = vdwg.mxu0
    %v2723 = vrot.slane %v2699, 4
    %v2725 = vsel %vm316, %v2699, 0
    %v2728 = vsel %vm316, %v2723, 0
    %2730 = vmatpush.bf16.xpose.msra.mxu0 0
    %2731 = vmatpush.bf16.xpose.msra.mxu0 0
    %2732 = vmatpush.bf16.xpose.msra.mxu0 0
    %2733 = vmatpush.bf16.xpose.msra.mxu0 0
    %2734 = vmatpush.bf16.xpose.msra.mxu0 0
    %2735 = vmatpush.bf16.xpose.msra.mxu0 0
    %2736 = vmatpush.bf16.xpose.msra.mxu0 0
    %2737 = vmatpush.bf16.xpose.msra.mxu0 %v2728
    %2738 = vmatmul.bf16.gmra.mxu0 %v2725
    %v2739 = vpop.f32.mrf.mxu0
    %v2740 = vadd.f32 0.0, %v2739
    %v2741 = vpop.f32.mrf.mxu0
    %2742 = vdwg.mxu0
    %v2743 = vmul.f32 %v2719, 0.17677669
    %v2744 = vmul.f32 %v2740, 0.17677669
    %v2745 = vsel %vm360, %v2743, -inf
    %v2746 = vsel %vm360, %v2744, -inf
    %v2747 = vsel %vm363, %v2745, -inf
    %2748 = vmax.xlane.f32.xlu0 %v2747
    %v2749 = vpop.xlane.xlu0 %2748
    %v2750 = vsel %vm363, %v2746, -inf
    %2751 = vmax.xlane.f32.xlu0 %v2750
    %v2752 = vpop.xlane.xlu0 %2751
    %v2753 = vsub.f32 %v2745, %v2749
    %v2754 = vsub.f32 %v2746, %v2752
    %v2755 = vmul.f32 %v2753, 1.442695
    %v2756 = vpow.pop %v2755
    %v2757 = vmul.f32 %v2754, 1.442695
    %v2758 = vpow.pop %v2757
    %v2759 = vsel %vm363, %v2756, 0.0
    %2760 = vadd.xlane.f32.xlu0 %v2759
    %v2761 = vpop.xlane.xlu0 %2760
    %v2762 = vsel %vm363, %v2758, 0.0
    %2763 = vadd.xlane.f32.xlu0 %v2762
    %v2764 = vpop.xlane.xlu0 %2763
    %v2765 = vrcp.pop %v2761
    %v2766 = vrcp.pop %v2764
    %v2767 = vmul.f32 %v2756, %v2765
    %v2768 = vmul.f32 %v2758, %v2766
    %v2769 = vpack.c.bf16 %v2767, %v2767
    %v2770 = vpack.c.bf16 %v2768, %v2768
    %v2772 = vsel %vm363, %v2769, 0
    %v2775 = vsel %vm391, %v2698, 0
    %2777 = vmatpush.bf16.msra.mxu0 0
    %2778 = vmatpush.bf16.msra.mxu0 0
    %2779 = vmatpush.bf16.msra.mxu0 0
    %2780 = vmatpush.bf16.msra.mxu0 0
    %2781 = vmatpush.bf16.msra.mxu0 0
    %2782 = vmatpush.bf16.msra.mxu0 0
    %2783 = vmatpush.bf16.msra.mxu0 0
    %2784 = vmatpush.bf16.msra.mxu0 %v2775
    %2785 = vmatmul.bf16.gmra.mxu0 %v2772
    %v2786 = vpop.f32.mrf.mxu0
    %v2787 = vadd.f32 0.0, %v2786
    %v2788 = vpop.f32.mrf.mxu0
    %2789 = vdwg.mxu0
    %v2791 = vsel %vm363, %v2770, 0
    %v2794 = vsel %vm391, %v2700, 0
    %2796 = vmatpush.bf16.msra.mxu0 0
    %2797 = vmatpush.bf16.msra.mxu0 0
    %2798 = vmatpush.bf16.msra.mxu0 0
    %2799 = vmatpush.bf16.msra.mxu0 0
    %2800 = vmatpush.bf16.msra.mxu0 0
    %2801 = vmatpush.bf16.msra.mxu0 0
    %2802 = vmatpush.bf16.msra.mxu0 0
    %2803 = vmatpush.bf16.msra.mxu0 %v2794
    %2804 = vmatmul.bf16.gmra.mxu0 %v2791
    %v2805 = vpop.f32.mrf.mxu0
    %v2806 = vadd.f32 0.0, %v2805
    %v2807 = vpop.f32.mrf.mxu0
    %2808 = vdwg.mxu0
    %2809 = vrot.lane.b32.xlu0 %v2697, 96
    %v2810 = vpop.permute.xlu0 %2809
    %v2811 = vrot.slane %v2810, 4
    %v2812 = vunpack.c.l.b16 %v2697
    %v2813 = vpack.c.b16 %v2812, %v2812
    %2814 = vrot.lane.b32.xlu0 %v2813, 96
    %v2815 = vpop.permute.xlu0 %2814
    %v2817 = vsel %vm316, %v2815, 0
    %v2820 = vsel %vm316, %v2811, 0
    %2822 = vmatpush.bf16.xpose.msra.mxu0 0
    %2823 = vmatpush.bf16.xpose.msra.mxu0 0
    %2824 = vmatpush.bf16.xpose.msra.mxu0 0
    %2825 = vmatpush.bf16.xpose.msra.mxu0 0
    %2826 = vmatpush.bf16.xpose.msra.mxu0 0
    %2827 = vmatpush.bf16.xpose.msra.mxu0 0
    %2828 = vmatpush.bf16.xpose.msra.mxu0 0
    %2829 = vmatpush.bf16.xpose.msra.mxu0 %v2820
    %2830 = vmatmul.bf16.gmra.mxu0 %v2817
    %v2831 = vpop.f32.mrf.mxu0
    %v2832 = vadd.f32 0.0, %v2831
    %v2833 = vpop.f32.mrf.mxu0
    %2834 = vdwg.mxu0
    %2835 = vrot.lane.b32.xlu0 %v2699, 96
    %v2836 = vpop.permute.xlu0 %2835
    %v2837 = vrot.slane %v2836, 4
    %v2838 = vunpack.c.l.b16 %v2699
    %v2839 = vpack.c.b16 %v2838, %v2838
    %2840 = vrot.lane.b32.xlu0 %v2839, 96
    %v2841 = vpop.permute.xlu0 %2840
    %v2843 = vsel %vm316, %v2841, 0
    %v2846 = vsel %vm316, %v2837, 0
    %2848 = vmatpush.bf16.xpose.msra.mxu0 0
    %2849 = vmatpush.bf16.xpose.msra.mxu0 0
    %2850 = vmatpush.bf16.xpose.msra.mxu0 0
    %2851 = vmatpush.bf16.xpose.msra.mxu0 0
    %2852 = vmatpush.bf16.xpose.msra.mxu0 0
    %2853 = vmatpush.bf16.xpose.msra.mxu0 0
    %2854 = vmatpush.bf16.xpose.msra.mxu0 0
    %2855 = vmatpush.bf16.xpose.msra.mxu0 %v2846
    %2856 = vmatmul.bf16.gmra.mxu0 %v2843
    %v2857 = vpop.f32.mrf.mxu0
    %v2858 = vadd.f32 0.0, %v2857
    %v2859 = vpop.f32.mrf.mxu0
    %2860 = vdwg.mxu0
    %v2861 = vmul.f32 %v2832, 0.17677669
    %v2862 = vmul.f32 %v2858, 0.17677669
    %v2863 = vsel %vm360, %v2861, -inf
    %v2864 = vsel %vm360, %v2862, -inf
    %v2865 = vsel %vm363, %v2863, -inf
    %2866 = vmax.xlane.f32.xlu0 %v2865
    %v2867 = vpop.xlane.xlu0 %2866
    %v2868 = vsel %vm363, %v2864, -inf
    %2869 = vmax.xlane.f32.xlu0 %v2868
    %v2870 = vpop.xlane.xlu0 %2869
    %v2871 = vsub.f32 %v2863, %v2867
    %v2872 = vsub.f32 %v2864, %v2870
    %v2873 = vmul.f32 %v2871, 1.442695
    %v2874 = vpow.pop %v2873
    %v2875 = vmul.f32 %v2872, 1.442695
    %v2876 = vpow.pop %v2875
    %v2877 = vsel %vm363, %v2874, 0.0
    %2878 = vadd.xlane.f32.xlu0 %v2877
    %v2879 = vpop.xlane.xlu0 %2878
    %v2880 = vsel %vm363, %v2876, 0.0
    %2881 = vadd.xlane.f32.xlu0 %v2880
    %v2882 = vpop.xlane.xlu0 %2881
    %v2883 = vrcp.pop %v2879
    %v2884 = vrcp.pop %v2882
    %v2885 = vmul.f32 %v2874, %v2883
    %v2886 = vmul.f32 %v2876, %v2884
    %v2887 = vpack.c.bf16 %v2885, %v2885
    %v2888 = vpack.c.bf16 %v2886, %v2886
    %v2890 = vunpack.c.l.b16 %v2698
    %v2891 = vpack.c.b16 %v2890, %v2890
    %2892 = vrot.lane.b32.xlu0 %v2891, 96
    %v2893 = vpop.permute.xlu0 %2892
    %v2895 = vsel %vm363, %v2887, 0
    %v2898 = vsel %vm391, %v2893, 0
    %2900 = vmatpush.bf16.msra.mxu0 0
    %2901 = vmatpush.bf16.msra.mxu0 0
    %2902 = vmatpush.bf16.msra.mxu0 0
    %2903 = vmatpush.bf16.msra.mxu0 0
    %2904 = vmatpush.bf16.msra.mxu0 0
    %2905 = vmatpush.bf16.msra.mxu0 0
    %2906 = vmatpush.bf16.msra.mxu0 0
    %2907 = vmatpush.bf16.msra.mxu0 %v2898
    %2908 = vmatmul.bf16.gmra.mxu0 %v2895
    %v2909 = vpop.f32.mrf.mxu0
    %v2910 = vadd.f32 0.0, %v2909
    %v2911 = vpop.f32.mrf.mxu0
    %2912 = vdwg.mxu0
    %v2914 = vunpack.c.l.b16 %v2700
    %v2915 = vpack.c.b16 %v2914, %v2914
    %2916 = vrot.lane.b32.xlu0 %v2915, 96
    %v2917 = vpop.permute.xlu0 %2916
    %v2919 = vsel %vm363, %v2888, 0
    %v2922 = vsel %vm391, %v2917, 0
    %2924 = vmatpush.bf16.msra.mxu0 0
    %2925 = vmatpush.bf16.msra.mxu0 0
    %2926 = vmatpush.bf16.msra.mxu0 0
    %2927 = vmatpush.bf16.msra.mxu0 0
    %2928 = vmatpush.bf16.msra.mxu0 0
    %2929 = vmatpush.bf16.msra.mxu0 0
    %2930 = vmatpush.bf16.msra.mxu0 0
    %2931 = vmatpush.bf16.msra.mxu0 %v2922
    %2932 = vmatmul.bf16.gmra.mxu0 %v2919
    %v2933 = vpop.f32.mrf.mxu0
    %v2934 = vadd.f32 0.0, %v2933
    %v2935 = vpop.f32.mrf.mxu0
    %2936 = vdwg.mxu0
    %2937 = vrot.lane.b32.xlu0 %v2697, 64
    %v2938 = vpop.permute.xlu0 %2937
    %v2939 = vrot.slane %v2938, 4
    %2940 = vrot.lane.b32.xlu0 %v2813, 64
    %v2941 = vpop.permute.xlu0 %2940
    %v2943 = vsel %vm316, %v2941, 0
    %v2946 = vsel %vm316, %v2939, 0
    %2948 = vmatpush.bf16.xpose.msra.mxu0 0
    %2949 = vmatpush.bf16.xpose.msra.mxu0 0
    %2950 = vmatpush.bf16.xpose.msra.mxu0 0
    %2951 = vmatpush.bf16.xpose.msra.mxu0 0
    %2952 = vmatpush.bf16.xpose.msra.mxu0 0
    %2953 = vmatpush.bf16.xpose.msra.mxu0 0
    %2954 = vmatpush.bf16.xpose.msra.mxu0 0
    %2955 = vmatpush.bf16.xpose.msra.mxu0 %v2946
    %2956 = vmatmul.bf16.gmra.mxu0 %v2943
    %v2957 = vpop.f32.mrf.mxu0
    %v2958 = vadd.f32 0.0, %v2957
    %v2959 = vpop.f32.mrf.mxu0
    %2960 = vdwg.mxu0
    %2961 = vrot.lane.b32.xlu0 %v2699, 64
    %v2962 = vpop.permute.xlu0 %2961
    %v2963 = vrot.slane %v2962, 4
    %2964 = vrot.lane.b32.xlu0 %v2839, 64
    %v2965 = vpop.permute.xlu0 %2964
    %v2967 = vsel %vm316, %v2965, 0
    %v2970 = vsel %vm316, %v2963, 0
    %2972 = vmatpush.bf16.xpose.msra.mxu0 0
    %2973 = vmatpush.bf16.xpose.msra.mxu0 0
    %2974 = vmatpush.bf16.xpose.msra.mxu0 0
    %2975 = vmatpush.bf16.xpose.msra.mxu0 0
    %2976 = vmatpush.bf16.xpose.msra.mxu0 0
    %2977 = vmatpush.bf16.xpose.msra.mxu0 0
    %2978 = vmatpush.bf16.xpose.msra.mxu0 0
    %2979 = vmatpush.bf16.xpose.msra.mxu0 %v2970
    %2980 = vmatmul.bf16.gmra.mxu0 %v2967
    %v2981 = vpop.f32.mrf.mxu0
    %v2982 = vadd.f32 0.0, %v2981
    %v2983 = vpop.f32.mrf.mxu0
    %2984 = vdwg.mxu0
    %v2985 = vmul.f32 %v2958, 0.17677669
    %v2986 = vmul.f32 %v2982, 0.17677669
    %v2987 = vsel %vm360, %v2985, -inf
    %v2988 = vsel %vm360, %v2986, -inf
    %v2989 = vsel %vm363, %v2987, -inf
    %2990 = vmax.xlane.f32.xlu0 %v2989
    %v2991 = vpop.xlane.xlu0 %2990
    %v2992 = vsel %vm363, %v2988, -inf
    %2993 = vmax.xlane.f32.xlu0 %v2992
    %v2994 = vpop.xlane.xlu0 %2993
    %v2995 = vsub.f32 %v2987, %v2991
    %v2996 = vsub.f32 %v2988, %v2994
    %v2997 = vmul.f32 %v2995, 1.442695
    %v2998 = vpow.pop %v2997
    %v2999 = vmul.f32 %v2996, 1.442695
    %v3000 = vpow.pop %v2999
    %v3001 = vsel %vm363, %v2998, 0.0
    %3002 = vadd.xlane.f32.xlu0 %v3001
    %v3003 = vpop.xlane.xlu0 %3002
    %v3004 = vsel %vm363, %v3000, 0.0
    %3005 = vadd.xlane.f32.xlu0 %v3004
    %v3006 = vpop.xlane.xlu0 %3005
    %v3007 = vrcp.pop %v3003
    %v3008 = vrcp.pop %v3006
    %v3009 = vmul.f32 %v2998, %v3007
    %v3010 = vmul.f32 %v3000, %v3008
    %v3011 = vpack.c.bf16 %v3009, %v3009
    %v3012 = vpack.c.bf16 %v3010, %v3010
    %3013 = vrot.lane.b32.xlu0 %v2891, 64
    %v3014 = vpop.permute.xlu0 %3013
    %v3016 = vsel %vm363, %v3011, 0
    %v3019 = vsel %vm391, %v3014, 0
    %3021 = vmatpush.bf16.msra.mxu0 0
    %3022 = vmatpush.bf16.msra.mxu0 0
    %3023 = vmatpush.bf16.msra.mxu0 0
    %3024 = vmatpush.bf16.msra.mxu0 0
    %3025 = vmatpush.bf16.msra.mxu0 0
    %3026 = vmatpush.bf16.msra.mxu0 0
    %3027 = vmatpush.bf16.msra.mxu0 0
    %3028 = vmatpush.bf16.msra.mxu0 %v3019
    %3029 = vmatmul.bf16.gmra.mxu0 %v3016
    %v3030 = vpop.f32.mrf.mxu0
    %v3031 = vadd.f32 0.0, %v3030
    %v3032 = vpop.f32.mrf.mxu0
    %3033 = vdwg.mxu0
    %3034 = vrot.lane.b32.xlu0 %v2915, 64
    %v3035 = vpop.permute.xlu0 %3034
    %v3037 = vsel %vm363, %v3012, 0
    %v3040 = vsel %vm391, %v3035, 0
    %3042 = vmatpush.bf16.msra.mxu0 0
    %3043 = vmatpush.bf16.msra.mxu0 0
    %3044 = vmatpush.bf16.msra.mxu0 0
    %3045 = vmatpush.bf16.msra.mxu0 0
    %3046 = vmatpush.bf16.msra.mxu0 0
    %3047 = vmatpush.bf16.msra.mxu0 0
    %3048 = vmatpush.bf16.msra.mxu0 0
    %3049 = vmatpush.bf16.msra.mxu0 %v3040
    %3050 = vmatmul.bf16.gmra.mxu0 %v3037
    %v3051 = vpop.f32.mrf.mxu0
    %v3052 = vadd.f32 0.0, %v3051
    %v3053 = vpop.f32.mrf.mxu0
    %3054 = vdwg.mxu0
    %3055 = vrot.lane.b32.xlu0 %v2697, 32
    %v3056 = vpop.permute.xlu0 %3055
    %v3057 = vrot.slane %v3056, 4
    %3058 = vrot.lane.b32.xlu0 %v2813, 32
    %v3059 = vpop.permute.xlu0 %3058
    %v3061 = vsel %vm316, %v3059, 0
    %v3064 = vsel %vm316, %v3057, 0
    %3066 = vmatpush.bf16.xpose.msra.mxu0 0
    %3067 = vmatpush.bf16.xpose.msra.mxu0 0
    %3068 = vmatpush.bf16.xpose.msra.mxu0 0
    %3069 = vmatpush.bf16.xpose.msra.mxu0 0
    %3070 = vmatpush.bf16.xpose.msra.mxu0 0
    %3071 = vmatpush.bf16.xpose.msra.mxu0 0
    %3072 = vmatpush.bf16.xpose.msra.mxu0 0
    %3073 = vmatpush.bf16.xpose.msra.mxu0 %v3064
    %3074 = vmatmul.bf16.gmra.mxu0 %v3061
    %v3075 = vpop.f32.mrf.mxu0
    %v3076 = vadd.f32 0.0, %v3075
    %v3077 = vpop.f32.mrf.mxu0
    %3078 = vdwg.mxu0
    %3079 = vrot.lane.b32.xlu0 %v2699, 32
    %v3080 = vpop.permute.xlu0 %3079
    %v3081 = vrot.slane %v3080, 4
    %3082 = vrot.lane.b32.xlu0 %v2839, 32
    %v3083 = vpop.permute.xlu0 %3082
    %v3085 = vsel %vm316, %v3083, 0
    %v3088 = vsel %vm316, %v3081, 0
    %3090 = vmatpush.bf16.xpose.msra.mxu0 0
    %3091 = vmatpush.bf16.xpose.msra.mxu0 0
    %3092 = vmatpush.bf16.xpose.msra.mxu0 0
    %3093 = vmatpush.bf16.xpose.msra.mxu0 0
    %3094 = vmatpush.bf16.xpose.msra.mxu0 0
    %3095 = vmatpush.bf16.xpose.msra.mxu0 0
    %3096 = vmatpush.bf16.xpose.msra.mxu0 0
    %3097 = vmatpush.bf16.xpose.msra.mxu0 %v3088
    %3098 = vmatmul.bf16.gmra.mxu0 %v3085
    %v3099 = vpop.f32.mrf.mxu0
    %v3100 = vadd.f32 0.0, %v3099
    %v3101 = vpop.f32.mrf.mxu0
    %3102 = vdwg.mxu0
    %v3103 = vmul.f32 %v3076, 0.17677669
    %v3104 = vmul.f32 %v3100, 0.17677669
    %v3105 = vsel %vm360, %v3103, -inf
    %v3106 = vsel %vm360, %v3104, -inf
    %v3107 = vsel %vm363, %v3105, -inf
    %3108 = vmax.xlane.f32.xlu0 %v3107
    %v3109 = vpop.xlane.xlu0 %3108
    %v3110 = vsel %vm363, %v3106, -inf
    %3111 = vmax.xlane.f32.xlu0 %v3110
    %v3112 = vpop.xlane.xlu0 %3111
    %v3113 = vsub.f32 %v3105, %v3109
    %v3114 = vsub.f32 %v3106, %v3112
    %v3115 = vmul.f32 %v3113, 1.442695
    %v3116 = vpow.pop %v3115
    %v3117 = vmul.f32 %v3114, 1.442695
    %v3118 = vpow.pop %v3117
    %v3119 = vsel %vm363, %v3116, 0.0
    %3120 = vadd.xlane.f32.xlu0 %v3119
    %v3121 = vpop.xlane.xlu0 %3120
    %v3122 = vsel %vm363, %v3118, 0.0
    %3123 = vadd.xlane.f32.xlu0 %v3122
    %v3124 = vpop.xlane.xlu0 %3123
    %v3125 = vrcp.pop %v3121
    %v3126 = vrcp.pop %v3124
    %v3127 = vmul.f32 %v3116, %v3125
    %v3128 = vmul.f32 %v3118, %v3126
    %v3129 = vpack.c.bf16 %v3127, %v3127
    %v3130 = vpack.c.bf16 %v3128, %v3128
    %3131 = vrot.lane.b32.xlu0 %v2891, 32
    %v3132 = vpop.permute.xlu0 %3131
    %v3134 = vsel %vm363, %v3129, 0
    %v3137 = vsel %vm391, %v3132, 0
    %3139 = vmatpush.bf16.msra.mxu0 0
    %3140 = vmatpush.bf16.msra.mxu0 0
    %3141 = vmatpush.bf16.msra.mxu0 0
    %3142 = vmatpush.bf16.msra.mxu0 0
    %3143 = vmatpush.bf16.msra.mxu0 0
    %3144 = vmatpush.bf16.msra.mxu0 0
    %3145 = vmatpush.bf16.msra.mxu0 0
    %3146 = vmatpush.bf16.msra.mxu0 %v3137
    %3147 = vmatmul.bf16.gmra.mxu0 %v3134
    %v3148 = vpop.f32.mrf.mxu0
    %v3149 = vadd.f32 0.0, %v3148
    %v3150 = vpop.f32.mrf.mxu0
    %3151 = vdwg.mxu0
    %3152 = vrot.lane.b32.xlu0 %v2915, 32
    %v3153 = vpop.permute.xlu0 %3152
    %v3155 = vsel %vm363, %v3130, 0
    %v3158 = vsel %vm391, %v3153, 0
    %3160 = vmatpush.bf16.msra.mxu0 0
    %3161 = vmatpush.bf16.msra.mxu0 0
    %3162 = vmatpush.bf16.msra.mxu0 0
    %3163 = vmatpush.bf16.msra.mxu0 0
    %3164 = vmatpush.bf16.msra.mxu0 0
    %3165 = vmatpush.bf16.msra.mxu0 0
    %3166 = vmatpush.bf16.msra.mxu0 0
    %3167 = vmatpush.bf16.msra.mxu0 %v3158
    %3168 = vmatmul.bf16.gmra.mxu0 %v3155
    %v3169 = vpop.f32.mrf.mxu0
    %v3170 = vadd.f32 0.0, %v3169
    %v3171 = vpop.f32.mrf.mxu0
    %3172 = vdwg.mxu0
    %3175 = vrot.lane.b32.xlu0 %v2910, 32
    %v3176 = vpop.permute.xlu0 %3175
    %3177 = vrot.lane.b32.xlu0 %v2934, 32
    %v3178 = vpop.permute.xlu0 %3177
    %3183 = vrot.lane.b32.xlu0 %v3031, 64
    %v3184 = vpop.permute.xlu0 %3183
    %3185 = vrot.lane.b32.xlu0 %v3052, 64
    %v3186 = vpop.permute.xlu0 %3185
    %3191 = vrot.lane.b32.xlu0 %v3149, 96
    %v3192 = vpop.permute.xlu0 %3191
    %3193 = vrot.lane.b32.xlu0 %v3170, 96
    %v3194 = vpop.permute.xlu0 %3193
    %v3197 = vsel %vm316, %v2787, %v3176
    %v3198 = vsel %vm316, %v2806, %v3178
    %v3199 = vsel %vm817, %v3197, %v3184
    %v3200 = vsel %vm817, %v3198, %v3186
    %v3201 = vsel %vm820, %v3199, %v3192
    %v3202 = vsel %vm820, %v3200, %v3194
    %v3203 = vpack.c.bf16 %v3202, %v3201
    %s3204 = scalar_lea.vmem [#allocation5], 128
    %v3205 = vld [vmem:[%s3204] sm:$0xf]
    %v3206 = vld [vmem:[%s3204 + $0x4] sm:$0xf]
    %v3207 = vld [vmem:[%s3204 + $0x8] sm:$0xf]
    %v3208 = vld [vmem:[%s3204 + $0xc] sm:$0xf]
    %v3209 = vld [vmem:[%s3204 + $0x10] sm:$0xf]
    %v3210 = vld [vmem:[%s3204 + $0x14] sm:$0xf]
    %v3211 = vld [vmem:[%s3204 + $0x18] sm:$0xf]
    %v3212 = vld [vmem:[%s3204 + $0x1c] sm:$0xf]
    %v3213 = vld [vmem:[%s3204 + $0x20] sm:$0xf]
    %v3214 = vld [vmem:[%s3204 + $0x24] sm:$0xf]
    %v3215 = vld [vmem:[%s3204 + $0x28] sm:$0xf]
    %v3216 = vld [vmem:[%s3204 + $0x2c] sm:$0xf]
    %v3217 = vld [vmem:[%s3204 + $0x30] sm:$0xf]
    %v3218 = vld [vmem:[%s3204 + $0x34] sm:$0xf]
    %v3219 = vld [vmem:[%s3204 + $0x38] sm:$0xf]
    %v3220 = vld [vmem:[%s3204 + $0x3c] sm:$0xf]
    %v3221 = vperm.slane %v2487, 1
    %v3238 = vunpack.c.l.b16 %v3205
    %v3239 = vunpack.c.l.b16 %v3206
    %v3240 = vunpack.c.l.b16 %v3207
    %v3241 = vunpack.c.l.b16 %v3208
    %v3242 = vunpack.c.l.b16 %v3209
    %v3243 = vunpack.c.l.b16 %v3210
    %v3244 = vunpack.c.l.b16 %v3211
    %v3245 = vunpack.c.l.b16 %v3212
    %v3246 = vunpack.c.l.b16 %v3213
    %v3247 = vunpack.c.l.b16 %v3214
    %v3248 = vunpack.c.l.b16 %v3215
    %v3249 = vunpack.c.l.b16 %v3216
    %v3250 = vunpack.c.l.b16 %v3217
    %v3251 = vunpack.c.l.b16 %v3218
    %v3252 = vunpack.c.l.b16 %v3219
    %v3253 = vunpack.c.l.b16 %v3220
    %v3254 = vpack.c.b16 %v3239, %v3238
    %v3255 = vpack.c.b16 %v3241, %v3240
    %v3256 = vpack.c.b16 %v3243, %v3242
    %v3257 = vpack.c.b16 %v3245, %v3244
    %v3258 = vpack.c.b16 %v3247, %v3246
    %v3259 = vpack.c.b16 %v3249, %v3248
    %v3260 = vpack.c.b16 %v3251, %v3250
    %v3261 = vpack.c.b16 %v3253, %v3252
    %3270 = vmatpush.bf16.msra.mxu0 %v3261
    %3271 = vmatpush.bf16.msra.mxu0 %v3260
    %3272 = vmatpush.bf16.msra.mxu0 %v3259
    %3273 = vmatpush.bf16.msra.mxu0 %v3258
    %3274 = vmatpush.bf16.msra.mxu0 %v3257
    %3275 = vmatpush.bf16.msra.mxu0 %v3256
    %3276 = vmatpush.bf16.msra.mxu0 %v3255
    %3277 = vmatpush.bf16.msra.mxu0 %v3254
    %3278 = vmatmul.bf16.gmra.mxu0 %v3203
    %v3279 = vpop.f32.mrf.mxu0
    %v3280 = vadd.f32 %v3221, %v3279
    %v3281 = vpop.f32.mrf.mxu0
    %v3282 = vadd.f32 %v3221, %v3281
    %3283 = vdwg.mxu0
    %v3284 = vadd.f32 %v2484, %v3280
    %v3285 = vadd.f32 %v2485, %v3282
    %3286 = vadd.xlane.f32.xlu0 %v3284
    %v3287 = vpop.xlane.xlu0 %3286
    %3288 = vadd.xlane.f32.xlu0 %v3285
    %v3289 = vpop.xlane.xlu0 %3288
    %v3290 = vmul.f32 %v3287, %v915
    %v3291 = vmul.f32 %v3289, %v915
    %v3292 = vsub.f32 %v3284, %v3290
    %v3293 = vsub.f32 %v3285, %v3291
    %v3294 = vmul.f32 %v3292, %v3292
    %v3295 = vmul.f32 %v3293, %v3293
    %3296 = vadd.xlane.f32.xlu0 %v3294
    %v3297 = vpop.xlane.xlu0 %3296
    %3298 = vadd.xlane.f32.xlu0 %v3295
    %v3299 = vpop.xlane.xlu0 %3298
    %v3300 = vmul.f32 %v3297, %v915
    %v3301 = vmul.f32 %v3299, %v915
    %v3302 = vadd.f32 %v3300, 1e-05
    %v3303 = vadd.f32 %v3301, 1e-05
    %v3304 = vrsqrt.pop %v3302
    %v3305 = vmul.f32 %v3304, %v3302
    %v3306 = vmul.f32 %v3305, %v3304
    %v3307 = vmul.f32 0.5, %v3306
    %v3308 = vsub.f32 1.5, %v3307
    %v3309 = vmul.f32 %v3304, %v3308
    %vm3310 = vweird.f32 %v3302
    %vm3311 = vweird.f32 %v3304
    %vm3312 = vmor %vm3310, %vm3311
    %v3313 = vsel %vm3312, %v3304, %v3309
    %v3314 = vrsqrt.pop %v3303
    %v3315 = vmul.f32 %v3314, %v3303
    %v3316 = vmul.f32 %v3315, %v3314
    %v3317 = vmul.f32 0.5, %v3316
    %v3318 = vsub.f32 1.5, %v3317
    %v3319 = vmul.f32 %v3314, %v3318
    %vm3320 = vweird.f32 %v3303
    %vm3321 = vweird.f32 %v3314
    %vm3322 = vmor %vm3320, %vm3321
    %v3323 = vsel %vm3322, %v3314, %v3319
    %v3324 = vmul.f32 %v3292, %v3313
    %v3325 = vmul.f32 %v3293, %v3323
    %v3326 = vperm.slane %v2488, 1
    %v3327 = vmul.f32 %v3324, %v3326
    %v3328 = vmul.f32 %v3325, %v3326
    %v3329 = vperm.slane %v2489, 1
    %v3330 = vadd.f32 %v3327, %v3329
    %v3331 = vadd.f32 %v3328, %v3329
    %v3332 = vpack.c.bf16 %v3331, %v3330
    %s3333 = scalar_lea.vmem [#allocation7], 256
    %v3334 = vld [vmem:[%s3333] sm:$0xff]
    %v3335 = vld [vmem:[%s3333 + $0x8] sm:$0xff]
    %v3336 = vld [vmem:[%s3333 + $0x10] sm:$0xff]
    %v3337 = vld [vmem:[%s3333 + $0x18] sm:$0xff]
    %v3338 = vld [vmem:[%s3333 + $0x20] sm:$0xff]
    %v3339 = vld [vmem:[%s3333 + $0x28] sm:$0xff]
    %v3340 = vld [vmem:[%s3333 + $0x30] sm:$0xff]
    %v3341 = vld [vmem:[%s3333 + $0x38] sm:$0xff]
    %v3342 = vld [vmem:[%s3333 + $0x40] sm:$0xff]
    %v3343 = vld [vmem:[%s3333 + $0x48] sm:$0xff]
    %v3344 = vld [vmem:[%s3333 + $0x50] sm:$0xff]
    %v3345 = vld [vmem:[%s3333 + $0x58] sm:$0xff]
    %v3346 = vld [vmem:[%s3333 + $0x60] sm:$0xff]
    %v3347 = vld [vmem:[%s3333 + $0x68] sm:$0xff]
    %v3348 = vld [vmem:[%s3333 + $0x70] sm:$0xff]
    %v3349 = vld [vmem:[%s3333 + $0x78] sm:$0xff]
    %v3350 = vperm.slane %v2487, 2
    %v3351 = vperm.slane %v2488, 2
    %v3368 = vunpack.c.l.b16 %v3334
    %v3369 = vunpack.c.h.b16 %v3334
    %v3370 = vunpack.c.l.b16 %v3335
    %v3371 = vunpack.c.h.b16 %v3335
    %v3372 = vunpack.c.l.b16 %v3336
    %v3373 = vunpack.c.h.b16 %v3336
    %v3374 = vunpack.c.l.b16 %v3337
    %v3375 = vunpack.c.h.b16 %v3337
    %v3376 = vunpack.c.l.b16 %v3338
    %v3377 = vunpack.c.h.b16 %v3338
    %v3378 = vunpack.c.l.b16 %v3339
    %v3379 = vunpack.c.h.b16 %v3339
    %v3380 = vunpack.c.l.b16 %v3340
    %v3381 = vunpack.c.h.b16 %v3340
    %v3382 = vunpack.c.l.b16 %v3341
    %v3383 = vunpack.c.h.b16 %v3341
    %v3384 = vunpack.c.l.b16 %v3342
    %v3385 = vunpack.c.h.b16 %v3342
    %v3386 = vunpack.c.l.b16 %v3343
    %v3387 = vunpack.c.h.b16 %v3343
    %v3388 = vunpack.c.l.b16 %v3344
    %v3389 = vunpack.c.h.b16 %v3344
    %v3390 = vunpack.c.l.b16 %v3345
    %v3391 = vunpack.c.h.b16 %v3345
    %v3392 = vunpack.c.l.b16 %v3346
    %v3393 = vunpack.c.h.b16 %v3346
    %v3394 = vunpack.c.l.b16 %v3347
    %v3395 = vunpack.c.h.b16 %v3347
    %v3396 = vunpack.c.l.b16 %v3348
    %v3397 = vunpack.c.h.b16 %v3348
    %v3398 = vunpack.c.l.b16 %v3349
    %v3399 = vunpack.c.h.b16 %v3349
    %v3400 = vpack.c.b16 %v3370, %v3368
    %v3401 = vpack.c.b16 %v3371, %v3369
    %v3402 = vpack.c.b16 %v3374, %v3372
    %v3403 = vpack.c.b16 %v3375, %v3373
    %v3404 = vpack.c.b16 %v3378, %v3376
    %v3405 = vpack.c.b16 %v3379, %v3377
    %v3406 = vpack.c.b16 %v3382, %v3380
    %v3407 = vpack.c.b16 %v3383, %v3381
    %v3408 = vpack.c.b16 %v3386, %v3384
    %v3409 = vpack.c.b16 %v3387, %v3385
    %v3410 = vpack.c.b16 %v3390, %v3388
    %v3411 = vpack.c.b16 %v3391, %v3389
    %v3412 = vpack.c.b16 %v3394, %v3392
    %v3413 = vpack.c.b16 %v3395, %v3393
    %v3414 = vpack.c.b16 %v3398, %v3396
    %v3415 = vpack.c.b16 %v3399, %v3397
    %3432 = vmatpush.bf16.msra.mxu0 %v3414
    %3433 = vmatpush.bf16.msra.mxu0 %v3412
    %3434 = vmatpush.bf16.msra.mxu0 %v3410
    %3435 = vmatpush.bf16.msra.mxu0 %v3408
    %3436 = vmatpush.bf16.msra.mxu0 %v3406
    %3437 = vmatpush.bf16.msra.mxu0 %v3404
    %3438 = vmatpush.bf16.msra.mxu0 %v3402
    %3439 = vmatpush.bf16.msra.mxu0 %v3400
    %3440 = vmatmul.bf16.gmra.mxu0 %v3332
    %v3441 = vpop.f32.mrf.mxu0
    %v3442 = vadd.f32 %v3350, %v3441
    %v3443 = vpop.f32.mrf.mxu0
    %v3444 = vadd.f32 %v3350, %v3443
    %3445 = vdwg.mxu0
    %3446 = vmatpush.bf16.msra.mxu0 %v3415
    %3447 = vmatpush.bf16.msra.mxu0 %v3413
    %3448 = vmatpush.bf16.msra.mxu0 %v3411
    %3449 = vmatpush.bf16.msra.mxu0 %v3409
    %3450 = vmatpush.bf16.msra.mxu0 %v3407
    %3451 = vmatpush.bf16.msra.mxu0 %v3405
    %3452 = vmatpush.bf16.msra.mxu0 %v3403
    %3453 = vmatpush.bf16.msra.mxu0 %v3401
    %3454 = vmatmul.bf16.gmra.mxu0 %v3332
    %v3455 = vpop.f32.mrf.mxu0
    %v3456 = vadd.f32 %v3351, %v3455
    %v3457 = vpop.f32.mrf.mxu0
    %v3458 = vadd.f32 %v3351, %v3457
    %3459 = vdwg.mxu0
    %v3460 = vmax.f32 %v3442, 0.0
    %v3461 = vmax.f32 %v3456, 0.0
    %v3462 = vmax.f32 %v3444, 0.0
    %v3463 = vmax.f32 %v3458, 0.0
    %v3464 = vpack.c.bf16 %v3462, %v3460
    %v3465 = vpack.c.bf16 %v3463, %v3461
    %s3466 = scalar_lea.vmem [#allocation8], 256
    %v3467 = vld [vmem:[%s3466] sm:$0xf]
    %v3468 = vld [vmem:[%s3466 + $0x4] sm:$0xf]
    %v3469 = vld [vmem:[%s3466 + $0x8] sm:$0xf]
    %v3470 = vld [vmem:[%s3466 + $0xc] sm:$0xf]
    %v3471 = vld [vmem:[%s3466 + $0x10] sm:$0xf]
    %v3472 = vld [vmem:[%s3466 + $0x14] sm:$0xf]
    %v3473 = vld [vmem:[%s3466 + $0x18] sm:$0xf]
    %v3474 = vld [vmem:[%s3466 + $0x1c] sm:$0xf]
    %v3475 = vld [vmem:[%s3466 + $0x20] sm:$0xf]
    %v3476 = vld [vmem:[%s3466 + $0x24] sm:$0xf]
    %v3477 = vld [vmem:[%s3466 + $0x28] sm:$0xf]
    %v3478 = vld [vmem:[%s3466 + $0x2c] sm:$0xf]
    %v3479 = vld [vmem:[%s3466 + $0x30] sm:$0xf]
    %v3480 = vld [vmem:[%s3466 + $0x34] sm:$0xf]
    %v3481 = vld [vmem:[%s3466 + $0x38] sm:$0xf]
    %v3482 = vld [vmem:[%s3466 + $0x3c] sm:$0xf]
    %v3483 = vld [vmem:[%s3466 + $0x40] sm:$0xf]
    %v3484 = vld [vmem:[%s3466 + $0x44] sm:$0xf]
    %v3485 = vld [vmem:[%s3466 + $0x48] sm:$0xf]
    %v3486 = vld [vmem:[%s3466 + $0x4c] sm:$0xf]
    %v3487 = vld [vmem:[%s3466 + $0x50] sm:$0xf]
    %v3488 = vld [vmem:[%s3466 + $0x54] sm:$0xf]
    %v3489 = vld [vmem:[%s3466 + $0x58] sm:$0xf]
    %v3490 = vld [vmem:[%s3466 + $0x5c] sm:$0xf]
    %v3491 = vld [vmem:[%s3466 + $0x60] sm:$0xf]
    %v3492 = vld [vmem:[%s3466 + $0x64] sm:$0xf]
    %v3493 = vld [vmem:[%s3466 + $0x68] sm:$0xf]
    %v3494 = vld [vmem:[%s3466 + $0x6c] sm:$0xf]
    %v3495 = vld [vmem:[%s3466 + $0x70] sm:$0xf]
    %v3496 = vld [vmem:[%s3466 + $0x74] sm:$0xf]
    %v3497 = vld [vmem:[%s3466 + $0x78] sm:$0xf]
    %v3498 = vld [vmem:[%s3466 + $0x7c] sm:$0xf]
    %v3531 = vunpack.c.l.b16 %v3467
    %v3532 = vunpack.c.l.b16 %v3468
    %v3533 = vunpack.c.l.b16 %v3469
    %v3534 = vunpack.c.l.b16 %v3470
    %v3535 = vunpack.c.l.b16 %v3471
    %v3536 = vunpack.c.l.b16 %v3472
    %v3537 = vunpack.c.l.b16 %v3473
    %v3538 = vunpack.c.l.b16 %v3474
    %v3539 = vunpack.c.l.b16 %v3475
    %v3540 = vunpack.c.l.b16 %v3476
    %v3541 = vunpack.c.l.b16 %v3477
    %v3542 = vunpack.c.l.b16 %v3478
    %v3543 = vunpack.c.l.b16 %v3479
    %v3544 = vunpack.c.l.b16 %v3480
    %v3545 = vunpack.c.l.b16 %v3481
    %v3546 = vunpack.c.l.b16 %v3482
    %v3547 = vunpack.c.l.b16 %v3483
    %v3548 = vunpack.c.l.b16 %v3484
    %v3549 = vunpack.c.l.b16 %v3485
    %v3550 = vunpack.c.l.b16 %v3486
    %v3551 = vunpack.c.l.b16 %v3487
    %v3552 = vunpack.c.l.b16 %v3488
    %v3553 = vunpack.c.l.b16 %v3489
    %v3554 = vunpack.c.l.b16 %v3490
    %v3555 = vunpack.c.l.b16 %v3491
    %v3556 = vunpack.c.l.b16 %v3492
    %v3557 = vunpack.c.l.b16 %v3493
    %v3558 = vunpack.c.l.b16 %v3494
    %v3559 = vunpack.c.l.b16 %v3495
    %v3560 = vunpack.c.l.b16 %v3496
    %v3561 = vunpack.c.l.b16 %v3497
    %v3562 = vunpack.c.l.b16 %v3498
    %v3563 = vpack.c.b16 %v3532, %v3531
    %v3564 = vpack.c.b16 %v3534, %v3533
    %v3565 = vpack.c.b16 %v3536, %v3535
    %v3566 = vpack.c.b16 %v3538, %v3537
    %v3567 = vpack.c.b16 %v3540, %v3539
    %v3568 = vpack.c.b16 %v3542, %v3541
    %v3569 = vpack.c.b16 %v3544, %v3543
    %v3570 = vpack.c.b16 %v3546, %v3545
    %v3571 = vpack.c.b16 %v3548, %v3547
    %v3572 = vpack.c.b16 %v3550, %v3549
    %v3573 = vpack.c.b16 %v3552, %v3551
    %v3574 = vpack.c.b16 %v3554, %v3553
    %v3575 = vpack.c.b16 %v3556, %v3555
    %v3576 = vpack.c.b16 %v3558, %v3557
    %v3577 = vpack.c.b16 %v3560, %v3559
    %v3578 = vpack.c.b16 %v3562, %v3561
    %3595 = vmatpush.bf16.msra.mxu0 %v3570
    %3596 = vmatpush.bf16.msra.mxu0 %v3569
    %3597 = vmatpush.bf16.msra.mxu0 %v3568
    %3598 = vmatpush.bf16.msra.mxu0 %v3567
    %3599 = vmatpush.bf16.msra.mxu0 %v3566
    %3600 = vmatpush.bf16.msra.mxu0 %v3565
    %3601 = vmatpush.bf16.msra.mxu0 %v3564
    %3602 = vmatpush.bf16.msra.mxu0 %v3563
    %3603 = vmatmul.bf16.gmra.mxu0 %v3464
    %v3604 = vpop.f32.mrf.mxu0
    %v3605 = vadd.f32 0.0, %v3604
    %v3606 = vpop.f32.mrf.mxu0
    %v3607 = vadd.f32 0.0, %v3606
    %3608 = vdwg.mxu0
    %3609 = vmatpush.bf16.msra.mxu0 %v3578
    %3610 = vmatpush.bf16.msra.mxu0 %v3577
    %3611 = vmatpush.bf16.msra.mxu0 %v3576
    %3612 = vmatpush.bf16.msra.mxu0 %v3575
    %3613 = vmatpush.bf16.msra.mxu0 %v3574
    %3614 = vmatpush.bf16.msra.mxu0 %v3573
    %3615 = vmatpush.bf16.msra.mxu0 %v3572
    %3616 = vmatpush.bf16.msra.mxu0 %v3571
    %3617 = vmatmul.bf16.gmra.mxu0 %v3465
    %v3618 = vpop.f32.mrf.mxu0
    %v3619 = vadd.f32 %v3605, %v3618
    %v3620 = vpop.f32.mrf.mxu0
    %v3621 = vadd.f32 %v3607, %v3620
    %3622 = vdwg.mxu0
    %v3623 = vadd.f32 %v3330, %v3619
    %v3624 = vadd.f32 %v3331, %v3621
    %v3625 = vperm.slane %v2489, 2
    %v3626 = vadd.f32 %v3623, %v3625
    %v3627 = vadd.f32 %v3624, %v3625
    %3628 = vadd.xlane.f32.xlu0 %v3626
    %v3629 = vpop.xlane.xlu0 %3628
    %3630 = vadd.xlane.f32.xlu0 %v3627
    %v3631 = vpop.xlane.xlu0 %3630
    %v3632 = vmul.f32 %v3629, %v915
    %v3633 = vmul.f32 %v3631, %v915
    %v3634 = vsub.f32 %v3626, %v3632
    %v3635 = vsub.f32 %v3627, %v3633
    %v3636 = vmul.f32 %v3634, %v3634
    %v3637 = vmul.f32 %v3635, %v3635
    %3638 = vadd.xlane.f32.xlu0 %v3636
    %v3639 = vpop.xlane.xlu0 %3638
    %3640 = vadd.xlane.f32.xlu0 %v3637
    %v3641 = vpop.xlane.xlu0 %3640
    %v3642 = vmul.f32 %v3639, %v915
    %v3643 = vmul.f32 %v3641, %v915
    %v3644 = vadd.f32 %v3642, 1e-05
    %v3645 = vadd.f32 %v3643, 1e-05
    %v3646 = vrsqrt.pop %v3644
    %v3647 = vmul.f32 %v3646, %v3644
    %v3648 = vmul.f32 %v3647, %v3646
    %v3649 = vmul.f32 0.5, %v3648
    %v3650 = vsub.f32 1.5, %v3649
    %v3651 = vmul.f32 %v3646, %v3650
    %vm3652 = vweird.f32 %v3644
    %vm3653 = vweird.f32 %v3646
    %vm3654 = vmor %vm3652, %vm3653
    %v3655 = vsel %vm3654, %v3646, %v3651
    %v3656 = vrsqrt.pop %v3645
    %v3657 = vmul.f32 %v3656, %v3645
    %v3658 = vmul.f32 %v3657, %v3656
    %v3659 = vmul.f32 0.5, %v3658
    %v3660 = vsub.f32 1.5, %v3659
    %v3661 = vmul.f32 %v3656, %v3660
    %vm3662 = vweird.f32 %v3645
    %vm3663 = vweird.f32 %v3656
    %vm3664 = vmor %vm3662, %vm3663
    %v3665 = vsel %vm3664, %v3656, %v3661
    %v3666 = vmul.f32 %v3634, %v3655
    %v3667 = vmul.f32 %v3635, %v3665
    %v3668 = vperm.slane %v2487, 3
    %v3669 = vmul.f32 %v3666, %v3668
    %v3670 = vmul.f32 %v3667, %v3668
    %v3671 = vperm.slane %v2488, 3
    %v3672 = vadd.f32 %v3669, %v3671
    %v3673 = vadd.f32 %v3670, %v3671
    %s3674 = scalar_lea.vmem %s5, 72
    %v3675 = vld [vmem:[%s3674] sm:$0xff]
    %v3676 = vld [vmem:[%s3674 + $0x8] sm:$0xff]
    %v3677 = vld [vmem:[%s3674 + $0x10] sm:$0xff]
    %v3678 = vpack.c.bf16 %v3673, %v3672
    %s3679 = scalar_lea.vmem [#allocation2], 576
    %v3680 = vld [vmem:[%s3679] sm:$0xff]
    %v3681 = vld [vmem:[%s3679 + $0x8] sm:$0xf]
    %v3682 = vld [vmem:[%s3679 + $0xc] sm:$0xff]
    %v3683 = vld [vmem:[%s3679 + $0x14] sm:$0xf]
    %v3684 = vld [vmem:[%s3679 + $0x18] sm:$0xff]
    %v3685 = vld [vmem:[%s3679 + $0x20] sm:$0xf]
    %v3686 = vld [vmem:[%s3679 + $0x24] sm:$0xff]
    %v3687 = vld [vmem:[%s3679 + $0x2c] sm:$0xf]
    %v3688 = vld [vmem:[%s3679 + $0x30] sm:$0xff]
    %v3689 = vld [vmem:[%s3679 + $0x38] sm:$0xf]
    %v3690 = vld [vmem:[%s3679 + $0x3c] sm:$0xff]
    %v3691 = vld [vmem:[%s3679 + $0x44] sm:$0xf]
    %v3692 = vld [vmem:[%s3679 + $0x48] sm:$0xff]
    %v3693 = vld [vmem:[%s3679 + $0x50] sm:$0xf]
    %v3694 = vld [vmem:[%s3679 + $0x54] sm:$0xff]
    %v3695 = vld [vmem:[%s3679 + $0x5c] sm:$0xf]
    %v3696 = vld [vmem:[%s3679 + $0x60] sm:$0xff]
    %v3697 = vld [vmem:[%s3679 + $0x68] sm:$0xf]
    %v3698 = vld [vmem:[%s3679 + $0x6c] sm:$0xff]
    %v3699 = vld [vmem:[%s3679 + $0x74] sm:$0xf]
    %v3700 = vld [vmem:[%s3679 + $0x78] sm:$0xff]
    %v3701 = vld [vmem:[%s3679 + $0x80] sm:$0xf]
    %v3702 = vld [vmem:[%s3679 + $0x84] sm:$0xff]
    %v3703 = vld [vmem:[%s3679 + $0x8c] sm:$0xf]
    %v3704 = vld [vmem:[%s3679 + $0x90] sm:$0xff]
    %v3705 = vld [vmem:[%s3679 + $0x98] sm:$0xf]
    %v3706 = vld [vmem:[%s3679 + $0x9c] sm:$0xff]
    %v3707 = vld [vmem:[%s3679 + $0xa4] sm:$0xf]
    %v3708 = vld [vmem:[%s3679 + $0xa8] sm:$0xff]
    %v3709 = vld [vmem:[%s3679 + $0xb0] sm:$0xf]
    %v3710 = vld [vmem:[%s3679 + $0xb4] sm:$0xff]
    %v3711 = vld [vmem:[%s3679 + $0xbc] sm:$0xf]
    %v3712 = vperm.slane %v3675, 0
    %v3713 = vperm.slane %v3676, 0
    %v3714 = vperm.slane %v3677, 0
    %v3747 = vunpack.c.l.b16 %v3680
    %v3748 = vunpack.c.h.b16 %v3680
    %v3749 = vunpack.c.l.b16 %v3681
    %v3750 = vunpack.c.l.b16 %v3682
    %v3751 = vunpack.c.h.b16 %v3682
    %v3752 = vunpack.c.l.b16 %v3683
    %v3753 = vunpack.c.l.b16 %v3684
    %v3754 = vunpack.c.h.b16 %v3684
    %v3755 = vunpack.c.l.b16 %v3685
    %v3756 = vunpack.c.l.b16 %v3686
    %v3757 = vunpack.c.h.b16 %v3686
    %v3758 = vunpack.c.l.b16 %v3687
    %v3759 = vunpack.c.l.b16 %v3688
    %v3760 = vunpack.c.h.b16 %v3688
    %v3761 = vunpack.c.l.b16 %v3689
    %v3762 = vunpack.c.l.b16 %v3690
    %v3763 = vunpack.c.h.b16 %v3690
    %v3764 = vunpack.c.l.b16 %v3691
    %v3765 = vunpack.c.l.b16 %v3692
    %v3766 = vunpack.c.h.b16 %v3692
    %v3767 = vunpack.c.l.b16 %v3693
    %v3768 = vunpack.c.l.b16 %v3694
    %v3769 = vunpack.c.h.b16 %v3694
    %v3770 = vunpack.c.l.b16 %v3695
    %v3771 = vunpack.c.l.b16 %v3696
    %v3772 = vunpack.c.h.b16 %v3696
    %v3773 = vunpack.c.l.b16 %v3697
    %v3774 = vunpack.c.l.b16 %v3698
    %v3775 = vunpack.c.h.b16 %v3698
    %v3776 = vunpack.c.l.b16 %v3699
    %v3777 = vunpack.c.l.b16 %v3700
    %v3778 = vunpack.c.h.b16 %v3700
    %v3779 = vunpack.c.l.b16 %v3701
    %v3780 = vunpack.c.l.b16 %v3702
    %v3781 = vunpack.c.h.b16 %v3702
    %v3782 = vunpack.c.l.b16 %v3703
    %v3783 = vunpack.c.l.b16 %v3704
    %v3784 = vunpack.c.h.b16 %v3704
    %v3785 = vunpack.c.l.b16 %v3705
    %v3786 = vunpack.c.l.b16 %v3706
    %v3787 = vunpack.c.h.b16 %v3706
    %v3788 = vunpack.c.l.b16 %v3707
    %v3789 = vunpack.c.l.b16 %v3708
    %v3790 = vunpack.c.h.b16 %v3708
    %v3791 = vunpack.c.l.b16 %v3709
    %v3792 = vunpack.c.l.b16 %v3710
    %v3793 = vunpack.c.h.b16 %v3710
    %v3794 = vunpack.c.l.b16 %v3711
    %v3795 = vpack.c.b16 %v3750, %v3747
    %v3796 = vpack.c.b16 %v3751, %v3748
    %v3797 = vpack.c.b16 %v3752, %v3749
    %v3798 = vpack.c.b16 %v3756, %v3753
    %v3799 = vpack.c.b16 %v3757, %v3754
    %v3800 = vpack.c.b16 %v3758, %v3755
    %v3801 = vpack.c.b16 %v3762, %v3759
    %v3802 = vpack.c.b16 %v3763, %v3760
    %v3803 = vpack.c.b16 %v3764, %v3761
    %v3804 = vpack.c.b16 %v3768, %v3765
    %v3805 = vpack.c.b16 %v3769, %v3766
    %v3806 = vpack.c.b16 %v3770, %v3767
    %v3807 = vpack.c.b16 %v3774, %v3771
    %v3808 = vpack.c.b16 %v3775, %v3772
    %v3809 = vpack.c.b16 %v3776, %v3773
    %v3810 = vpack.c.b16 %v3780, %v3777
    %v3811 = vpack.c.b16 %v3781, %v3778
    %v3812 = vpack.c.b16 %v3782, %v3779
    %v3813 = vpack.c.b16 %v3786, %v3783
    %v3814 = vpack.c.b16 %v3787, %v3784
    %v3815 = vpack.c.b16 %v3788, %v3785
    %v3816 = vpack.c.b16 %v3792, %v3789
    %v3817 = vpack.c.b16 %v3793, %v3790
    %v3818 = vpack.c.b16 %v3794, %v3791
    %3843 = vmatpush.bf16.msra.mxu0 %v3816
    %3844 = vmatpush.bf16.msra.mxu0 %v3813
    %3845 = vmatpush.bf16.msra.mxu0 %v3810
    %3846 = vmatpush.bf16.msra.mxu0 %v3807
    %3847 = vmatpush.bf16.msra.mxu0 %v3804
    %3848 = vmatpush.bf16.msra.mxu0 %v3801
    %3849 = vmatpush.bf16.msra.mxu0 %v3798
    %3850 = vmatpush.bf16.msra.mxu0 %v3795
    %3851 = vmatmul.bf16.gmra.mxu0 %v3678
    %v3852 = vpop.f32.mrf.mxu0
    %v3853 = vadd.f32 %v3712, %v3852
    %v3854 = vpop.f32.mrf.mxu0
    %v3855 = vadd.f32 %v3712, %v3854
    %3856 = vdwg.mxu0
    %3857 = vmatpush.bf16.msra.mxu0 %v3817
    %3858 = vmatpush.bf16.msra.mxu0 %v3814
    %3859 = vmatpush.bf16.msra.mxu0 %v3811
    %3860 = vmatpush.bf16.msra.mxu0 %v3808
    %3861 = vmatpush.bf16.msra.mxu0 %v3805
    %3862 = vmatpush.bf16.msra.mxu0 %v3802
    %3863 = vmatpush.bf16.msra.mxu0 %v3799
    %3864 = vmatpush.bf16.msra.mxu0 %v3796
    %3865 = vmatmul.bf16.gmra.mxu0 %v3678
    %v3866 = vpop.f32.mrf.mxu0
    %v3867 = vadd.f32 %v3713, %v3866
    %v3868 = vpop.f32.mrf.mxu0
    %v3869 = vadd.f32 %v3713, %v3868
    %3870 = vdwg.mxu0
    %3871 = vmatpush.bf16.msra.mxu0 %v3818
    %3872 = vmatpush.bf16.msra.mxu0 %v3815
    %3873 = vmatpush.bf16.msra.mxu0 %v3812
    %3874 = vmatpush.bf16.msra.mxu0 %v3809
    %3875 = vmatpush.bf16.msra.mxu0 %v3806
    %3876 = vmatpush.bf16.msra.mxu0 %v3803
    %3877 = vmatpush.bf16.msra.mxu0 %v3800
    %3878 = vmatpush.bf16.msra.mxu0 %v3797
    %3879 = vmatmul.bf16.gmra.mxu0 %v3678
    %v3880 = vpop.f32.mrf.mxu0
    %v3881 = vadd.f32 %v3714, %v3880
    %v3882 = vpop.f32.mrf.mxu0
    %v3883 = vadd.f32 %v3714, %v3882
    %3884 = vdwg.mxu0
    %v3885 = vpack.c.bf16 %v3867, %v3853
    %v3886 = vpack.c.bf16 %v3881, %v3881
    %v3887 = vpack.c.bf16 %v3869, %v3855
    %v3888 = vpack.c.bf16 %v3883, %v3883
    %v3890 = vrot.slane %v3885, 4
    %v3892 = vsel %vm316, %v3885, 0
    %v3895 = vsel %vm316, %v3890, 0
    %3897 = vmatpush.bf16.xpose.msra.mxu0 0
    %3898 = vmatpush.bf16.xpose.msra.mxu0 0
    %3899 = vmatpush.bf16.xpose.msra.mxu0 0
    %3900 = vmatpush.bf16.xpose.msra.mxu0 0
    %3901 = vmatpush.bf16.xpose.msra.mxu0 0
    %3902 = vmatpush.bf16.xpose.msra.mxu0 0
    %3903 = vmatpush.bf16.xpose.msra.mxu0 0
    %3904 = vmatpush.bf16.xpose.msra.mxu0 %v3895
    %3905 = vmatmul.bf16.gmra.mxu0 %v3892
    %v3906 = vpop.f32.mrf.mxu0
    %v3907 = vadd.f32 0.0, %v3906
    %v3908 = vpop.f32.mrf.mxu0
    %3909 = vdwg.mxu0
    %v3911 = vrot.slane %v3887, 4
    %v3913 = vsel %vm316, %v3887, 0
    %v3916 = vsel %vm316, %v3911, 0
    %3918 = vmatpush.bf16.xpose.msra.mxu0 0
    %3919 = vmatpush.bf16.xpose.msra.mxu0 0
    %3920 = vmatpush.bf16.xpose.msra.mxu0 0
    %3921 = vmatpush.bf16.xpose.msra.mxu0 0
    %3922 = vmatpush.bf16.xpose.msra.mxu0 0
    %3923 = vmatpush.bf16.xpose.msra.mxu0 0
    %3924 = vmatpush.bf16.xpose.msra.mxu0 0
    %3925 = vmatpush.bf16.xpose.msra.mxu0 %v3916
    %3926 = vmatmul.bf16.gmra.mxu0 %v3913
    %v3927 = vpop.f32.mrf.mxu0
    %v3928 = vadd.f32 0.0, %v3927
    %v3929 = vpop.f32.mrf.mxu0
    %3930 = vdwg.mxu0
    %v3931 = vmul.f32 %v3907, 0.17677669
    %v3932 = vmul.f32 %v3928, 0.17677669
    %v3933 = vsel %vm360, %v3931, -inf
    %v3934 = vsel %vm360, %v3932, -inf
    %v3935 = vsel %vm363, %v3933, -inf
    %3936 = vmax.xlane.f32.xlu0 %v3935
    %v3937 = vpop.xlane.xlu0 %3936
    %v3938 = vsel %vm363, %v3934, -inf
    %3939 = vmax.xlane.f32.xlu0 %v3938
    %v3940 = vpop.xlane.xlu0 %3939
    %v3941 = vsub.f32 %v3933, %v3937
    %v3942 = vsub.f32 %v3934, %v3940
    %v3943 = vmul.f32 %v3941, 1.442695
    %v3944 = vpow.pop %v3943
    %v3945 = vmul.f32 %v3942, 1.442695
    %v3946 = vpow.pop %v3945
    %v3947 = vsel %vm363, %v3944, 0.0
    %3948 = vadd.xlane.f32.xlu0 %v3947
    %v3949 = vpop.xlane.xlu0 %3948
    %v3950 = vsel %vm363, %v3946, 0.0
    %3951 = vadd.xlane.f32.xlu0 %v3950
    %v3952 = vpop.xlane.xlu0 %3951
    %v3953 = vrcp.pop %v3949
    %v3954 = vrcp.pop %v3952
    %v3955 = vmul.f32 %v3944, %v3953
    %v3956 = vmul.f32 %v3946, %v3954
    %v3957 = vpack.c.bf16 %v3955, %v3955
    %v3958 = vpack.c.bf16 %v3956, %v3956
    %v3960 = vsel %vm363, %v3957, 0
    %v3963 = vsel %vm391, %v3886, 0
    %3965 = vmatpush.bf16.msra.mxu0 0
    %3966 = vmatpush.bf16.msra.mxu0 0
    %3967 = vmatpush.bf16.msra.mxu0 0
    %3968 = vmatpush.bf16.msra.mxu0 0
    %3969 = vmatpush.bf16.msra.mxu0 0
    %3970 = vmatpush.bf16.msra.mxu0 0
    %3971 = vmatpush.bf16.msra.mxu0 0
    %3972 = vmatpush.bf16.msra.mxu0 %v3963
    %3973 = vmatmul.bf16.gmra.mxu0 %v3960
    %v3974 = vpop.f32.mrf.mxu0
    %v3975 = vadd.f32 0.0, %v3974
    %v3976 = vpop.f32.mrf.mxu0
    %3977 = vdwg.mxu0
    %v3979 = vsel %vm363, %v3958, 0
    %v3982 = vsel %vm391, %v3888, 0
    %3984 = vmatpush.bf16.msra.mxu0 0
    %3985 = vmatpush.bf16.msra.mxu0 0
    %3986 = vmatpush.bf16.msra.mxu0 0
    %3987 = vmatpush.bf16.msra.mxu0 0
    %3988 = vmatpush.bf16.msra.mxu0 0
    %3989 = vmatpush.bf16.msra.mxu0 0
    %3990 = vmatpush.bf16.msra.mxu0 0
    %3991 = vmatpush.bf16.msra.mxu0 %v3982
    %3992 = vmatmul.bf16.gmra.mxu0 %v3979
    %v3993 = vpop.f32.mrf.mxu0
    %v3994 = vadd.f32 0.0, %v3993
    %v3995 = vpop.f32.mrf.mxu0
    %3996 = vdwg.mxu0
    %3997 = vrot.lane.b32.xlu0 %v3885, 96
    %v3998 = vpop.permute.xlu0 %3997
    %v3999 = vrot.slane %v3998, 4
    %v4000 = vunpack.c.l.b16 %v3885
    %v4001 = vpack.c.b16 %v4000, %v4000
    %4002 = vrot.lane.b32.xlu0 %v4001, 96
    %v4003 = vpop.permute.xlu0 %4002
    %v4005 = vsel %vm316, %v4003, 0
    %v4008 = vsel %vm316, %v3999, 0
    %4010 = vmatpush.bf16.xpose.msra.mxu0 0
    %4011 = vmatpush.bf16.xpose.msra.mxu0 0
    %4012 = vmatpush.bf16.xpose.msra.mxu0 0
    %4013 = vmatpush.bf16.xpose.msra.mxu0 0
    %4014 = vmatpush.bf16.xpose.msra.mxu0 0
    %4015 = vmatpush.bf16.xpose.msra.mxu0 0
    %4016 = vmatpush.bf16.xpose.msra.mxu0 0
    %4017 = vmatpush.bf16.xpose.msra.mxu0 %v4008
    %4018 = vmatmul.bf16.gmra.mxu0 %v4005
    %v4019 = vpop.f32.mrf.mxu0
    %v4020 = vadd.f32 0.0, %v4019
    %v4021 = vpop.f32.mrf.mxu0
    %4022 = vdwg.mxu0
    %4023 = vrot.lane.b32.xlu0 %v3887, 96
    %v4024 = vpop.permute.xlu0 %4023
    %v4025 = vrot.slane %v4024, 4
    %v4026 = vunpack.c.l.b16 %v3887
    %v4027 = vpack.c.b16 %v4026, %v4026
    %4028 = vrot.lane.b32.xlu0 %v4027, 96
    %v4029 = vpop.permute.xlu0 %4028
    %v4031 = vsel %vm316, %v4029, 0
    %v4034 = vsel %vm316, %v4025, 0
    %4036 = vmatpush.bf16.xpose.msra.mxu0 0
    %4037 = vmatpush.bf16.xpose.msra.mxu0 0
    %4038 = vmatpush.bf16.xpose.msra.mxu0 0
    %4039 = vmatpush.bf16.xpose.msra.mxu0 0
    %4040 = vmatpush.bf16.xpose.msra.mxu0 0
    %4041 = vmatpush.bf16.xpose.msra.mxu0 0
    %4042 = vmatpush.bf16.xpose.msra.mxu0 0
    %4043 = vmatpush.bf16.xpose.msra.mxu0 %v4034
    %4044 = vmatmul.bf16.gmra.mxu0 %v4031
    %v4045 = vpop.f32.mrf.mxu0
    %v4046 = vadd.f32 0.0, %v4045
    %v4047 = vpop.f32.mrf.mxu0
    %4048 = vdwg.mxu0
    %v4049 = vmul.f32 %v4020, 0.17677669
    %v4050 = vmul.f32 %v4046, 0.17677669
    %v4051 = vsel %vm360, %v4049, -inf
    %v4052 = vsel %vm360, %v4050, -inf
    %v4053 = vsel %vm363, %v4051, -inf
    %4054 = vmax.xlane.f32.xlu0 %v4053
    %v4055 = vpop.xlane.xlu0 %4054
    %v4056 = vsel %vm363, %v4052, -inf
    %4057 = vmax.xlane.f32.xlu0 %v4056
    %v4058 = vpop.xlane.xlu0 %4057
    %v4059 = vsub.f32 %v4051, %v4055
    %v4060 = vsub.f32 %v4052, %v4058
    %v4061 = vmul.f32 %v4059, 1.442695
    %v4062 = vpow.pop %v4061
    %v4063 = vmul.f32 %v4060, 1.442695
    %v4064 = vpow.pop %v4063
    %v4065 = vsel %vm363, %v4062, 0.0
    %4066 = vadd.xlane.f32.xlu0 %v4065
    %v4067 = vpop.xlane.xlu0 %4066
    %v4068 = vsel %vm363, %v4064, 0.0
    %4069 = vadd.xlane.f32.xlu0 %v4068
    %v4070 = vpop.xlane.xlu0 %4069
    %v4071 = vrcp.pop %v4067
    %v4072 = vrcp.pop %v4070
    %v4073 = vmul.f32 %v4062, %v4071
    %v4074 = vmul.f32 %v4064, %v4072
    %v4075 = vpack.c.bf16 %v4073, %v4073
    %v4076 = vpack.c.bf16 %v4074, %v4074
    %v4078 = vunpack.c.l.b16 %v3886
    %v4079 = vpack.c.b16 %v4078, %v4078
    %4080 = vrot.lane.b32.xlu0 %v4079, 96
    %v4081 = vpop.permute.xlu0 %4080
    %v4083 = vsel %vm363, %v4075, 0
    %v4086 = vsel %vm391, %v4081, 0
    %4088 = vmatpush.bf16.msra.mxu0 0
    %4089 = vmatpush.bf16.msra.mxu0 0
    %4090 = vmatpush.bf16.msra.mxu0 0
    %4091 = vmatpush.bf16.msra.mxu0 0
    %4092 = vmatpush.bf16.msra.mxu0 0
    %4093 = vmatpush.bf16.msra.mxu0 0
    %4094 = vmatpush.bf16.msra.mxu0 0
    %4095 = vmatpush.bf16.msra.mxu0 %v4086
    %4096 = vmatmul.bf16.gmra.mxu0 %v4083
    %v4097 = vpop.f32.mrf.mxu0
    %v4098 = vadd.f32 0.0, %v4097
    %v4099 = vpop.f32.mrf.mxu0
    %4100 = vdwg.mxu0
    %v4102 = vunpack.c.l.b16 %v3888
    %v4103 = vpack.c.b16 %v4102, %v4102
    %4104 = vrot.lane.b32.xlu0 %v4103, 96
    %v4105 = vpop.permute.xlu0 %4104
    %v4107 = vsel %vm363, %v4076, 0
    %v4110 = vsel %vm391, %v4105, 0
    %4112 = vmatpush.bf16.msra.mxu0 0
    %4113 = vmatpush.bf16.msra.mxu0 0
    %4114 = vmatpush.bf16.msra.mxu0 0
    %4115 = vmatpush.bf16.msra.mxu0 0
    %4116 = vmatpush.bf16.msra.mxu0 0
    %4117 = vmatpush.bf16.msra.mxu0 0
    %4118 = vmatpush.bf16.msra.mxu0 0
    %4119 = vmatpush.bf16.msra.mxu0 %v4110
    %4120 = vmatmul.bf16.gmra.mxu0 %v4107
    %v4121 = vpop.f32.mrf.mxu0
    %v4122 = vadd.f32 0.0, %v4121
    %v4123 = vpop.f32.mrf.mxu0
    %4124 = vdwg.mxu0
    %4125 = vrot.lane.b32.xlu0 %v3885, 64
    %v4126 = vpop.permute.xlu0 %4125
    %v4127 = vrot.slane %v4126, 4
    %4128 = vrot.lane.b32.xlu0 %v4001, 64
    %v4129 = vpop.permute.xlu0 %4128
    %v4131 = vsel %vm316, %v4129, 0
    %v4134 = vsel %vm316, %v4127, 0
    %4136 = vmatpush.bf16.xpose.msra.mxu0 0
    %4137 = vmatpush.bf16.xpose.msra.mxu0 0
    %4138 = vmatpush.bf16.xpose.msra.mxu0 0
    %4139 = vmatpush.bf16.xpose.msra.mxu0 0
    %4140 = vmatpush.bf16.xpose.msra.mxu0 0
    %4141 = vmatpush.bf16.xpose.msra.mxu0 0
    %4142 = vmatpush.bf16.xpose.msra.mxu0 0
    %4143 = vmatpush.bf16.xpose.msra.mxu0 %v4134
    %4144 = vmatmul.bf16.gmra.mxu0 %v4131
    %v4145 = vpop.f32.mrf.mxu0
    %v4146 = vadd.f32 0.0, %v4145
    %v4147 = vpop.f32.mrf.mxu0
    %4148 = vdwg.mxu0
    %4149 = vrot.lane.b32.xlu0 %v3887, 64
    %v4150 = vpop.permute.xlu0 %4149
    %v4151 = vrot.slane %v4150, 4
    %4152 = vrot.lane.b32.xlu0 %v4027, 64
    %v4153 = vpop.permute.xlu0 %4152
    %v4155 = vsel %vm316, %v4153, 0
    %v4158 = vsel %vm316, %v4151, 0
    %4160 = vmatpush.bf16.xpose.msra.mxu0 0
    %4161 = vmatpush.bf16.xpose.msra.mxu0 0
    %4162 = vmatpush.bf16.xpose.msra.mxu0 0
    %4163 = vmatpush.bf16.xpose.msra.mxu0 0
    %4164 = vmatpush.bf16.xpose.msra.mxu0 0
    %4165 = vmatpush.bf16.xpose.msra.mxu0 0
    %4166 = vmatpush.bf16.xpose.msra.mxu0 0
    %4167 = vmatpush.bf16.xpose.msra.mxu0 %v4158
    %4168 = vmatmul.bf16.gmra.mxu0 %v4155
    %v4169 = vpop.f32.mrf.mxu0
    %v4170 = vadd.f32 0.0, %v4169
    %v4171 = vpop.f32.mrf.mxu0
    %4172 = vdwg.mxu0
    %v4173 = vmul.f32 %v4146, 0.17677669
    %v4174 = vmul.f32 %v4170, 0.17677669
    %v4175 = vsel %vm360, %v4173, -inf
    %v4176 = vsel %vm360, %v4174, -inf
    %v4177 = vsel %vm363, %v4175, -inf
    %4178 = vmax.xlane.f32.xlu0 %v4177
    %v4179 = vpop.xlane.xlu0 %4178
    %v4180 = vsel %vm363, %v4176, -inf
    %4181 = vmax.xlane.f32.xlu0 %v4180
    %v4182 = vpop.xlane.xlu0 %4181
    %v4183 = vsub.f32 %v4175, %v4179
    %v4184 = vsub.f32 %v4176, %v4182
    %v4185 = vmul.f32 %v4183, 1.442695
    %v4186 = vpow.pop %v4185
    %v4187 = vmul.f32 %v4184, 1.442695
    %v4188 = vpow.pop %v4187
    %v4189 = vsel %vm363, %v4186, 0.0
    %4190 = vadd.xlane.f32.xlu0 %v4189
    %v4191 = vpop.xlane.xlu0 %4190
    %v4192 = vsel %vm363, %v4188, 0.0
    %4193 = vadd.xlane.f32.xlu0 %v4192
    %v4194 = vpop.xlane.xlu0 %4193
    %v4195 = vrcp.pop %v4191
    %v4196 = vrcp.pop %v4194
    %v4197 = vmul.f32 %v4186, %v4195
    %v4198 = vmul.f32 %v4188, %v4196
    %v4199 = vpack.c.bf16 %v4197, %v4197
    %v4200 = vpack.c.bf16 %v4198, %v4198
    %4201 = vrot.lane.b32.xlu0 %v4079, 64
    %v4202 = vpop.permute.xlu0 %4201
    %v4204 = vsel %vm363, %v4199, 0
    %v4207 = vsel %vm391, %v4202, 0
    %4209 = vmatpush.bf16.msra.mxu0 0
    %4210 = vmatpush.bf16.msra.mxu0 0
    %4211 = vmatpush.bf16.msra.mxu0 0
    %4212 = vmatpush.bf16.msra.mxu0 0
    %4213 = vmatpush.bf16.msra.mxu0 0
    %4214 = vmatpush.bf16.msra.mxu0 0
    %4215 = vmatpush.bf16.msra.mxu0 0
    %4216 = vmatpush.bf16.msra.mxu0 %v4207
    %4217 = vmatmul.bf16.gmra.mxu0 %v4204
    %v4218 = vpop.f32.mrf.mxu0
    %v4219 = vadd.f32 0.0, %v4218
    %v4220 = vpop.f32.mrf.mxu0
    %4221 = vdwg.mxu0
    %4222 = vrot.lane.b32.xlu0 %v4103, 64
    %v4223 = vpop.permute.xlu0 %4222
    %v4225 = vsel %vm363, %v4200, 0
    %v4228 = vsel %vm391, %v4223, 0
    %4230 = vmatpush.bf16.msra.mxu0 0
    %4231 = vmatpush.bf16.msra.mxu0 0
    %4232 = vmatpush.bf16.msra.mxu0 0
    %4233 = vmatpush.bf16.msra.mxu0 0
    %4234 = vmatpush.bf16.msra.mxu0 0
    %4235 = vmatpush.bf16.msra.mxu0 0
    %4236 = vmatpush.bf16.msra.mxu0 0
    %4237 = vmatpush.bf16.msra.mxu0 %v4228
    %4238 = vmatmul.bf16.gmra.mxu0 %v4225
    %v4239 = vpop.f32.mrf.mxu0
    %v4240 = vadd.f32 0.0, %v4239
    %v4241 = vpop.f32.mrf.mxu0
    %4242 = vdwg.mxu0
    %4243 = vrot.lane.b32.xlu0 %v3885, 32
    %v4244 = vpop.permute.xlu0 %4243
    %v4245 = vrot.slane %v4244, 4
    %4246 = vrot.lane.b32.xlu0 %v4001, 32
    %v4247 = vpop.permute.xlu0 %4246
    %v4249 = vsel %vm316, %v4247, 0
    %v4252 = vsel %vm316, %v4245, 0
    %4254 = vmatpush.bf16.xpose.msra.mxu0 0
    %4255 = vmatpush.bf16.xpose.msra.mxu0 0
    %4256 = vmatpush.bf16.xpose.msra.mxu0 0
    %4257 = vmatpush.bf16.xpose.msra.mxu0 0
    %4258 = vmatpush.bf16.xpose.msra.mxu0 0
    %4259 = vmatpush.bf16.xpose.msra.mxu0 0
    %4260 = vmatpush.bf16.xpose.msra.mxu0 0
    %4261 = vmatpush.bf16.xpose.msra.mxu0 %v4252
    %4262 = vmatmul.bf16.gmra.mxu0 %v4249
    %v4263 = vpop.f32.mrf.mxu0
    %v4264 = vadd.f32 0.0, %v4263
    %v4265 = vpop.f32.mrf.mxu0
    %4266 = vdwg.mxu0
    %4267 = vrot.lane.b32.xlu0 %v3887, 32
    %v4268 = vpop.permute.xlu0 %4267
    %v4269 = vrot.slane %v4268, 4
    %4270 = vrot.lane.b32.xlu0 %v4027, 32
    %v4271 = vpop.permute.xlu0 %4270
    %v4273 = vsel %vm316, %v4271, 0
    %v4276 = vsel %vm316, %v4269, 0
    %4278 = vmatpush.bf16.xpose.msra.mxu0 0
    %4279 = vmatpush.bf16.xpose.msra.mxu0 0
    %4280 = vmatpush.bf16.xpose.msra.mxu0 0
    %4281 = vmatpush.bf16.xpose.msra.mxu0 0
    %4282 = vmatpush.bf16.xpose.msra.mxu0 0
    %4283 = vmatpush.bf16.xpose.msra.mxu0 0
    %4284 = vmatpush.bf16.xpose.msra.mxu0 0
    %4285 = vmatpush.bf16.xpose.msra.mxu0 %v4276
    %4286 = vmatmul.bf16.gmra.mxu0 %v4273
    %v4287 = vpop.f32.mrf.mxu0
    %v4288 = vadd.f32 0.0, %v4287
    %v4289 = vpop.f32.mrf.mxu0
    %4290 = vdwg.mxu0
    %v4291 = vmul.f32 %v4264, 0.17677669
    %v4292 = vmul.f32 %v4288, 0.17677669
    %v4293 = vsel %vm360, %v4291, -inf
    %v4294 = vsel %vm360, %v4292, -inf
    %v4295 = vsel %vm363, %v4293, -inf
    %4296 = vmax.xlane.f32.xlu0 %v4295
    %v4297 = vpop.xlane.xlu0 %4296
    %v4298 = vsel %vm363, %v4294, -inf
    %4299 = vmax.xlane.f32.xlu0 %v4298
    %v4300 = vpop.xlane.xlu0 %4299
    %v4301 = vsub.f32 %v4293, %v4297
    %v4302 = vsub.f32 %v4294, %v4300
    %v4303 = vmul.f32 %v4301, 1.442695
    %v4304 = vpow.pop %v4303
    %v4305 = vmul.f32 %v4302, 1.442695
    %v4306 = vpow.pop %v4305
    %v4307 = vsel %vm363, %v4304, 0.0
    %4308 = vadd.xlane.f32.xlu0 %v4307
    %v4309 = vpop.xlane.xlu0 %4308
    %v4310 = vsel %vm363, %v4306, 0.0
    %4311 = vadd.xlane.f32.xlu0 %v4310
    %v4312 = vpop.xlane.xlu0 %4311
    %v4313 = vrcp.pop %v4309
    %v4314 = vrcp.pop %v4312
    %v4315 = vmul.f32 %v4304, %v4313
    %v4316 = vmul.f32 %v4306, %v4314
    %v4317 = vpack.c.bf16 %v4315, %v4315
    %v4318 = vpack.c.bf16 %v4316, %v4316
    %4319 = vrot.lane.b32.xlu0 %v4079, 32
    %v4320 = vpop.permute.xlu0 %4319
    %v4322 = vsel %vm363, %v4317, 0
    %v4325 = vsel %vm391, %v4320, 0
    %4327 = vmatpush.bf16.msra.mxu0 0
    %4328 = vmatpush.bf16.msra.mxu0 0
    %4329 = vmatpush.bf16.msra.mxu0 0
    %4330 = vmatpush.bf16.msra.mxu0 0
    %4331 = vmatpush.bf16.msra.mxu0 0
    %4332 = vmatpush.bf16.msra.mxu0 0
    %4333 = vmatpush.bf16.msra.mxu0 0
    %4334 = vmatpush.bf16.msra.mxu0 %v4325
    %4335 = vmatmul.bf16.gmra.mxu0 %v4322
    %v4336 = vpop.f32.mrf.mxu0
    %v4337 = vadd.f32 0.0, %v4336
    %v4338 = vpop.f32.mrf.mxu0
    %4339 = vdwg.mxu0
    %4340 = vrot.lane.b32.xlu0 %v4103, 32
    %v4341 = vpop.permute.xlu0 %4340
    %v4343 = vsel %vm363, %v4318, 0
    %v4346 = vsel %vm391, %v4341, 0
    %4348 = vmatpush.bf16.msra.mxu0 0
    %4349 = vmatpush.bf16.msra.mxu0 0
    %4350 = vmatpush.bf16.msra.mxu0 0
    %4351 = vmatpush.bf16.msra.mxu0 0
    %4352 = vmatpush.bf16.msra.mxu0 0
    %4353 = vmatpush.bf16.msra.mxu0 0
    %4354 = vmatpush.bf16.msra.mxu0 0
    %4355 = vmatpush.bf16.msra.mxu0 %v4346
    %4356 = vmatmul.bf16.gmra.mxu0 %v4343
    %v4357 = vpop.f32.mrf.mxu0
    %v4358 = vadd.f32 0.0, %v4357
    %v4359 = vpop.f32.mrf.mxu0
    %4360 = vdwg.mxu0
    %4363 = vrot.lane.b32.xlu0 %v4098, 32
    %v4364 = vpop.permute.xlu0 %4363
    %4365 = vrot.lane.b32.xlu0 %v4122, 32
    %v4366 = vpop.permute.xlu0 %4365
    %4371 = vrot.lane.b32.xlu0 %v4219, 64
    %v4372 = vpop.permute.xlu0 %4371
    %4373 = vrot.lane.b32.xlu0 %v4240, 64
    %v4374 = vpop.permute.xlu0 %4373
    %4379 = vrot.lane.b32.xlu0 %v4337, 96
    %v4380 = vpop.permute.xlu0 %4379
    %4381 = vrot.lane.b32.xlu0 %v4358, 96
    %v4382 = vpop.permute.xlu0 %4381
    %v4385 = vsel %vm316, %v3975, %v4364
    %v4386 = vsel %vm316, %v3994, %v4366
    %v4387 = vsel %vm817, %v4385, %v4372
    %v4388 = vsel %vm817, %v4386, %v4374
    %v4389 = vsel %vm820, %v4387, %v4380
    %v4390 = vsel %vm820, %v4388, %v4382
    %v4391 = vpack.c.bf16 %v4390, %v4389
    %s4392 = scalar_lea.vmem [#allocation5], 192
    %v4393 = vld [vmem:[%s4392] sm:$0xf]
    %v4394 = vld [vmem:[%s4392 + $0x4] sm:$0xf]
    %v4395 = vld [vmem:[%s4392 + $0x8] sm:$0xf]
    %v4396 = vld [vmem:[%s4392 + $0xc] sm:$0xf]
    %v4397 = vld [vmem:[%s4392 + $0x10] sm:$0xf]
    %v4398 = vld [vmem:[%s4392 + $0x14] sm:$0xf]
    %v4399 = vld [vmem:[%s4392 + $0x18] sm:$0xf]
    %v4400 = vld [vmem:[%s4392 + $0x1c] sm:$0xf]
    %v4401 = vld [vmem:[%s4392 + $0x20] sm:$0xf]
    %v4402 = vld [vmem:[%s4392 + $0x24] sm:$0xf]
    %v4403 = vld [vmem:[%s4392 + $0x28] sm:$0xf]
    %v4404 = vld [vmem:[%s4392 + $0x2c] sm:$0xf]
    %v4405 = vld [vmem:[%s4392 + $0x30] sm:$0xf]
    %v4406 = vld [vmem:[%s4392 + $0x34] sm:$0xf]
    %v4407 = vld [vmem:[%s4392 + $0x38] sm:$0xf]
    %v4408 = vld [vmem:[%s4392 + $0x3c] sm:$0xf]
    %v4409 = vperm.slane %v3675, 1
    %v4426 = vunpack.c.l.b16 %v4393
    %v4427 = vunpack.c.l.b16 %v4394
    %v4428 = vunpack.c.l.b16 %v4395
    %v4429 = vunpack.c.l.b16 %v4396
    %v4430 = vunpack.c.l.b16 %v4397
    %v4431 = vunpack.c.l.b16 %v4398
    %v4432 = vunpack.c.l.b16 %v4399
    %v4433 = vunpack.c.l.b16 %v4400
    %v4434 = vunpack.c.l.b16 %v4401
    %v4435 = vunpack.c.l.b16 %v4402
    %v4436 = vunpack.c.l.b16 %v4403
    %v4437 = vunpack.c.l.b16 %v4404
    %v4438 = vunpack.c.l.b16 %v4405
    %v4439 = vunpack.c.l.b16 %v4406
    %v4440 = vunpack.c.l.b16 %v4407
    %v4441 = vunpack.c.l.b16 %v4408
    %v4442 = vpack.c.b16 %v4427, %v4426
    %v4443 = vpack.c.b16 %v4429, %v4428
    %v4444 = vpack.c.b16 %v4431, %v4430
    %v4445 = vpack.c.b16 %v4433, %v4432
    %v4446 = vpack.c.b16 %v4435, %v4434
    %v4447 = vpack.c.b16 %v4437, %v4436
    %v4448 = vpack.c.b16 %v4439, %v4438
    %v4449 = vpack.c.b16 %v4441, %v4440
    %4458 = vmatpush.bf16.msra.mxu0 %v4449
    %4459 = vmatpush.bf16.msra.mxu0 %v4448
    %4460 = vmatpush.bf16.msra.mxu0 %v4447
    %4461 = vmatpush.bf16.msra.mxu0 %v4446
    %4462 = vmatpush.bf16.msra.mxu0 %v4445
    %4463 = vmatpush.bf16.msra.mxu0 %v4444
    %4464 = vmatpush.bf16.msra.mxu0 %v4443
    %4465 = vmatpush.bf16.msra.mxu0 %v4442
    %4466 = vmatmul.bf16.gmra.mxu0 %v4391
    %v4467 = vpop.f32.mrf.mxu0
    %v4468 = vadd.f32 %v4409, %v4467
    %v4469 = vpop.f32.mrf.mxu0
    %v4470 = vadd.f32 %v4409, %v4469
    %4471 = vdwg.mxu0
    %v4472 = vadd.f32 %v3672, %v4468
    %v4473 = vadd.f32 %v3673, %v4470
    %4474 = vadd.xlane.f32.xlu0 %v4472
    %v4475 = vpop.xlane.xlu0 %4474
    %4476 = vadd.xlane.f32.xlu0 %v4473
    %v4477 = vpop.xlane.xlu0 %4476
    %v4478 = vmul.f32 %v4475, %v915
    %v4479 = vmul.f32 %v4477, %v915
    %v4480 = vsub.f32 %v4472, %v4478
    %v4481 = vsub.f32 %v4473, %v4479
    %v4482 = vmul.f32 %v4480, %v4480
    %v4483 = vmul.f32 %v4481, %v4481
    %4484 = vadd.xlane.f32.xlu0 %v4482
    %v4485 = vpop.xlane.xlu0 %4484
    %4486 = vadd.xlane.f32.xlu0 %v4483
    %v4487 = vpop.xlane.xlu0 %4486
    %v4488 = vmul.f32 %v4485, %v915
    %v4489 = vmul.f32 %v4487, %v915
    %v4490 = vadd.f32 %v4488, 1e-05
    %v4491 = vadd.f32 %v4489, 1e-05
    %v4492 = vrsqrt.pop %v4490
    %v4493 = vmul.f32 %v4492, %v4490
    %v4494 = vmul.f32 %v4493, %v4492
    %v4495 = vmul.f32 0.5, %v4494
    %v4496 = vsub.f32 1.5, %v4495
    %v4497 = vmul.f32 %v4492, %v4496
    %vm4498 = vweird.f32 %v4490
    %vm4499 = vweird.f32 %v4492
    %vm4500 = vmor %vm4498, %vm4499
    %v4501 = vsel %vm4500, %v4492, %v4497
    %v4502 = vrsqrt.pop %v4491
    %v4503 = vmul.f32 %v4502, %v4491
    %v4504 = vmul.f32 %v4503, %v4502
    %v4505 = vmul.f32 0.5, %v4504
    %v4506 = vsub.f32 1.5, %v4505
    %v4507 = vmul.f32 %v4502, %v4506
    %vm4508 = vweird.f32 %v4491
    %vm4509 = vweird.f32 %v4502
    %vm4510 = vmor %vm4508, %vm4509
    %v4511 = vsel %vm4510, %v4502, %v4507
    %v4512 = vmul.f32 %v4480, %v4501
    %v4513 = vmul.f32 %v4481, %v4511
    %v4514 = vperm.slane %v3676, 1
    %v4515 = vmul.f32 %v4512, %v4514
    %v4516 = vmul.f32 %v4513, %v4514
    %v4517 = vperm.slane %v3677, 1
    %v4518 = vadd.f32 %v4515, %v4517
    %v4519 = vadd.f32 %v4516, %v4517
    %v4520 = vpack.c.bf16 %v4519, %v4518
    %s4521 = scalar_lea.vmem [#allocation7], 384
    %v4522 = vld [vmem:[%s4521] sm:$0xff]
    %v4523 = vld [vmem:[%s4521 + $0x8] sm:$0xff]
    %v4524 = vld [vmem:[%s4521 + $0x10] sm:$0xff]
    %v4525 = vld [vmem:[%s4521 + $0x18] sm:$0xff]
    %v4526 = vld [vmem:[%s4521 + $0x20] sm:$0xff]
    %v4527 = vld [vmem:[%s4521 + $0x28] sm:$0xff]
    %v4528 = vld [vmem:[%s4521 + $0x30] sm:$0xff]
    %v4529 = vld [vmem:[%s4521 + $0x38] sm:$0xff]
    %v4530 = vld [vmem:[%s4521 + $0x40] sm:$0xff]
    %v4531 = vld [vmem:[%s4521 + $0x48] sm:$0xff]
    %v4532 = vld [vmem:[%s4521 + $0x50] sm:$0xff]
    %v4533 = vld [vmem:[%s4521 + $0x58] sm:$0xff]
    %v4534 = vld [vmem:[%s4521 + $0x60] sm:$0xff]
    %v4535 = vld [vmem:[%s4521 + $0x68] sm:$0xff]
    %v4536 = vld [vmem:[%s4521 + $0x70] sm:$0xff]
    %v4537 = vld [vmem:[%s4521 + $0x78] sm:$0xff]
    %v4538 = vperm.slane %v3675, 2
    %v4539 = vperm.slane %v3676, 2
    %v4556 = vunpack.c.l.b16 %v4522
    %v4557 = vunpack.c.h.b16 %v4522
    %v4558 = vunpack.c.l.b16 %v4523
    %v4559 = vunpack.c.h.b16 %v4523
    %v4560 = vunpack.c.l.b16 %v4524
    %v4561 = vunpack.c.h.b16 %v4524
    %v4562 = vunpack.c.l.b16 %v4525
    %v4563 = vunpack.c.h.b16 %v4525
    %v4564 = vunpack.c.l.b16 %v4526
    %v4565 = vunpack.c.h.b16 %v4526
    %v4566 = vunpack.c.l.b16 %v4527
    %v4567 = vunpack.c.h.b16 %v4527
    %v4568 = vunpack.c.l.b16 %v4528
    %v4569 = vunpack.c.h.b16 %v4528
    %v4570 = vunpack.c.l.b16 %v4529
    %v4571 = vunpack.c.h.b16 %v4529
    %v4572 = vunpack.c.l.b16 %v4530
    %v4573 = vunpack.c.h.b16 %v4530
    %v4574 = vunpack.c.l.b16 %v4531
    %v4575 = vunpack.c.h.b16 %v4531
    %v4576 = vunpack.c.l.b16 %v4532
    %v4577 = vunpack.c.h.b16 %v4532
    %v4578 = vunpack.c.l.b16 %v4533
    %v4579 = vunpack.c.h.b16 %v4533
    %v4580 = vunpack.c.l.b16 %v4534
    %v4581 = vunpack.c.h.b16 %v4534
    %v4582 = vunpack.c.l.b16 %v4535
    %v4583 = vunpack.c.h.b16 %v4535
    %v4584 = vunpack.c.l.b16 %v4536
    %v4585 = vunpack.c.h.b16 %v4536
    %v4586 = vunpack.c.l.b16 %v4537
    %v4587 = vunpack.c.h.b16 %v4537
    %v4588 = vpack.c.b16 %v4558, %v4556
    %v4589 = vpack.c.b16 %v4559, %v4557
    %v4590 = vpack.c.b16 %v4562, %v4560
    %v4591 = vpack.c.b16 %v4563, %v4561
    %v4592 = vpack.c.b16 %v4566, %v4564
    %v4593 = vpack.c.b16 %v4567, %v4565
    %v4594 = vpack.c.b16 %v4570, %v4568
    %v4595 = vpack.c.b16 %v4571, %v4569
    %v4596 = vpack.c.b16 %v4574, %v4572
    %v4597 = vpack.c.b16 %v4575, %v4573
    %v4598 = vpack.c.b16 %v4578, %v4576
    %v4599 = vpack.c.b16 %v4579, %v4577
    %v4600 = vpack.c.b16 %v4582, %v4580
    %v4601 = vpack.c.b16 %v4583, %v4581
    %v4602 = vpack.c.b16 %v4586, %v4584
    %v4603 = vpack.c.b16 %v4587, %v4585
    %4620 = vmatpush.bf16.msra.mxu0 %v4602
    %4621 = vmatpush.bf16.msra.mxu0 %v4600
    %4622 = vmatpush.bf16.msra.mxu0 %v4598
    %4623 = vmatpush.bf16.msra.mxu0 %v4596
    %4624 = vmatpush.bf16.msra.mxu0 %v4594
    %4625 = vmatpush.bf16.msra.mxu0 %v4592
    %4626 = vmatpush.bf16.msra.mxu0 %v4590
    %4627 = vmatpush.bf16.msra.mxu0 %v4588
    %4628 = vmatmul.bf16.gmra.mxu0 %v4520
    %v4629 = vpop.f32.mrf.mxu0
    %v4630 = vadd.f32 %v4538, %v4629
    %v4631 = vpop.f32.mrf.mxu0
    %v4632 = vadd.f32 %v4538, %v4631
    %4633 = vdwg.mxu0
    %4634 = vmatpush.bf16.msra.mxu0 %v4603
    %4635 = vmatpush.bf16.msra.mxu0 %v4601
    %4636 = vmatpush.bf16.msra.mxu0 %v4599
    %4637 = vmatpush.bf16.msra.mxu0 %v4597
    %4638 = vmatpush.bf16.msra.mxu0 %v4595
    %4639 = vmatpush.bf16.msra.mxu0 %v4593
    %4640 = vmatpush.bf16.msra.mxu0 %v4591
    %4641 = vmatpush.bf16.msra.mxu0 %v4589
    %4642 = vmatmul.bf16.gmra.mxu0 %v4520
    %v4643 = vpop.f32.mrf.mxu0
    %v4644 = vadd.f32 %v4539, %v4643
    %v4645 = vpop.f32.mrf.mxu0
    %v4646 = vadd.f32 %v4539, %v4645
    %4647 = vdwg.mxu0
    %v4648 = vmax.f32 %v4630, 0.0
    %v4649 = vmax.f32 %v4644, 0.0
    %v4650 = vmax.f32 %v4632, 0.0
    %v4651 = vmax.f32 %v4646, 0.0
    %v4652 = vpack.c.bf16 %v4650, %v4648
    %v4653 = vpack.c.bf16 %v4651, %v4649
    %s4654 = scalar_lea.vmem [#allocation8], 384
    %v4655 = vld [vmem:[%s4654] sm:$0xf]
    %v4656 = vld [vmem:[%s4654 + $0x4] sm:$0xf]
    %v4657 = vld [vmem:[%s4654 + $0x8] sm:$0xf]
    %v4658 = vld [vmem:[%s4654 + $0xc] sm:$0xf]
    %v4659 = vld [vmem:[%s4654 + $0x10] sm:$0xf]
    %v4660 = vld [vmem:[%s4654 + $0x14] sm:$0xf]
    %v4661 = vld [vmem:[%s4654 + $0x18] sm:$0xf]
    %v4662 = vld [vmem:[%s4654 + $0x1c] sm:$0xf]
    %v4663 = vld [vmem:[%s4654 + $0x20] sm:$0xf]
    %v4664 = vld [vmem:[%s4654 + $0x24] sm:$0xf]
    %v4665 = vld [vmem:[%s4654 + $0x28] sm:$0xf]
    %v4666 = vld [vmem:[%s4654 + $0x2c] sm:$0xf]
    %v4667 = vld [vmem:[%s4654 + $0x30] sm:$0xf]
    %v4668 = vld [vmem:[%s4654 + $0x34] sm:$0xf]
    %v4669 = vld [vmem:[%s4654 + $0x38] sm:$0xf]
    %v4670 = vld [vmem:[%s4654 + $0x3c] sm:$0xf]
    %v4671 = vld [vmem:[%s4654 + $0x40] sm:$0xf]
    %v4672 = vld [vmem:[%s4654 + $0x44] sm:$0xf]
    %v4673 = vld [vmem:[%s4654 + $0x48] sm:$0xf]
    %v4674 = vld [vmem:[%s4654 + $0x4c] sm:$0xf]
    %v4675 = vld [vmem:[%s4654 + $0x50] sm:$0xf]
    %v4676 = vld [vmem:[%s4654 + $0x54] sm:$0xf]
    %v4677 = vld [vmem:[%s4654 + $0x58] sm:$0xf]
    %v4678 = vld [vmem:[%s4654 + $0x5c] sm:$0xf]
    %v4679 = vld [vmem:[%s4654 + $0x60] sm:$0xf]
    %v4680 = vld [vmem:[%s4654 + $0x64] sm:$0xf]
    %v4681 = vld [vmem:[%s4654 + $0x68] sm:$0xf]
    %v4682 = vld [vmem:[%s4654 + $0x6c] sm:$0xf]
    %v4683 = vld [vmem:[%s4654 + $0x70] sm:$0xf]
    %v4684 = vld [vmem:[%s4654 + $0x74] sm:$0xf]
    %v4685 = vld [vmem:[%s4654 + $0x78] sm:$0xf]
    %v4686 = vld [vmem:[%s4654 + $0x7c] sm:$0xf]
    %v4719 = vunpack.c.l.b16 %v4655
    %v4720 = vunpack.c.l.b16 %v4656
    %v4721 = vunpack.c.l.b16 %v4657
    %v4722 = vunpack.c.l.b16 %v4658
    %v4723 = vunpack.c.l.b16 %v4659
    %v4724 = vunpack.c.l.b16 %v4660
    %v4725 = vunpack.c.l.b16 %v4661
    %v4726 = vunpack.c.l.b16 %v4662
    %v4727 = vunpack.c.l.b16 %v4663
    %v4728 = vunpack.c.l.b16 %v4664
    %v4729 = vunpack.c.l.b16 %v4665
    %v4730 = vunpack.c.l.b16 %v4666
    %v4731 = vunpack.c.l.b16 %v4667
    %v4732 = vunpack.c.l.b16 %v4668
    %v4733 = vunpack.c.l.b16 %v4669
    %v4734 = vunpack.c.l.b16 %v4670
    %v4735 = vunpack.c.l.b16 %v4671
    %v4736 = vunpack.c.l.b16 %v4672
    %v4737 = vunpack.c.l.b16 %v4673
    %v4738 = vunpack.c.l.b16 %v4674
    %v4739 = vunpack.c.l.b16 %v4675
    %v4740 = vunpack.c.l.b16 %v4676
    %v4741 = vunpack.c.l.b16 %v4677
    %v4742 = vunpack.c.l.b16 %v4678
    %v4743 = vunpack.c.l.b16 %v4679
    %v4744 = vunpack.c.l.b16 %v4680
    %v4745 = vunpack.c.l.b16 %v4681
    %v4746 = vunpack.c.l.b16 %v4682
    %v4747 = vunpack.c.l.b16 %v4683
    %v4748 = vunpack.c.l.b16 %v4684
    %v4749 = vunpack.c.l.b16 %v4685
    %v4750 = vunpack.c.l.b16 %v4686
    %v4751 = vpack.c.b16 %v4720, %v4719
    %v4752 = vpack.c.b16 %v4722, %v4721
    %v4753 = vpack.c.b16 %v4724, %v4723
    %v4754 = vpack.c.b16 %v4726, %v4725
    %v4755 = vpack.c.b16 %v4728, %v4727
    %v4756 = vpack.c.b16 %v4730, %v4729
    %v4757 = vpack.c.b16 %v4732, %v4731
    %v4758 = vpack.c.b16 %v4734, %v4733
    %v4759 = vpack.c.b16 %v4736, %v4735
    %v4760 = vpack.c.b16 %v4738, %v4737
    %v4761 = vpack.c.b16 %v4740, %v4739
    %v4762 = vpack.c.b16 %v4742, %v4741
    %v4763 = vpack.c.b16 %v4744, %v4743
    %v4764 = vpack.c.b16 %v4746, %v4745
    %v4765 = vpack.c.b16 %v4748, %v4747
    %v4766 = vpack.c.b16 %v4750, %v4749
    %4783 = vmatpush.bf16.msra.mxu0 %v4758
    %4784 = vmatpush.bf16.msra.mxu0 %v4757
    %4785 = vmatpush.bf16.msra.mxu0 %v4756
    %4786 = vmatpush.bf16.msra.mxu0 %v4755
    %4787 = vmatpush.bf16.msra.mxu0 %v4754
    %4788 = vmatpush.bf16.msra.mxu0 %v4753
    %4789 = vmatpush.bf16.msra.mxu0 %v4752
    %4790 = vmatpush.bf16.msra.mxu0 %v4751
    %4791 = vmatmul.bf16.gmra.mxu0 %v4652
    %v4792 = vpop.f32.mrf.mxu0
    %v4793 = vadd.f32 0.0, %v4792
    %v4794 = vpop.f32.mrf.mxu0
    %v4795 = vadd.f32 0.0, %v4794
    %4796 = vdwg.mxu0
    %4797 = vmatpush.bf16.msra.mxu0 %v4766
    %4798 = vmatpush.bf16.msra.mxu0 %v4765
    %4799 = vmatpush.bf16.msra.mxu0 %v4764
    %4800 = vmatpush.bf16.msra.mxu0 %v4763
    %4801 = vmatpush.bf16.msra.mxu0 %v4762
    %4802 = vmatpush.bf16.msra.mxu0 %v4761
    %4803 = vmatpush.bf16.msra.mxu0 %v4760
    %4804 = vmatpush.bf16.msra.mxu0 %v4759
    %4805 = vmatmul.bf16.gmra.mxu0 %v4653
    %v4806 = vpop.f32.mrf.mxu0
    %v4807 = vadd.f32 %v4793, %v4806
    %v4808 = vpop.f32.mrf.mxu0
    %v4809 = vadd.f32 %v4795, %v4808
    %4810 = vdwg.mxu0
    %v4811 = vadd.f32 %v4518, %v4807
    %v4812 = vadd.f32 %v4519, %v4809
    %v4813 = vperm.slane %v3677, 2
    %v4814 = vadd.f32 %v4811, %v4813
    %v4815 = vadd.f32 %v4812, %v4813
    %4816 = vadd.xlane.f32.xlu0 %v4814
    %v4817 = vpop.xlane.xlu0 %4816
    %4818 = vadd.xlane.f32.xlu0 %v4815
    %v4819 = vpop.xlane.xlu0 %4818
    %v4820 = vmul.f32 %v4817, %v915
    %v4821 = vmul.f32 %v4819, %v915
    %v4822 = vsub.f32 %v4814, %v4820
    %v4823 = vsub.f32 %v4815, %v4821
    %v4824 = vmul.f32 %v4822, %v4822
    %v4825 = vmul.f32 %v4823, %v4823
    %4826 = vadd.xlane.f32.xlu0 %v4824
    %v4827 = vpop.xlane.xlu0 %4826
    %4828 = vadd.xlane.f32.xlu0 %v4825
    %v4829 = vpop.xlane.xlu0 %4828
    %v4830 = vmul.f32 %v4827, %v915
    %v4831 = vmul.f32 %v4829, %v915
    %v4832 = vadd.f32 %v4830, 1e-05
    %v4833 = vadd.f32 %v4831, 1e-05
    %v4834 = vrsqrt.pop %v4832
    %v4835 = vmul.f32 %v4834, %v4832
    %v4836 = vmul.f32 %v4835, %v4834
    %v4837 = vmul.f32 0.5, %v4836
    %v4838 = vsub.f32 1.5, %v4837
    %v4839 = vmul.f32 %v4834, %v4838
    %vm4840 = vweird.f32 %v4832
    %vm4841 = vweird.f32 %v4834
    %vm4842 = vmor %vm4840, %vm4841
    %v4843 = vsel %vm4842, %v4834, %v4839
    %v4844 = vrsqrt.pop %v4833
    %v4845 = vmul.f32 %v4844, %v4833
    %v4846 = vmul.f32 %v4845, %v4844
    %v4847 = vmul.f32 0.5, %v4846
    %v4848 = vsub.f32 1.5, %v4847
    %v4849 = vmul.f32 %v4844, %v4848
    %vm4850 = vweird.f32 %v4833
    %vm4851 = vweird.f32 %v4844
    %vm4852 = vmor %vm4850, %vm4851
    %v4853 = vsel %vm4852, %v4844, %v4849
    %v4854 = vmul.f32 %v4822, %v4843
    %v4855 = vmul.f32 %v4823, %v4853
    %v4856 = vperm.slane %v3675, 3
    %v4857 = vmul.f32 %v4854, %v4856
    %v4858 = vmul.f32 %v4855, %v4856
    %v4859 = vperm.slane %v3676, 3
    %v4860 = vadd.f32 %v4857, %v4859
    %v4861 = vadd.f32 %v4858, %v4859
    %v4862 = vpack.c.bf16 %v4861, %v4860
    %v4863 = vld [vmem:[%s6] sm:$0xf]
    %v4864 = vld [vmem:[%s6 + $0x4] sm:$0xf]
    %v4865 = vld [vmem:[%s6 + $0x8] sm:$0xf]
    %v4866 = vld [vmem:[%s6 + $0xc] sm:$0xf]
    %v4867 = vld [vmem:[%s6 + $0x10] sm:$0xf]
    %v4868 = vld [vmem:[%s6 + $0x14] sm:$0xf]
    %v4869 = vld [vmem:[%s6 + $0x18] sm:$0xf]
    %v4870 = vld [vmem:[%s6 + $0x1c] sm:$0xf]
    %v4871 = vld [vmem:[%s6 + $0x20] sm:$0xf]
    %v4872 = vld [vmem:[%s6 + $0x24] sm:$0xf]
    %v4873 = vld [vmem:[%s6 + $0x28] sm:$0xf]
    %v4874 = vld [vmem:[%s6 + $0x2c] sm:$0xf]
    %v4875 = vld [vmem:[%s6 + $0x30] sm:$0xf]
    %v4876 = vld [vmem:[%s6 + $0x34] sm:$0xf]
    %v4877 = vld [vmem:[%s6 + $0x38] sm:$0xf]
    %v4878 = vld [vmem:[%s6 + $0x3c] sm:$0xf]
    %v4879 = vld [vmem:[%s7] sm:$0x1]
    %v4881 = vperm.slane %v4879, 0
    %v4899 = vunpack.c.l.b16 %v4863
    %v4900 = vunpack.c.l.b16 %v4864
    %v4901 = vunpack.c.l.b16 %v4865
    %v4902 = vunpack.c.l.b16 %v4866
    %v4903 = vunpack.c.l.b16 %v4867
    %v4904 = vunpack.c.l.b16 %v4868
    %v4905 = vunpack.c.l.b16 %v4869
    %v4906 = vunpack.c.l.b16 %v4870
    %v4907 = vunpack.c.l.b16 %v4871
    %v4908 = vunpack.c.l.b16 %v4872
    %v4909 = vunpack.c.l.b16 %v4873
    %v4910 = vunpack.c.l.b16 %v4874
    %v4911 = vunpack.c.l.b16 %v4875
    %v4912 = vunpack.c.l.b16 %v4876
    %v4913 = vunpack.c.l.b16 %v4877
    %v4914 = vunpack.c.l.b16 %v4878
    %v4915 = vpack.c.b16 %v4900, %v4899
    %v4916 = vpack.c.b16 %v4902, %v4901
    %v4917 = vpack.c.b16 %v4904, %v4903
    %v4918 = vpack.c.b16 %v4906, %v4905
    %v4919 = vpack.c.b16 %v4908, %v4907
    %v4920 = vpack.c.b16 %v4910, %v4909
    %v4921 = vpack.c.b16 %v4912, %v4911
    %v4922 = vpack.c.b16 %v4914, %v4913
    %4931 = vmatpush.bf16.msra.mxu0 %v4922
    %4932 = vmatpush.bf16.msra.mxu0 %v4921
    %4933 = vmatpush.bf16.msra.mxu0 %v4920
    %4934 = vmatpush.bf16.msra.mxu0 %v4919
    %4935 = vmatpush.bf16.msra.mxu0 %v4918
    %4936 = vmatpush.bf16.msra.mxu0 %v4917
    %4937 = vmatpush.bf16.msra.mxu0 %v4916
    %4938 = vmatpush.bf16.msra.mxu0 %v4915
    %4939 = vmatmul.bf16.gmra.mxu0 %v4862
    %v4940 = vpop.f32.mrf.mxu0
    %v4941 = vadd.f32 %v4881, %v4940
    %v4942 = vpop.f32.mrf.mxu0
    %v4943 = vadd.f32 %v4881, %v4942
    %4944 = vdwg.mxu0
    %4945 = vst [vmem:[#allocation10] sm:$0xff] %v4941
    %4946 = vst [vmem:[#allocation10 + $0x8] sm:$0xff] %v4943
    // Predicated region
    $region50: #{poet_transformer_forward.1} parent=1 // pred_check
      _
    $region51: #{poet_transformer_forward.1} parent=1 // pred_check_branch
      %4948 = sbr.rel (0) target = $region53
    $region52: #{poet_transformer_forward.1} parent=1 // pred_region
      %4950 = vsyncadd [#allocation4], 0
      %s4951 = sshll.u32 [#allocation10], 4
      %s4952 = int_to_ptr.vmem [resolvable:$true] %s4951
      %s4953 = sshll.u32 %s8, 4
      %s4954 = int_to_ptr.hbm [resolvable:$true] %s4953
      %4959 = dma.vmem_to_hbm [thread:$0]  %s4952, 256, %s4954, [#allocation4], 128, 128, 8
    $region53: #{poet_transformer_forward.1} parent=1 // pred_fallthru
      _
    // Predicated region
    $region54: #{poet_transformer_forward.1} parent=1 // pred_check
      _
    $region55: #{poet_transformer_forward.1} parent=1 // pred_check_branch
      %4961 = sbr.rel (0) target = $region57
    $region56: #{poet_transformer_forward.1} parent=1 // pred_region
      %4963 = dma.done [#allocation4], 256
    $region57: #{poet_transformer_forward.1} parent=1 // pred_fallthru
      _
    %4964 = vsyncpa [#allocation3], 1
    %4965 = vsyncpa [#allocation6], 1
    %4966 = vsyncpa [#allocation9], 1
    %4967 = vsyncpa [#allocation4], 1

</llo_original>
